<compile_context>
chip_gen: v5e
topology: v5e:2x2
jax: 0.10.0
libtpu: 0.0.40
codegen_flags: <defaults>
</compile_context>

<pallas_src>
import jax
import jax.numpy as jnp
import numpy as np
from jax.experimental import pallas as pl
from jax.experimental.pallas import tpu as pltpu

# ----------------------------- configuration --------------------------------
DIM_IN = 8
DIM_OUT = 16
TIME_DIM = 16
COND_DIM = 32
SEQ = 8
HEADS = 4
DIM_HEAD = 8
INNER = HEADS * DIM_HEAD
SK = SEQ + 1                          # keys per head incl. the learned null kv
GROUPS1 = min(32, DIM_IN // 4)        # Block(dim_in, ...)
GROUPS2 = min(32, DIM_OUT // 4)       # Block(dim_out, ...)
ATTN_SCALE = 8.0                      # CrossAttention default scale
GN_EPS = 1e-5
LN_EPS = 1e-5
L2_EPS = 1e-12

_F32 = jnp.float32
# Matmul-operand dtype: bf16 on TPU (MXU fast path); f32 on CPU/GPU backends
# (XLA:CPU's DotThunk does not support bf16 x bf16 -> f32).
_MM = jnp.bfloat16 if jax.default_backend() == "tpu" else jnp.float32


# ------------------------------- fused kernel --------------------------------
def _make_kernel(H, W):
    HW = H * W
    ROWS1 = 9 * DIM_IN                 # conv1 im2col rows
    ROWS2 = 9 * DIM_OUT                # conv2 im2col rows (raw x appended after)

    def kernel(x_ref, temb_ref, cond_ref, condt_ref,
               gn1_g_ref, gn1_b_ref, w1_ref, b1_ref,
               time_w_ref, time_b_ref,
               wq_ref, wk_ref, wvt_ref,
               headA_ref, nk_ref, nv_ref, qs_ref, ks_ref,
               maskk_ref, maskv_ref, wo_ref, oln_g_ref,
               gn2_g_ref, gn2_b_ref, w2_ref, b2_ref,
               tapmask_ref,
               o_ref, scr_ref):

        def silu(v):
            return v * jax.nn.sigmoid(v)

        def group_norm(x, gamma, beta, groups):
            # Contiguous-group block reductions (static loop; no membership
            # matmul, no iota rebuild per grid step).
            C = x.shape[0]
            cg = C // groups
            inv_n = 1.0 / float(cg * HW)
            parts = []
            for g in range(groups):
                xg = x[g * cg:(g + 1) * cg, :]
                m = jnp.sum(xg, keepdims=True) * inv_n            # (1, 1)
                d = xg - m
                v = jnp.sum(d * d, keepdims=True) * inv_n
                parts.append(d * jax.lax.rsqrt(v + GN_EPS))
            xn = jnp.concatenate(parts, axis=0) if groups > 1 else parts[0]
            return xn * gamma + beta

        def stable_ln(x, gamma=None):
            # TODO(synk): StableLayerNorm is not defined in the provided
            # source; implemented as imagen-style "stable" LayerNorm (divide
            # by signed feature amax, then LayerNorm).  Feature axis is axis 0.
            x = x / jnp.max(x, axis=0, keepdims=True)
            m = jnp.mean(x, axis=0, keepdims=True)
            v = jnp.mean(jnp.square(x - m), axis=0, keepdims=True)
            y = (x - m) * jax.lax.rsqrt(v + LN_EPS)
            return y if gamma is None else y * gamma

        def stage_taps(xin):
            # im2col staging: single cast, 9 shifted+masked copies written to
            # the VMEM scratch rows [tap*Ci, tap*Ci + Ci).
            Ci = xin.shape[0]
            xm = xin.astype(scr_ref.dtype)
            for tap in range(9):
                dy, dx = tap // 3 - 1, tap % 3 - 1
                s = dy * W + dx
                if s == 0:
                    shifted = xm
                else:
                    # jnp.roll(x, -s)[:, p] == x[:, p + s]; wrapped positions
                    # are zeroed by the host-precomputed boundary mask.
                    shifted = (jnp.roll(xm, -s, axis=1) *
                               tapmask_ref[pl.ds(tap, 1), :])
                scr_ref[pl.ds(tap * Ci, Ci), :] = shifted

        def conv3x3(w_ref, bias, rows):
            # single matmul over the staged im2col block: (Co, rows)x(rows, HW)
            return jnp.dot(w_ref[...], scr_ref[pl.ds(0, rows), :],
                           preferred_element_type=_F32) + bias

        x = x_ref[0].astype(_F32)                                 # (Cin, HW)

        # stage raw x once for the fused 1x1 residual conv (rows ROWS2..+Cin)
        scr_ref[pl.ds(ROWS2, DIM_IN), :] = x_ref[0].astype(scr_ref.dtype)

        # ---- time MLP: SiLU -> Linear -> (scale, shift), tiny, f32 ----------
        t = silu(temb_ref[0].astype(_F32))                        # (T, 1)
        ts = jnp.dot(time_w_ref[...], t,
                     preferred_element_type=_F32) + time_b_ref[...]
        scale, shift = ts[:DIM_OUT], ts[DIM_OUT:]                 # (Co, 1) each

        # ---- block1: GN -> SiLU -> conv3x3 (one im2col matmul) --------------
        h1 = silu(group_norm(x, gn1_g_ref[...], gn1_b_ref[...], GROUPS1))
        stage_taps(h1)
        h = conv3x3(w1_ref, b1_ref[...], ROWS1)                   # (Co, HW) f32

        # ---- cosine-sim cross attention, all heads batched -------------------
        xn = stable_ln(h)                    # attn-norm gamma folded into wq
        qT = jnp.dot(wq_ref[...], xn.astype(wq_ref.dtype),
                     preferred_element_type=_F32)                 # (INNER, HW)
        k_all = jnp.dot(cond_ref[0].astype(wk_ref.dtype), wk_ref[...],
                        preferred_element_type=_F32)              # (S, INNER)
        vT_all = jnp.dot(wvt_ref[...], condt_ref[0].astype(wvt_ref.dtype),
                         preferred_element_type=_F32)             # (INNER, S)

        # per-head q l2norm: one (INNER, INNER) head-membership matmul
        qss = jnp.dot(headA_ref[...], qT * qT, preferred_element_type=_F32)
        qn = (qT * jax.lax.rsqrt(jnp.maximum(qss, L2_EPS * L2_EPS))
              * qs_ref[...])

        # block-diagonal K (HEADS*SK, INNER); row l2norm == per-head l2norm
        k_wn = jnp.concatenate([nk_ref[...], k_all], axis=0)      # (SK, INNER)
        kbd = jnp.concatenate([k_wn] * HEADS, axis=0) * maskk_ref[...]
        kss = jnp.sum(kbd * kbd, axis=-1, keepdims=True)
        kn = (kbd * jax.lax.rsqrt(jnp.maximum(kss, L2_EPS * L2_EPS))
              * ks_ref[...])

        # one sim matmul for all heads; keys in sublanes, HW=256 in lanes
        simT = jnp.dot(kn, qn, preferred_element_type=_F32) * ATTN_SCALE

        # segmented softmax over each head's SK-row block
        parts = []
        for hh in range(HEADS):
            s_h = simT[hh * SK:(hh + 1) * SK, :]
            s_h = s_h - jnp.max(s_h, axis=0, keepdims=True)
            e = jnp.exp(s_h)
            parts.append(e * (1.0 / jnp.sum(e, axis=0, keepdims=True)))
        attn = jnp.concatenate(parts, axis=0)                     # (H*SK, HW)

        # block-diagonal V (INNER, HEADS*SK): one AV matmul, head outputs come
        # out already stacked along sublanes (no per-head output concat)
        v_wn = jnp.concatenate([nv_ref[...], vT_all], axis=1)     # (INNER, SK)
        vbd = jnp.concatenate([v_wn] * HEADS, axis=1) * maskv_ref[...]
        attn_out = jnp.dot(vbd, attn, preferred_element_type=_F32)  # (INNER, HW)

        o = jnp.dot(wo_ref[...], attn_out.astype(wo_ref.dtype),
                    preferred_element_type=_F32)                  # (Co, HW)
        h = stable_ln(o, oln_g_ref[...]) + h                      # attn residual

        # ---- block2: GN -> scale_shift -> SiLU -> conv3x3 + fused 1x1 res ----
        h2 = group_norm(h, gn2_g_ref[...], gn2_b_ref[...], GROUPS2)
        h2 = silu(h2 * (scale + 1.0) + shift)
        stage_taps(h2)
        out = conv3x3(w2_ref, b2_ref[...], ROWS2 + DIM_IN)
        o_ref[0] = out.astype(o_ref.dtype)

    return kernel


# --------------------------- host-side weight prep ----------------------------
def _conv_im2col(w):
    # (Co, Ci, 3, 3) OIHW -> (Co, 9*Ci); contraction row index = tap*Ci + ci
    Co, Ci = w.shape[0], w.shape[1]
    return jnp.transpose(w, (0, 2, 3, 1)).reshape(Co, 9 * Ci)


def _tap_masks(H, W):
    # (9, HW) 0/1 masks zeroing out-of-image neighbours for each conv tap
    HW = H * W
    y, x = np.divmod(np.arange(HW), W)
    m = np.ones((9, HW), np.float32)
    for tap in range(9):
        dy, dx = tap // 3 - 1, tap % 3 - 1
        m[tap] = ((y + dy >= 0) & (y + dy < H) &
                  (x + dx >= 0) & (x + dx < W)).astype(np.float32)
    return m


def prepare_params(p, H, W):
    """One-time host-side weight prep (folds, im2col reshape, tiled constants)."""
    head_q = (np.arange(INNER)[:, None] // DIM_HEAD ==
              np.arange(INNER)[None, :] // DIM_HEAD)              # (INNER, INNER)
    mask_k = (np.arange(HEADS * SK)[:, None] // SK ==
              np.arange(INNER)[None, :] // DIM_HEAD)              # (H*SK, INNER)
    return dict(
        gn1_g=p['gn1_g'].reshape(DIM_IN, 1),
        gn1_b=p['gn1_b'].reshape(DIM_IN, 1),
        conv1_w=_conv_im2col(p['conv1_w']).astype(_MM),           # (Co, 9*Cin)
        conv1_b=p['conv1_b'].reshape(DIM_OUT, 1),
        time_w=p['time_w'].T,                                     # (2Co, T)
        time_b=p['time_b'].reshape(2 * DIM_OUT, 1),
        wq=(p['wq'] * p['attn_norm_g'][:, None]).T.astype(_MM),   # gamma folded
        wk=p['wkv'][:, :INNER].astype(_MM),                       # (Dc, INNER)
        wvt=p['wkv'][:, INNER:].T.astype(_MM),                    # (INNER, Dc)
        head_q=jnp.asarray(head_q, jnp.float32),
        nk=jnp.tile(p['null_kv'][0], HEADS).reshape(1, INNER),
        nv=jnp.tile(p['null_kv'][1], HEADS).reshape(INNER, 1),
        q_scale=jnp.tile(p['q_scale'], HEADS).reshape(INNER, 1),
        k_scale=jnp.tile(p['k_scale'], HEADS).reshape(1, INNER),
        mask_k=jnp.asarray(mask_k, jnp.float32),                  # (H*SK, INNER)
        mask_v=jnp.asarray(mask_k.T, jnp.float32),                # (INNER, H*SK)
        wo=p['wo'].T.astype(_MM),                                 # (Co, INNER)
        oln_g=p['out_norm_g'].reshape(DIM_OUT, 1),
        gn2_g=p['gn2_g'].reshape(DIM_OUT, 1),
        gn2_b=p['gn2_b'].reshape(DIM_OUT, 1),
        conv2res_w=jnp.concatenate(                               # conv2 ++ res
            [_conv_im2col(p['conv2_w']), p['res_w'].T], axis=1).astype(_MM),
        conv2res_b=(p['conv2_b'] + p['res_b']).reshape(DIM_OUT, 1),
        tap_mask=jnp.asarray(_tap_masks(H, W), _MM),              # (9, HW)
    )


# --------------------------------- wrapper ------------------------------------
@jax.jit
def resnet_block_forward(x, time_emb, cond, kp):
    B, Cin, H, W = x.shape
    HW = H * W
    Co = DIM_OUT

    per_batch = (
        x.reshape(B, Cin, HW),
        time_emb.reshape(B, TIME_DIM, 1),
        cond,                                    # (B, S, Dc)
        jnp.transpose(cond, (0, 2, 1)),          # (B, Dc, S)
    )
    weights = (
        kp['gn1_g'], kp['gn1_b'], kp['conv1_w'], kp['conv1_b'],
        kp['time_w'], kp['time_b'],
        kp['wq'], kp['wk'], kp['wvt'],
        kp['head_q'], kp['nk'], kp['nv'], kp['q_scale'], kp['k_scale'],
        kp['mask_k'], kp['mask_v'], kp['wo'], kp['oln_g'],
        kp['gn2_g'], kp['gn2_b'], kp['conv2res_w'], kp['conv2res_b'],
        kp['tap_mask'],
    )

    def bspec(a):        # per-batch block (leading grid axis)
        nd = a.ndim
        return pl.BlockSpec((1,) + a.shape[1:],
                            lambda b: (b,) + (0,) * (nd - 1))

    def wspec(a):        # weights / constants: full block, constant index map
        nd = a.ndim
        return pl.BlockSpec(a.shape, lambda b: (0,) * nd)

    out = pl.pallas_call(
        _make_kernel(H, W),
        out_shape=jax.ShapeDtypeStruct((B, Co, HW), jnp.float32),
        grid=(B,),
        in_specs=[bspec(a) for a in per_batch] + [wspec(a) for a in weights],
        out_specs=pl.BlockSpec((1, Co, HW), lambda b: (b, 0, 0)),
        scratch_shapes=[pltpu.VMEM((9 * Co + DIM_IN, HW), _MM)],  # im2col stage
        compiler_params=pltpu.CompilerParams(
            dimension_semantics=("parallel",)),   # B=2 -> both v7x TCs
    )(*per_batch, *weights)
    return out.reshape(B, Co, H, W)


# --------------------------- pure-JAX reference --------------------------------
# Same precision policy as the kernel: _MM operands / f32 accumulation for the
# convs and q/kv/out projections; attention core, norms, softmax in f32.
@jax.jit
def ref_forward(x, time_emb, cond, p):
    def mm(a, b):
        return jnp.einsum('...ij,jk->...ik', a.astype(_MM), b.astype(_MM),
                          preferred_element_type=jnp.float32)

    def gn(z, g, b, G):
        Bz, C, Hh, Ww = z.shape
        zg = z.reshape(Bz, G, C // G, Hh * Ww)
        m = zg.mean(axis=(2, 3), keepdims=True)
        v = jnp.square(zg - m).mean(axis=(2, 3), keepdims=True)
        zh = ((zg - m) * jax.lax.rsqrt(v + GN_EPS)).reshape(Bz, C, Hh, Ww)
        return zh * g[None, :, None, None] + b[None, :, None, None]

    def conv(z, w, b):
        out = jax.lax.conv_general_dilated(
            z.astype(_MM), w.astype(_MM), (1, 1), ((1, 1), (1, 1)),
            dimension_numbers=('NCHW', 'OIHW', 'NCHW'),
            preferred_element_type=jnp.float32)
        return out + b[None, :, None, None]

    def sln(z, g):
        z = z / jnp.max(z, -1, keepdims=True)
        m = z.mean(-1, keepdims=True)
        v = jnp.square(z - m).mean(-1, keepdims=True)
        return (z - m) * jax.lax.rsqrt(v + LN_EPS) * g

    def l2n(t):
        return t / jnp.maximum(jnp.sqrt(jnp.sum(t * t, -1, keepdims=True)),
                               L2_EPS)

    B, _, H, W = x.shape
    t = jax.nn.silu(time_emb) @ p['time_w'] + p['time_b']
    scale, shift = t[:, :DIM_OUT], t[:, DIM_OUT:]

    h = jax.nn.silu(gn(x, p['gn1_g'], p['gn1_b'], GROUPS1))
    h = conv(h, p['conv1_w'], p['conv1_b'])
    hs = h.reshape(B, DIM_OUT, H * W).transpose(0, 2, 1)          # (B, N, D)

    xn = sln(hs, p['attn_norm_g'])
    q = mm(xn, p['wq'])
    kv = mm(cond, p['wkv'])
    k, v = kv[..., :INNER], kv[..., INNER:]
    q = q.reshape(B, -1, HEADS, DIM_HEAD).transpose(0, 2, 1, 3)
    k = k.reshape(B, -1, HEADS, DIM_HEAD).transpose(0, 2, 1, 3)
    v = v.reshape(B, -1, HEADS, DIM_HEAD).transpose(0, 2, 1, 3)
    nk = jnp.broadcast_to(p['null_kv'][0], (B, HEADS, 1, DIM_HEAD))
    nv = jnp.broadcast_to(p['null_kv'][1], (B, HEADS, 1, DIM_HEAD))
    k = jnp.concatenate([nk, k], axis=2)
    v = jnp.concatenate([nv, v], axis=2)
    q, k = l2n(q) * p['q_scale'], l2n(k) * p['k_scale']
    sim = jnp.einsum('bhid,bhjd->bhij', q, k) * ATTN_SCALE
    attn = jax.nn.softmax(sim, axis=-1)
    out = jnp.einsum('bhij,bhjd->bhid', attn, v)
    out = out.transpose(0, 2, 1, 3).reshape(B, -1, INNER)
    hs = sln(mm(out, p['wo']), p['out_norm_g']) + hs

    h = hs.transpose(0, 2, 1).reshape(B, DIM_OUT, H, W)
    h = gn(h, p['gn2_g'], p['gn2_b'], GROUPS2)
    h = h * (scale[:, :, None, None] + 1.0) + shift[:, :, None, None]
    h = jax.nn.silu(h)
    h = conv(h, p['conv2_w'], p['conv2_b'])
    res = jnp.einsum('bchw,cd->bdhw', x.astype(_MM), p['res_w'].astype(_MM),
                     preferred_element_type=jnp.float32)
    res = res + p['res_b'][None, :, None, None]
    return h + res


# ------------------------------- params ---------------------------------------
def init_params(key):
    ks = jax.random.split(key, 16)

    def rn(k, shape, s=0.2):
        return (jax.random.normal(k, shape) * s).astype(jnp.float32)

    return dict(
        time_w=rn(ks[0], (TIME_DIM, 2 * DIM_OUT)),
        time_b=rn(ks[1], (2 * DIM_OUT,), 0.05),
        gn1_g=(jnp.ones((DIM_IN,)) + rn(ks[2], (DIM_IN,), 0.05)).astype(jnp.float32),
        gn1_b=rn(ks[3], (DIM_IN,), 0.05),
        conv1_w=rn(ks[4], (DIM_OUT, DIM_IN, 3, 3)),
        conv1_b=rn(ks[5], (DIM_OUT,), 0.05),
        attn_norm_g=jnp.ones((DIM_OUT,), jnp.float32),
        wq=rn(ks[6], (DIM_OUT, INNER)),
        wkv=rn(ks[7], (COND_DIM, 2 * INNER)),
        wo=rn(ks[8], (INNER, DIM_OUT)),
        null_kv=rn(ks[9], (2, DIM_HEAD), 1.0),
        q_scale=jnp.ones((DIM_HEAD,), jnp.float32),
        k_scale=jnp.ones((DIM_HEAD,), jnp.float32),
        out_norm_g=jnp.ones((DIM_OUT,), jnp.float32),
        gn2_g=(jnp.ones((DIM_OUT,)) + rn(ks[10], (DIM_OUT,), 0.05)).astype(jnp.float32),
        gn2_b=rn(ks[11], (DIM_OUT,), 0.05),
        conv2_w=rn(ks[12], (DIM_OUT, DIM_OUT, 3, 3)),
        conv2_b=rn(ks[13], (DIM_OUT,), 0.05),
        res_w=rn(ks[14], (DIM_IN, DIM_OUT)),
        res_b=rn(ks[15], (DIM_OUT,), 0.05),
    )


# --------------------------------- main ----------------------------------------
if __name__ == "__main__":
    B, H, W = 2, 16, 16
    key = jax.random.PRNGKey(0)
    kx, kt, kc, kpkey = jax.random.split(key, 4)
    x = jax.random.normal(kx, (B, DIM_IN, H, W), jnp.float32)
    time_emb = jax.random.normal(kt, (B, TIME_DIM), jnp.float32)
    cond = jax.random.normal(kc, (B, SEQ, COND_DIM), jnp.float32)
    params = init_params(kpkey)
    kparams = prepare_params(params, H, W)     # one-time host-side weight prep

    out = jax.block_until_ready(resnet_block_forward(x, time_emb, cond, kparams))
    assert out.shape == (B, DIM_OUT, H, W)
    assert bool(jnp.all(jnp.isfinite(out)))

    ref = jax.block_until_ready(ref_forward(x, time_emb, cond, params))
    assert bool(jnp.allclose(out, ref, atol=1e-2, rtol=1e-2)), float(
        jnp.max(jnp.abs(out - ref)))

    print("KERNEL_OK")
</pallas_src>

<mosaic_0001>
module attributes {stable_mosaic.version = 11 : i64} {
  func.func @kernel(%arg0: i32, %arg1: memref<1x8x256xf32, #tpu.memory_space<vmem>>, %arg2: memref<1x16x1xf32, #tpu.memory_space<vmem>>, %arg3: memref<1x8x32xf32, #tpu.memory_space<vmem>>, %arg4: memref<1x32x8xf32, #tpu.memory_space<vmem>>, %arg5: memref<8x1xf32, #tpu.memory_space<vmem>>, %arg6: memref<8x1xf32, #tpu.memory_space<vmem>>, %arg7: memref<16x72xf32, #tpu.memory_space<vmem>>, %arg8: memref<16x1xf32, #tpu.memory_space<vmem>>, %arg9: memref<32x16xf32, #tpu.memory_space<vmem>>, %arg10: memref<32x1xf32, #tpu.memory_space<vmem>>, %arg11: memref<32x16xf32, #tpu.memory_space<vmem>>, %arg12: memref<32x32xf32, #tpu.memory_space<vmem>>, %arg13: memref<32x32xf32, #tpu.memory_space<vmem>>, %arg14: memref<32x32xf32, #tpu.memory_space<vmem>>, %arg15: memref<1x32xf32, #tpu.memory_space<vmem>>, %arg16: memref<32x1xf32, #tpu.memory_space<vmem>>, %arg17: memref<32x1xf32, #tpu.memory_space<vmem>>, %arg18: memref<1x32xf32, #tpu.memory_space<vmem>>, %arg19: memref<36x32xf32, #tpu.memory_space<vmem>>, %arg20: memref<32x36xf32, #tpu.memory_space<vmem>>, %arg21: memref<16x32xf32, #tpu.memory_space<vmem>>, %arg22: memref<16x1xf32, #tpu.memory_space<vmem>>, %arg23: memref<16x1xf32, #tpu.memory_space<vmem>>, %arg24: memref<16x1xf32, #tpu.memory_space<vmem>>, %arg25: memref<16x152xf32, #tpu.memory_space<vmem>>, %arg26: memref<16x1xf32, #tpu.memory_space<vmem>>, %arg27: memref<9x256xf32, #tpu.memory_space<vmem>>, %arg28: memref<1x16x256xf32, #tpu.memory_space<vmem>>, %arg29: memref<152x256xf32, #tpu.memory_space<vmem>>) attributes {dimension_semantics = [#tpu.dimension_semantics<parallel>], iteration_bounds = array<i64: 2>, scalar_prefetch = 0 : i64, scratch_operands = 1 : i64, tpu.core_type = #tpu.core_type<tc>, window_params = [{transform_indices = @transform_0, window_bounds = array<i64: 1, 8, 256>}, {transform_indices = @transform_1, window_bounds = array<i64: 1, 16, 1>}, {transform_indices = @transform_2, window_bounds = array<i64: 1, 8, 32>}, {transform_indices = @transform_3, window_bounds = array<i64: 1, 32, 8>}, {pipeline_mode = #tpu.pipeline_mode<synchronous>, transform_indices = @transform_4, window_bounds = array<i64: 8, 1>}, {pipeline_mode = #tpu.pipeline_mode<synchronous>, transform_indices = @transform_5, window_bounds = array<i64: 8, 1>}, {pipeline_mode = #tpu.pipeline_mode<synchronous>, transform_indices = @transform_6, window_bounds = array<i64: 16, 72>}, {pipeline_mode = #tpu.pipeline_mode<synchronous>, transform_indices = @transform_7, window_bounds = array<i64: 16, 1>}, {pipeline_mode = #tpu.pipeline_mode<synchronous>, transform_indices = @transform_8, window_bounds = array<i64: 32, 16>}, {pipeline_mode = #tpu.pipeline_mode<synchronous>, transform_indices = @transform_9, window_bounds = array<i64: 32, 1>}, {pipeline_mode = #tpu.pipeline_mode<synchronous>, transform_indices = @transform_10, window_bounds = array<i64: 32, 16>}, {pipeline_mode = #tpu.pipeline_mode<synchronous>, transform_indices = @transform_11, window_bounds = array<i64: 32, 32>}, {pipeline_mode = #tpu.pipeline_mode<synchronous>, transform_indices = @transform_12, window_bounds = array<i64: 32, 32>}, {pipeline_mode = #tpu.pipeline_mode<synchronous>, transform_indices = @transform_13, window_bounds = array<i64: 32, 32>}, {pipeline_mode = #tpu.pipeline_mode<synchronous>, transform_indices = @transform_14, window_bounds = array<i64: 1, 32>}, {pipeline_mode = #tpu.pipeline_mode<synchronous>, transform_indices = @transform_15, window_bounds = array<i64: 32, 1>}, {pipeline_mode = #tpu.pipeline_mode<synchronous>, transform_indices = @transform_16, window_bounds = array<i64: 32, 1>}, {pipeline_mode = #tpu.pipeline_mode<synchronous>, transform_indices = @transform_17, window_bounds = array<i64: 1, 32>}, {pipeline_mode = #tpu.pipeline_mode<synchronous>, transform_indices = @transform_18, window_bounds = array<i64: 36, 32>}, {pipeline_mode = #tpu.pipeline_mode<synchronous>, transform_indices = @transform_19, window_bounds = array<i64: 32, 36>}, {pipeline_mode = #tpu.pipeline_mode<synchronous>, transform_indices = @transform_20, window_bounds = array<i64: 16, 32>}, {pipeline_mode = #tpu.pipeline_mode<synchronous>, transform_indices = @transform_21, window_bounds = array<i64: 16, 1>}, {pipeline_mode = #tpu.pipeline_mode<synchronous>, transform_indices = @transform_22, window_bounds = array<i64: 16, 1>}, {pipeline_mode = #tpu.pipeline_mode<synchronous>, transform_indices = @transform_23, window_bounds = array<i64: 16, 1>}, {pipeline_mode = #tpu.pipeline_mode<synchronous>, transform_indices = @transform_24, window_bounds = array<i64: 16, 152>}, {pipeline_mode = #tpu.pipeline_mode<synchronous>, transform_indices = @transform_25, window_bounds = array<i64: 16, 1>}, {pipeline_mode = #tpu.pipeline_mode<synchronous>, transform_indices = @transform_26, window_bounds = array<i64: 9, 256>}, {transform_indices = @transform_27, window_bounds = array<i64: 1, 16, 256>}]} {
    %c0 = arith.constant 0 : index
    %c0_0 = arith.constant 0 : index
    %c0_1 = arith.constant 0 : index
    %0 = vector.load %arg1[%c0, %c0_0, %c0_1] : memref<1x8x256xf32, #tpu.memory_space<vmem>>, vector<1x8x256xf32>
    %1 = vector.shape_cast %0 : vector<1x8x256xf32> to vector<8x256xf32>
    %c0_2 = arith.constant 0 : index
    %c0_3 = arith.constant 0 : index
    %c0_4 = arith.constant 0 : index
    %2 = vector.load %arg1[%c0_2, %c0_3, %c0_4] : memref<1x8x256xf32, #tpu.memory_space<vmem>>, vector<1x8x256xf32>
    %3 = vector.shape_cast %2 : vector<1x8x256xf32> to vector<8x256xf32>
    %c144 = arith.constant 144 : index
    %c0_5 = arith.constant 0 : index
    %4 = vector.load %arg29[%c144, %c0_5] : memref<152x256xf32, #tpu.memory_space<vmem>>, vector<8x256xf32>
    tpu.vector_store %arg29[%c144, %c0_5], %3 {strides = array<i32>} : memref<152x256xf32, #tpu.memory_space<vmem>>, vector<8x256xf32>,
    %c0_6 = arith.constant 0 : index
    %c0_7 = arith.constant 0 : index
    %c0_8 = arith.constant 0 : index
    %5 = vector.load %arg2[%c0_6, %c0_7, %c0_8] : memref<1x16x1xf32, #tpu.memory_space<vmem>>, vector<1x16x1xf32>
    %6 = vector.shape_cast %5 : vector<1x16x1xf32> to vector<16x1xf32>
    %7 = arith.negf %6 : vector<16x1xf32>
    %8 = math.exp %7 : vector<16x1xf32>
    %cst = arith.constant 1.000000e+00 : f32
    %9 = vector.broadcast %cst : f32 to vector<16x1xf32>
    %10 = arith.addf %9, %8 : vector<16x1xf32>
    %11 = arith.divf %9, %10 : vector<16x1xf32>
    %12 = arith.mulf %6, %11 : vector<16x1xf32>
    %c0_9 = arith.constant 0 : index
    %c0_10 = arith.constant 0 : index
    %13 = vector.load %arg9[%c0_9, %c0_10] : memref<32x16xf32, #tpu.memory_space<vmem>>, vector<32x16xf32>
    %cst_11 = arith.constant dense<0.000000e+00> : vector<32x1xf32>
    %14 = tpu.matmul %13, %12, %cst_11 {dimension_numbers = #tpu.dot_dimension_numbers<[1], [0], [0], [1], [0, 0, 1, 1], [], []>} : vector<32x16xf32>, vector<16x1xf32>, vector<32x1xf32> -> vector<32x1xf32>
    %c0_12 = arith.constant 0 : index
    %c0_13 = arith.constant 0 : index
    %15 = vector.load %arg10[%c0_12, %c0_13] : memref<32x1xf32, #tpu.memory_space<vmem>>, vector<32x1xf32>
    %16 = arith.addf %14, %15 : vector<32x1xf32>
    %17 = vector.extract_strided_slice %16 {offsets = [0, 0], sizes = [16, 1], strides = [1, 1]} : vector<32x1xf32> to vector<16x1xf32>
    %18 = vector.extract_strided_slice %16 {offsets = [16, 0], sizes = [16, 1], strides = [1, 1]} : vector<32x1xf32> to vector<16x1xf32>
    %c0_14 = arith.constant 0 : index
    %c0_15 = arith.constant 0 : index
    %19 = vector.load %arg5[%c0_14, %c0_15] : memref<8x1xf32, #tpu.memory_space<vmem>>, vector<8x1xf32>
    %c0_16 = arith.constant 0 : index
    %c0_17 = arith.constant 0 : index
    %20 = vector.load %arg6[%c0_16, %c0_17] : memref<8x1xf32, #tpu.memory_space<vmem>>, vector<8x1xf32>
    %21 = vector.extract_strided_slice %1 {offsets = [0, 0], sizes = [4, 256], strides = [1, 1]} : vector<8x256xf32> to vector<4x256xf32>
    %22 = vector.shape_cast %21 : vector<4x256xf32> to vector<1x4x256xf32>
    %cst_18 = arith.constant dense<0.000000e+00> : vector<1xf32>
    %23 = vector.multi_reduction <add>, %22, %cst_18 [1, 2] : vector<1x4x256xf32> to vector<1xf32>
    %24 = vector.shape_cast %23 : vector<1xf32> to vector<1x1x1xf32>
    %25 = vector.extract %24[0, 0, 0] : f32 from vector<1x1x1xf32>
    %26 = vector.broadcast %25 : f32 to vector<1x1xf32>
    %cst_19 = arith.constant 9.765625E-4 : f32
    %27 = vector.broadcast %cst_19 : f32 to vector<1x1xf32>
    %28 = arith.mulf %26, %27 : vector<1x1xf32>
    %29 = vector.broadcast %28 : vector<1x1xf32> to vector<4x256xf32>
    %30 = arith.subf %21, %29 : vector<4x256xf32>
    %31 = arith.mulf %30, %30 : vector<4x256xf32>
    %32 = vector.shape_cast %31 : vector<4x256xf32> to vector<1x4x256xf32>
    %cst_20 = arith.constant dense<0.000000e+00> : vector<1xf32>
    %33 = vector.multi_reduction <add>, %32, %cst_20 [1, 2] : vector<1x4x256xf32> to vector<1xf32>
    %34 = vector.shape_cast %33 : vector<1xf32> to vector<1x1x1xf32>
    %35 = vector.extract %34[0, 0, 0] : f32 from vector<1x1x1xf32>
    %36 = vector.broadcast %35 : f32 to vector<1x1xf32>
    %cst_21 = arith.constant 9.765625E-4 : f32
    %37 = vector.broadcast %cst_21 : f32 to vector<1x1xf32>
    %38 = arith.mulf %36, %37 : vector<1x1xf32>
    %cst_22 = arith.constant 9.99999974E-6 : f32
    %39 = vector.broadcast %cst_22 : f32 to vector<1x1xf32>
    %40 = arith.addf %38, %39 : vector<1x1xf32>
    %41 = math.rsqrt %40 : vector<1x1xf32>
    %42 = vector.broadcast %41 : vector<1x1xf32> to vector<4x256xf32>
    %43 = arith.mulf %30, %42 : vector<4x256xf32>
    %44 = vector.extract_strided_slice %1 {offsets = [4, 0], sizes = [4, 256], strides = [1, 1]} : vector<8x256xf32> to vector<4x256xf32>
    %45 = vector.shape_cast %44 : vector<4x256xf32> to vector<1x4x256xf32>
    %cst_23 = arith.constant dense<0.000000e+00> : vector<1xf32>
    %46 = vector.multi_reduction <add>, %45, %cst_23 [1, 2] : vector<1x4x256xf32> to vector<1xf32>
    %47 = vector.shape_cast %46 : vector<1xf32> to vector<1x1x1xf32>
    %48 = vector.extract %47[0, 0, 0] : f32 from vector<1x1x1xf32>
    %49 = vector.broadcast %48 : f32 to vector<1x1xf32>
    %cst_24 = arith.constant 9.765625E-4 : f32
    %50 = vector.broadcast %cst_24 : f32 to vector<1x1xf32>
    %51 = arith.mulf %49, %50 : vector<1x1xf32>
    %52 = vector.broadcast %51 : vector<1x1xf32> to vector<4x256xf32>
    %53 = arith.subf %44, %52 : vector<4x256xf32>
    %54 = arith.mulf %53, %53 : vector<4x256xf32>
    %55 = vector.shape_cast %54 : vector<4x256xf32> to vector<1x4x256xf32>
    %cst_25 = arith.constant dense<0.000000e+00> : vector<1xf32>
    %56 = vector.multi_reduction <add>, %55, %cst_25 [1, 2] : vector<1x4x256xf32> to vector<1xf32>
    %57 = vector.shape_cast %56 : vector<1xf32> to vector<1x1x1xf32>
    %58 = vector.extract %57[0, 0, 0] : f32 from vector<1x1x1xf32>
    %59 = vector.broadcast %58 : f32 to vector<1x1xf32>
    %cst_26 = arith.constant 9.765625E-4 : f32
    %60 = vector.broadcast %cst_26 : f32 to vector<1x1xf32>
    %61 = arith.mulf %59, %60 : vector<1x1xf32>
    %cst_27 = arith.constant 9.99999974E-6 : f32
    %62 = vector.broadcast %cst_27 : f32 to vector<1x1xf32>
    %63 = arith.addf %61, %62 : vector<1x1xf32>
    %64 = math.rsqrt %63 : vector<1x1xf32>
    %65 = vector.broadcast %64 : vector<1x1xf32> to vector<4x256xf32>
    %66 = arith.mulf %53, %65 : vector<4x256xf32>
    %67 = tpu.concatenate %43, %66 in 0 : vector<4x256xf32>, vector<4x256xf32> -> vector<8x256xf32>
    %68 = vector.broadcast %19 : vector<8x1xf32> to vector<8x256xf32>
    %69 = arith.mulf %67, %68 : vector<8x256xf32>
    %70 = vector.broadcast %20 : vector<8x1xf32> to vector<8x256xf32>
    %71 = arith.addf %69, %70 : vector<8x256xf32>
    %72 = arith.negf %71 : vector<8x256xf32>
    %73 = math.exp %72 : vector<8x256xf32>
    %cst_28 = arith.constant 1.000000e+00 : f32
    %74 = vector.broadcast %cst_28 : f32 to vector<8x256xf32>
    %75 = arith.addf %74, %73 : vector<8x256xf32>
    %76 = arith.divf %74, %75 : vector<8x256xf32>
    %77 = arith.mulf %71, %76 : vector<8x256xf32>
    %78 = vector.extract_strided_slice %77 {offsets = [0, 239], sizes = [8, 17], strides = [1, 1]} : vector<8x256xf32> to vector<8x17xf32>
    %79 = vector.extract_strided_slice %77 {offsets = [0, 0], sizes = [8, 239], strides = [1, 1]} : vector<8x256xf32> to vector<8x239xf32>
    %80 = tpu.concatenate %78, %79 in 1 : vector<8x17xf32>, vector<8x239xf32> -> vector<8x256xf32>
    %c0_29 = arith.constant 0 : index
    %c0_30 = arith.constant 0 : index
    %81 = vector.load %arg27[%c0_29, %c0_30] : memref<9x256xf32, #tpu.memory_space<vmem>>, vector<1x256xf32>
    %82 = vector.broadcast %81 : vector<1x256xf32> to vector<8x256xf32>
    %83 = arith.mulf %80, %82 : vector<8x256xf32>
    %c0_31 = arith.constant 0 : index
    %c0_32 = arith.constant 0 : index
    %84 = vector.load %arg29[%c0_31, %c0_32] : memref<152x256xf32, #tpu.memory_space<vmem>>, vector<8x256xf32>
    tpu.vector_store %arg29[%c0_31, %c0_32], %83 {strides = array<i32>} : memref<152x256xf32, #tpu.memory_space<vmem>>, vector<8x256xf32>,
    %85 = vector.extract_strided_slice %77 {offsets = [0, 240], sizes = [8, 16], strides = [1, 1]} : vector<8x256xf32> to vector<8x16xf32>
    %86 = vector.extract_strided_slice %77 {offsets = [0, 0], sizes = [8, 240], strides = [1, 1]} : vector<8x256xf32> to vector<8x240xf32>
    %87 = tpu.concatenate %85, %86 in 1 : vector<8x16xf32>, vector<8x240xf32> -> vector<8x256xf32>
    %c1 = arith.constant 1 : index
    %c0_33 = arith.constant 0 : index
    %88 = vector.load %arg27[%c1, %c0_33] : memref<9x256xf32, #tpu.memory_space<vmem>>, vector<1x256xf32>
    %89 = vector.broadcast %88 : vector<1x256xf32> to vector<8x256xf32>
    %90 = arith.mulf %87, %89 : vector<8x256xf32>
    %c8 = arith.constant 8 : index
    %c0_34 = arith.constant 0 : index
    %91 = vector.load %arg29[%c8, %c0_34] : memref<152x256xf32, #tpu.memory_space<vmem>>, vector<8x256xf32>
    tpu.vector_store %arg29[%c8, %c0_34], %90 {strides = array<i32>} : memref<152x256xf32, #tpu.memory_space<vmem>>, vector<8x256xf32>,
    %92 = vector.extract_strided_slice %77 {offsets = [0, 241], sizes = [8, 15], strides = [1, 1]} : vector<8x256xf32> to vector<8x15xf32>
    %93 = vector.extract_strided_slice %77 {offsets = [0, 0], sizes = [8, 241], strides = [1, 1]} : vector<8x256xf32> to vector<8x241xf32>
    %94 = tpu.concatenate %92, %93 in 1 : vector<8x15xf32>, vector<8x241xf32> -> vector<8x256xf32>
    %c2 = arith.constant 2 : index
    %c0_35 = arith.constant 0 : index
    %95 = vector.load %arg27[%c2, %c0_35] : memref<9x256xf32, #tpu.memory_space<vmem>>, vector<1x256xf32>
    %96 = vector.broadcast %95 : vector<1x256xf32> to vector<8x256xf32>
    %97 = arith.mulf %94, %96 : vector<8x256xf32>
    %c16 = arith.constant 16 : index
    %c0_36 = arith.constant 0 : index
    %98 = vector.load %arg29[%c16, %c0_36] : memref<152x256xf32, #tpu.memory_space<vmem>>, vector<8x256xf32>
    tpu.vector_store %arg29[%c16, %c0_36], %97 {strides = array<i32>} : memref<152x256xf32, #tpu.memory_space<vmem>>, vector<8x256xf32>,
    %99 = vector.extract_strided_slice %77 {offsets = [0, 255], sizes = [8, 1], strides = [1, 1]} : vector<8x256xf32> to vector<8x1xf32>
    %100 = vector.extract_strided_slice %77 {offsets = [0, 0], sizes = [8, 255], strides = [1, 1]} : vector<8x256xf32> to vector<8x255xf32>
    %101 = tpu.concatenate %99, %100 in 1 : vector<8x1xf32>, vector<8x255xf32> -> vector<8x256xf32>
    %c3 = arith.constant 3 : index
    %c0_37 = arith.constant 0 : index
    %102 = vector.load %arg27[%c3, %c0_37] : memref<9x256xf32, #tpu.memory_space<vmem>>, vector<1x256xf32>
    %103 = vector.broadcast %102 : vector<1x256xf32> to vector<8x256xf32>
    %104 = arith.mulf %101, %103 : vector<8x256xf32>
    %c24 = arith.constant 24 : index
    %c0_38 = arith.constant 0 : index
    %105 = vector.load %arg29[%c24, %c0_38] : memref<152x256xf32, #tpu.memory_space<vmem>>, vector<8x256xf32>
    tpu.vector_store %arg29[%c24, %c0_38], %104 {strides = array<i32>} : memref<152x256xf32, #tpu.memory_space<vmem>>, vector<8x256xf32>,
    %c32 = arith.constant 32 : index
    %c0_39 = arith.constant 0 : index
    %106 = vector.load %arg29[%c32, %c0_39] : memref<152x256xf32, #tpu.memory_space<vmem>>, vector<8x256xf32>
    tpu.vector_store %arg29[%c32, %c0_39], %77 {strides = array<i32>} : memref<152x256xf32, #tpu.memory_space<vmem>>, vector<8x256xf32>,
    %107 = vector.extract_strided_slice %77 {offsets = [0, 1], sizes = [8, 255], strides = [1, 1]} : vector<8x256xf32> to vector<8x255xf32>
    %108 = vector.extract_strided_slice %77 {offsets = [0, 0], sizes = [8, 1], strides = [1, 1]} : vector<8x256xf32> to vector<8x1xf32>
    %109 = tpu.concatenate %107, %108 in 1 : vector<8x255xf32>, vector<8x1xf32> -> vector<8x256xf32>
    %c5 = arith.constant 5 : index
    %c0_40 = arith.constant 0 : index
    %110 = vector.load %arg27[%c5, %c0_40] : memref<9x256xf32, #tpu.memory_space<vmem>>, vector<1x256xf32>
    %111 = vector.broadcast %110 : vector<1x256xf32> to vector<8x256xf32>
    %112 = arith.mulf %109, %111 : vector<8x256xf32>
    %c40 = arith.constant 40 : index
    %c0_41 = arith.constant 0 : index
    %113 = vector.load %arg29[%c40, %c0_41] : memref<152x256xf32, #tpu.memory_space<vmem>>, vector<8x256xf32>
    tpu.vector_store %arg29[%c40, %c0_41], %112 {strides = array<i32>} : memref<152x256xf32, #tpu.memory_space<vmem>>, vector<8x256xf32>,
    %114 = vector.extract_strided_slice %77 {offsets = [0, 15], sizes = [8, 241], strides = [1, 1]} : vector<8x256xf32> to vector<8x241xf32>
    %115 = vector.extract_strided_slice %77 {offsets = [0, 0], sizes = [8, 15], strides = [1, 1]} : vector<8x256xf32> to vector<8x15xf32>
    %116 = tpu.concatenate %114, %115 in 1 : vector<8x241xf32>, vector<8x15xf32> -> vector<8x256xf32>
    %c6 = arith.constant 6 : index
    %c0_42 = arith.constant 0 : index
    %117 = vector.load %arg27[%c6, %c0_42] : memref<9x256xf32, #tpu.memory_space<vmem>>, vector<1x256xf32>
    %118 = vector.broadcast %117 : vector<1x256xf32> to vector<8x256xf32>
    %119 = arith.mulf %116, %118 : vector<8x256xf32>
    %c48 = arith.constant 48 : index
    %c0_43 = arith.constant 0 : index
    %120 = vector.load %arg29[%c48, %c0_43] : memref<152x256xf32, #tpu.memory_space<vmem>>, vector<8x256xf32>
    tpu.vector_store %arg29[%c48, %c0_43], %119 {strides = array<i32>} : memref<152x256xf32, #tpu.memory_space<vmem>>, vector<8x256xf32>,
    %121 = vector.extract_strided_slice %77 {offsets = [0, 16], sizes = [8, 240], strides = [1, 1]} : vector<8x256xf32> to vector<8x240xf32>
    %122 = vector.extract_strided_slice %77 {offsets = [0, 0], sizes = [8, 16], strides = [1, 1]} : vector<8x256xf32> to vector<8x16xf32>
    %123 = tpu.concatenate %121, %122 in 1 : vector<8x240xf32>, vector<8x16xf32> -> vector<8x256xf32>
    %c7 = arith.constant 7 : index
    %c0_44 = arith.constant 0 : index
    %124 = vector.load %arg27[%c7, %c0_44] : memref<9x256xf32, #tpu.memory_space<vmem>>, vector<1x256xf32>
    %125 = vector.broadcast %124 : vector<1x256xf32> to vector<8x256xf32>
    %126 = arith.mulf %123, %125 : vector<8x256xf32>
    %c56 = arith.constant 56 : index
    %c0_45 = arith.constant 0 : index
    %127 = vector.load %arg29[%c56, %c0_45] : memref<152x256xf32, #tpu.memory_space<vmem>>, vector<8x256xf32>
    tpu.vector_store %arg29[%c56, %c0_45], %126 {strides = array<i32>} : memref<152x256xf32, #tpu.memory_space<vmem>>, vector<8x256xf32>,
    %128 = vector.extract_strided_slice %77 {offsets = [0, 17], sizes = [8, 239], strides = [1, 1]} : vector<8x256xf32> to vector<8x239xf32>
    %129 = vector.extract_strided_slice %77 {offsets = [0, 0], sizes = [8, 17], strides = [1, 1]} : vector<8x256xf32> to vector<8x17xf32>
    %130 = tpu.concatenate %128, %129 in 1 : vector<8x239xf32>, vector<8x17xf32> -> vector<8x256xf32>
    %c8_46 = arith.constant 8 : index
    %c0_47 = arith.constant 0 : index
    %131 = vector.load %arg27[%c8_46, %c0_47] : memref<9x256xf32, #tpu.memory_space<vmem>>, vector<1x256xf32>
    %132 = vector.broadcast %131 : vector<1x256xf32> to vector<8x256xf32>
    %133 = arith.mulf %130, %132 : vector<8x256xf32>
    %c64 = arith.constant 64 : index
    %c0_48 = arith.constant 0 : index
    %134 = vector.load %arg29[%c64, %c0_48] : memref<152x256xf32, #tpu.memory_space<vmem>>, vector<8x256xf32>
    tpu.vector_store %arg29[%c64, %c0_48], %133 {strides = array<i32>} : memref<152x256xf32, #tpu.memory_space<vmem>>, vector<8x256xf32>,
    %c0_49 = arith.constant 0 : index
    %c0_50 = arith.constant 0 : index
    %135 = vector.load %arg8[%c0_49, %c0_50] : memref<16x1xf32, #tpu.memory_space<vmem>>, vector<16x1xf32>
    %c0_51 = arith.constant 0 : index
    %c0_52 = arith.constant 0 : index
    %136 = vector.load %arg7[%c0_51, %c0_52] : memref<16x72xf32, #tpu.memory_space<vmem>>, vector<16x72xf32>
    %c0_53 = arith.constant 0 : index
    %c0_54 = arith.constant 0 : index
    %137 = vector.load %arg29[%c0_53, %c0_54] : memref<152x256xf32, #tpu.memory_space<vmem>>, vector<72x256xf32>
    %cst_55 = arith.constant dense<0.000000e+00> : vector<16x256xf32>
    %138 = tpu.matmul %136, %137, %cst_55 {dimension_numbers = #tpu.dot_dimension_numbers<[1], [0], [0], [1], [0, 0, 1, 1], [], []>} : vector<16x72xf32>, vector<72x256xf32>, vector<16x256xf32> -> vector<16x256xf32>
    %139 = vector.broadcast %135 : vector<16x1xf32> to vector<16x256xf32>
    %140 = arith.addf %138, %139 : vector<16x256xf32>
    %cst_56 = arith.constant dense<0xFF800000> : vector<256xf32>
    %141 = vector.multi_reduction <maximumf>, %140, %cst_56 [0] : vector<16x256xf32> to vector<256xf32>
    %142 = vector.shape_cast %141 : vector<256xf32> to vector<1x256xf32>
    %143 = vector.broadcast %142 : vector<1x256xf32> to vector<16x256xf32>
    %144 = arith.divf %140, %143 : vector<16x256xf32>
    %cst_57 = arith.constant dense<0.000000e+00> : vector<256xf32>
    %145 = vector.multi_reduction <add>, %144, %cst_57 [0] : vector<16x256xf32> to vector<256xf32>
    %146 = vector.shape_cast %145 : vector<256xf32> to vector<1x256xf32>
    %cst_58 = arith.constant 1.600000e+01 : f32
    %147 = vector.broadcast %cst_58 : f32 to vector<1x256xf32>
    %148 = arith.divf %146, %147 : vector<1x256xf32>
    %149 = vector.broadcast %148 : vector<1x256xf32> to vector<16x256xf32>
    %150 = arith.subf %144, %149 : vector<16x256xf32>
    %151 = arith.mulf %150, %150 : vector<16x256xf32>
    %cst_59 = arith.constant dense<0.000000e+00> : vector<256xf32>
    %152 = vector.multi_reduction <add>, %151, %cst_59 [0] : vector<16x256xf32> to vector<256xf32>
    %153 = vector.shape_cast %152 : vector<256xf32> to vector<1x256xf32>
    %cst_60 = arith.constant 1.600000e+01 : f32
    %154 = vector.broadcast %cst_60 : f32 to vector<1x256xf32>
    %155 = arith.divf %153, %154 : vector<1x256xf32>
    %156 = vector.broadcast %148 : vector<1x256xf32> to vector<16x256xf32>
    %157 = arith.subf %144, %156 : vector<16x256xf32>
    %cst_61 = arith.constant 9.99999974E-6 : f32
    %158 = vector.broadcast %cst_61 : f32 to vector<1x256xf32>
    %159 = arith.addf %155, %158 : vector<1x256xf32>
    %160 = math.rsqrt %159 : vector<1x256xf32>
    %161 = vector.broadcast %160 : vector<1x256xf32> to vector<16x256xf32>
    %162 = arith.mulf %157, %161 : vector<16x256xf32>
    %c0_62 = arith.constant 0 : index
    %c0_63 = arith.constant 0 : index
    %163 = vector.load %arg11[%c0_62, %c0_63] : memref<32x16xf32, #tpu.memory_space<vmem>>, vector<32x16xf32>
    %cst_64 = arith.constant dense<0.000000e+00> : vector<32x256xf32>
    %164 = tpu.matmul %163, %162, %cst_64 {dimension_numbers = #tpu.dot_dimension_numbers<[1], [0], [0], [1], [0, 0, 1, 1], [], []>} : vector<32x16xf32>, vector<16x256xf32>, vector<32x256xf32> -> vector<32x256xf32>
    %c0_65 = arith.constant 0 : index
    %c0_66 = arith.constant 0 : index
    %c0_67 = arith.constant 0 : index
    %165 = vector.load %arg3[%c0_65, %c0_66, %c0_67] : memref<1x8x32xf32, #tpu.memory_space<vmem>>, vector<1x8x32xf32>
    %166 = vector.shape_cast %165 : vector<1x8x32xf32> to vector<8x32xf32>
    %c0_68 = arith.constant 0 : index
    %c0_69 = arith.constant 0 : index
    %167 = vector.load %arg12[%c0_68, %c0_69] : memref<32x32xf32, #tpu.memory_space<vmem>>, vector<32x32xf32>
    %cst_70 = arith.constant dense<0.000000e+00> : vector<8x32xf32>
    %168 = tpu.matmul %166, %167, %cst_70 {dimension_numbers = #tpu.dot_dimension_numbers<[1], [0], [0], [1], [0, 0, 1, 1], [], []>} : vector<8x32xf32>, vector<32x32xf32>, vector<8x32xf32> -> vector<8x32xf32>
    %c0_71 = arith.constant 0 : index
    %c0_72 = arith.constant 0 : index
    %169 = vector.load %arg13[%c0_71, %c0_72] : memref<32x32xf32, #tpu.memory_space<vmem>>, vector<32x32xf32>
    %c0_73 = arith.constant 0 : index
    %c0_74 = arith.constant 0 : index
    %c0_75 = arith.constant 0 : index
    %170 = vector.load %arg4[%c0_73, %c0_74, %c0_75] : memref<1x32x8xf32, #tpu.memory_space<vmem>>, vector<1x32x8xf32>
    %171 = vector.shape_cast %170 : vector<1x32x8xf32> to vector<32x8xf32>
    %cst_76 = arith.constant dense<0.000000e+00> : vector<32x8xf32>
    %172 = tpu.matmul %169, %171, %cst_76 {dimension_numbers = #tpu.dot_dimension_numbers<[1], [0], [0], [1], [0, 0, 1, 1], [], []>} : vector<32x32xf32>, vector<32x8xf32>, vector<32x8xf32> -> vector<32x8xf32>
    %c0_77 = arith.constant 0 : index
    %c0_78 = arith.constant 0 : index
    %173 = vector.load %arg14[%c0_77, %c0_78] : memref<32x32xf32, #tpu.memory_space<vmem>>, vector<32x32xf32>
    %174 = arith.mulf %164, %164 : vector<32x256xf32>
    %cst_79 = arith.constant dense<0.000000e+00> : vector<32x256xf32>
    %175 = tpu.matmul %173, %174, %cst_79 {dimension_numbers = #tpu.dot_dimension_numbers<[1], [0], [0], [1], [0, 0, 1, 1], [], []>} : vector<32x32xf32>, vector<32x256xf32>, vector<32x256xf32> -> vector<32x256xf32>
    %cst_80 = arith.constant 1.000000e-24 : f32
    %176 = vector.broadcast %cst_80 : f32 to vector<32x256xf32>
    %177 = arith.maximumf %175, %176 : vector<32x256xf32>
    %178 = math.rsqrt %177 : vector<32x256xf32>
    %179 = arith.mulf %164, %178 : vector<32x256xf32>
    %c0_81 = arith.constant 0 : index
    %c0_82 = arith.constant 0 : index
    %180 = vector.load %arg17[%c0_81, %c0_82] : memref<32x1xf32, #tpu.memory_space<vmem>>, vector<32x1xf32>
    %181 = vector.broadcast %180 : vector<32x1xf32> to vector<32x256xf32>
    %182 = arith.mulf %179, %181 : vector<32x256xf32>
    %c0_83 = arith.constant 0 : index
    %c0_84 = arith.constant 0 : index
    %183 = vector.load %arg15[%c0_83, %c0_84] : memref<1x32xf32, #tpu.memory_space<vmem>>, vector<1x32xf32>
    %184 = tpu.concatenate %183, %168 in 0 : vector<1x32xf32>, vector<8x32xf32> -> vector<9x32xf32>
    %185 = tpu.concatenate %184, %184, %184, %184 in 0 : vector<9x32xf32>, vector<9x32xf32>, vector<9x32xf32>, vector<9x32xf32> -> vector<36x32xf32>
    %c0_85 = arith.constant 0 : index
    %c0_86 = arith.constant 0 : index
    %186 = vector.load %arg19[%c0_85, %c0_86] : memref<36x32xf32, #tpu.memory_space<vmem>>, vector<36x32xf32>
    %187 = arith.mulf %185, %186 : vector<36x32xf32>
    %188 = arith.mulf %187, %187 : vector<36x32xf32>
    %cst_87 = arith.constant dense<0.000000e+00> : vector<36xf32>
    %189 = vector.multi_reduction <add>, %188, %cst_87 [1] : vector<36x32xf32> to vector<36xf32>
    %190 = vector.shape_cast %189 : vector<36xf32> to vector<36x1xf32>
    %cst_88 = arith.constant 1.000000e-24 : f32
    %191 = vector.broadcast %cst_88 : f32 to vector<36x1xf32>
    %192 = arith.maximumf %190, %191 : vector<36x1xf32>
    %193 = math.rsqrt %192 : vector<36x1xf32>
    %194 = vector.broadcast %193 : vector<36x1xf32> to vector<36x32xf32>
    %195 = arith.mulf %187, %194 : vector<36x32xf32>
    %c0_89 = arith.constant 0 : index
    %c0_90 = arith.constant 0 : index
    %196 = vector.load %arg18[%c0_89, %c0_90] : memref<1x32xf32, #tpu.memory_space<vmem>>, vector<1x32xf32>
    %197 = vector.broadcast %196 : vector<1x32xf32> to vector<36x32xf32>
    %198 = arith.mulf %195, %197 : vector<36x32xf32>
    %cst_91 = arith.constant dense<0.000000e+00> : vector<36x256xf32>
    %199 = tpu.matmul %198, %182, %cst_91 {dimension_numbers = #tpu.dot_dimension_numbers<[1], [0], [0], [1], [0, 0, 1, 1], [], []>} : vector<36x32xf32>, vector<32x256xf32>, vector<36x256xf32> -> vector<36x256xf32>
    %cst_92 = arith.constant 8.000000e+00 : f32
    %200 = vector.broadcast %cst_92 : f32 to vector<36x256xf32>
    %201 = arith.mulf %199, %200 : vector<36x256xf32>
    %202 = vector.extract_strided_slice %201 {offsets = [0, 0], sizes = [9, 256], strides = [1, 1]} : vector<36x256xf32> to vector<9x256xf32>
    %cst_93 = arith.constant dense<0xFF800000> : vector<256xf32>
    %203 = vector.multi_reduction <maximumf>, %202, %cst_93 [0] : vector<9x256xf32> to vector<256xf32>
    %204 = vector.shape_cast %203 : vector<256xf32> to vector<1x256xf32>
    %205 = vector.broadcast %204 : vector<1x256xf32> to vector<9x256xf32>
    %206 = arith.subf %202, %205 : vector<9x256xf32>
    %207 = math.exp %206 : vector<9x256xf32>
    %cst_94 = arith.constant dense<0.000000e+00> : vector<256xf32>
    %208 = vector.multi_reduction <add>, %207, %cst_94 [0] : vector<9x256xf32> to vector<256xf32>
    %209 = vector.shape_cast %208 : vector<256xf32> to vector<1x256xf32>
    %cst_95 = arith.constant 1.000000e+00 : f32
    %210 = vector.broadcast %cst_95 : f32 to vector<1x256xf32>
    %211 = arith.divf %210, %209 : vector<1x256xf32>
    %212 = vector.broadcast %211 : vector<1x256xf32> to vector<9x256xf32>
    %213 = arith.mulf %207, %212 : vector<9x256xf32>
    %214 = vector.extract_strided_slice %201 {offsets = [9, 0], sizes = [9, 256], strides = [1, 1]} : vector<36x256xf32> to vector<9x256xf32>
    %cst_96 = arith.constant dense<0xFF800000> : vector<256xf32>
    %215 = vector.multi_reduction <maximumf>, %214, %cst_96 [0] : vector<9x256xf32> to vector<256xf32>
    %216 = vector.shape_cast %215 : vector<256xf32> to vector<1x256xf32>
    %217 = vector.broadcast %216 : vector<1x256xf32> to vector<9x256xf32>
    %218 = arith.subf %214, %217 : vector<9x256xf32>
    %219 = math.exp %218 : vector<9x256xf32>
    %cst_97 = arith.constant dense<0.000000e+00> : vector<256xf32>
    %220 = vector.multi_reduction <add>, %219, %cst_97 [0] : vector<9x256xf32> to vector<256xf32>
    %221 = vector.shape_cast %220 : vector<256xf32> to vector<1x256xf32>
    %cst_98 = arith.constant 1.000000e+00 : f32
    %222 = vector.broadcast %cst_98 : f32 to vector<1x256xf32>
    %223 = arith.divf %222, %221 : vector<1x256xf32>
    %224 = vector.broadcast %223 : vector<1x256xf32> to vector<9x256xf32>
    %225 = arith.mulf %219, %224 : vector<9x256xf32>
    %226 = vector.extract_strided_slice %201 {offsets = [18, 0], sizes = [9, 256], strides = [1, 1]} : vector<36x256xf32> to vector<9x256xf32>
    %cst_99 = arith.constant dense<0xFF800000> : vector<256xf32>
    %227 = vector.multi_reduction <maximumf>, %226, %cst_99 [0] : vector<9x256xf32> to vector<256xf32>
    %228 = vector.shape_cast %227 : vector<256xf32> to vector<1x256xf32>
    %229 = vector.broadcast %228 : vector<1x256xf32> to vector<9x256xf32>
    %230 = arith.subf %226, %229 : vector<9x256xf32>
    %231 = math.exp %230 : vector<9x256xf32>
    %cst_100 = arith.constant dense<0.000000e+00> : vector<256xf32>
    %232 = vector.multi_reduction <add>, %231, %cst_100 [0] : vector<9x256xf32> to vector<256xf32>
    %233 = vector.shape_cast %232 : vector<256xf32> to vector<1x256xf32>
    %cst_101 = arith.constant 1.000000e+00 : f32
    %234 = vector.broadcast %cst_101 : f32 to vector<1x256xf32>
    %235 = arith.divf %234, %233 : vector<1x256xf32>
    %236 = vector.broadcast %235 : vector<1x256xf32> to vector<9x256xf32>
    %237 = arith.mulf %231, %236 : vector<9x256xf32>
    %238 = vector.extract_strided_slice %201 {offsets = [27, 0], sizes = [9, 256], strides = [1, 1]} : vector<36x256xf32> to vector<9x256xf32>
    %cst_102 = arith.constant dense<0xFF800000> : vector<256xf32>
    %239 = vector.multi_reduction <maximumf>, %238, %cst_102 [0] : vector<9x256xf32> to vector<256xf32>
    %240 = vector.shape_cast %239 : vector<256xf32> to vector<1x256xf32>
    %241 = vector.broadcast %240 : vector<1x256xf32> to vector<9x256xf32>
    %242 = arith.subf %238, %241 : vector<9x256xf32>
    %243 = math.exp %242 : vector<9x256xf32>
    %cst_103 = arith.constant dense<0.000000e+00> : vector<256xf32>
    %244 = vector.multi_reduction <add>, %243, %cst_103 [0] : vector<9x256xf32> to vector<256xf32>
    %245 = vector.shape_cast %244 : vector<256xf32> to vector<1x256xf32>
    %cst_104 = arith.constant 1.000000e+00 : f32
    %246 = vector.broadcast %cst_104 : f32 to vector<1x256xf32>
    %247 = arith.divf %246, %245 : vector<1x256xf32>
    %248 = vector.broadcast %247 : vector<1x256xf32> to vector<9x256xf32>
    %249 = arith.mulf %243, %248 : vector<9x256xf32>
    %250 = tpu.concatenate %213, %225, %237, %249 in 0 : vector<9x256xf32>, vector<9x256xf32>, vector<9x256xf32>, vector<9x256xf32> -> vector<36x256xf32>
    %c0_105 = arith.constant 0 : index
    %c0_106 = arith.constant 0 : index
    %251 = vector.load %arg16[%c0_105, %c0_106] : memref<32x1xf32, #tpu.memory_space<vmem>>, vector<32x1xf32>
    %252 = tpu.concatenate %251, %172 in 1 : vector<32x1xf32>, vector<32x8xf32> -> vector<32x9xf32>
    %253 = tpu.concatenate %252, %252, %252, %252 in 1 : vector<32x9xf32>, vector<32x9xf32>, vector<32x9xf32>, vector<32x9xf32> -> vector<32x36xf32>
    %c0_107 = arith.constant 0 : index
    %c0_108 = arith.constant 0 : index
    %254 = vector.load %arg20[%c0_107, %c0_108] : memref<32x36xf32, #tpu.memory_space<vmem>>, vector<32x36xf32>
    %255 = arith.mulf %253, %254 : vector<32x36xf32>
    %cst_109 = arith.constant dense<0.000000e+00> : vector<32x256xf32>
    %256 = tpu.matmul %255, %250, %cst_109 {dimension_numbers = #tpu.dot_dimension_numbers<[1], [0], [0], [1], [0, 0, 1, 1], [], []>} : vector<32x36xf32>, vector<36x256xf32>, vector<32x256xf32> -> vector<32x256xf32>
    %c0_110 = arith.constant 0 : index
    %c0_111 = arith.constant 0 : index
    %257 = vector.load %arg21[%c0_110, %c0_111] : memref<16x32xf32, #tpu.memory_space<vmem>>, vector<16x32xf32>
    %cst_112 = arith.constant dense<0.000000e+00> : vector<16x256xf32>
    %258 = tpu.matmul %257, %256, %cst_112 {dimension_numbers = #tpu.dot_dimension_numbers<[1], [0], [0], [1], [0, 0, 1, 1], [], []>} : vector<16x32xf32>, vector<32x256xf32>, vector<16x256xf32> -> vector<16x256xf32>
    %c0_113 = arith.constant 0 : index
    %c0_114 = arith.constant 0 : index
    %259 = vector.load %arg22[%c0_113, %c0_114] : memref<16x1xf32, #tpu.memory_space<vmem>>, vector<16x1xf32>
    %cst_115 = arith.constant dense<0xFF800000> : vector<256xf32>
    %260 = vector.multi_reduction <maximumf>, %258, %cst_115 [0] : vector<16x256xf32> to vector<256xf32>
    %261 = vector.shape_cast %260 : vector<256xf32> to vector<1x256xf32>
    %262 = vector.broadcast %261 : vector<1x256xf32> to vector<16x256xf32>
    %263 = arith.divf %258, %262 : vector<16x256xf32>
    %cst_116 = arith.constant dense<0.000000e+00> : vector<256xf32>
    %264 = vector.multi_reduction <add>, %263, %cst_116 [0] : vector<16x256xf32> to vector<256xf32>
    %265 = vector.shape_cast %264 : vector<256xf32> to vector<1x256xf32>
    %cst_117 = arith.constant 1.600000e+01 : f32
    %266 = vector.broadcast %cst_117 : f32 to vector<1x256xf32>
    %267 = arith.divf %265, %266 : vector<1x256xf32>
    %268 = vector.broadcast %267 : vector<1x256xf32> to vector<16x256xf32>
    %269 = arith.subf %263, %268 : vector<16x256xf32>
    %270 = arith.mulf %269, %269 : vector<16x256xf32>
    %cst_118 = arith.constant dense<0.000000e+00> : vector<256xf32>
    %271 = vector.multi_reduction <add>, %270, %cst_118 [0] : vector<16x256xf32> to vector<256xf32>
    %272 = vector.shape_cast %271 : vector<256xf32> to vector<1x256xf32>
    %cst_119 = arith.constant 1.600000e+01 : f32
    %273 = vector.broadcast %cst_119 : f32 to vector<1x256xf32>
    %274 = arith.divf %272, %273 : vector<1x256xf32>
    %275 = vector.broadcast %267 : vector<1x256xf32> to vector<16x256xf32>
    %276 = arith.subf %263, %275 : vector<16x256xf32>
    %cst_120 = arith.constant 9.99999974E-6 : f32
    %277 = vector.broadcast %cst_120 : f32 to vector<1x256xf32>
    %278 = arith.addf %274, %277 : vector<1x256xf32>
    %279 = math.rsqrt %278 : vector<1x256xf32>
    %280 = vector.broadcast %279 : vector<1x256xf32> to vector<16x256xf32>
    %281 = arith.mulf %276, %280 : vector<16x256xf32>
    %282 = vector.broadcast %259 : vector<16x1xf32> to vector<16x256xf32>
    %283 = arith.mulf %281, %282 : vector<16x256xf32>
    %284 = arith.addf %283, %140 : vector<16x256xf32>
    %c0_121 = arith.constant 0 : index
    %c0_122 = arith.constant 0 : index
    %285 = vector.load %arg23[%c0_121, %c0_122] : memref<16x1xf32, #tpu.memory_space<vmem>>, vector<16x1xf32>
    %c0_123 = arith.constant 0 : index
    %c0_124 = arith.constant 0 : index
    %286 = vector.load %arg24[%c0_123, %c0_124] : memref<16x1xf32, #tpu.memory_space<vmem>>, vector<16x1xf32>
    %287 = vector.extract_strided_slice %284 {offsets = [0, 0], sizes = [4, 256], strides = [1, 1]} : vector<16x256xf32> to vector<4x256xf32>
    %288 = vector.shape_cast %287 : vector<4x256xf32> to vector<1x4x256xf32>
    %cst_125 = arith.constant dense<0.000000e+00> : vector<1xf32>
    %289 = vector.multi_reduction <add>, %288, %cst_125 [1, 2] : vector<1x4x256xf32> to vector<1xf32>
    %290 = vector.shape_cast %289 : vector<1xf32> to vector<1x1x1xf32>
    %291 = vector.extract %290[0, 0, 0] : f32 from vector<1x1x1xf32>
    %292 = vector.broadcast %291 : f32 to vector<1x1xf32>
    %cst_126 = arith.constant 9.765625E-4 : f32
    %293 = vector.broadcast %cst_126 : f32 to vector<1x1xf32>
    %294 = arith.mulf %292, %293 : vector<1x1xf32>
    %295 = vector.broadcast %294 : vector<1x1xf32> to vector<4x256xf32>
    %296 = arith.subf %287, %295 : vector<4x256xf32>
    %297 = arith.mulf %296, %296 : vector<4x256xf32>
    %298 = vector.shape_cast %297 : vector<4x256xf32> to vector<1x4x256xf32>
    %cst_127 = arith.constant dense<0.000000e+00> : vector<1xf32>
    %299 = vector.multi_reduction <add>, %298, %cst_127 [1, 2] : vector<1x4x256xf32> to vector<1xf32>
    %300 = vector.shape_cast %299 : vector<1xf32> to vector<1x1x1xf32>
    %301 = vector.extract %300[0, 0, 0] : f32 from vector<1x1x1xf32>
    %302 = vector.broadcast %301 : f32 to vector<1x1xf32>
    %cst_128 = arith.constant 9.765625E-4 : f32
    %303 = vector.broadcast %cst_128 : f32 to vector<1x1xf32>
    %304 = arith.mulf %302, %303 : vector<1x1xf32>
    %cst_129 = arith.constant 9.99999974E-6 : f32
    %305 = vector.broadcast %cst_129 : f32 to vector<1x1xf32>
    %306 = arith.addf %304, %305 : vector<1x1xf32>
    %307 = math.rsqrt %306 : vector<1x1xf32>
    %308 = vector.broadcast %307 : vector<1x1xf32> to vector<4x256xf32>
    %309 = arith.mulf %296, %308 : vector<4x256xf32>
    %310 = vector.extract_strided_slice %284 {offsets = [4, 0], sizes = [4, 256], strides = [1, 1]} : vector<16x256xf32> to vector<4x256xf32>
    %311 = vector.shape_cast %310 : vector<4x256xf32> to vector<1x4x256xf32>
    %cst_130 = arith.constant dense<0.000000e+00> : vector<1xf32>
    %312 = vector.multi_reduction <add>, %311, %cst_130 [1, 2] : vector<1x4x256xf32> to vector<1xf32>
    %313 = vector.shape_cast %312 : vector<1xf32> to vector<1x1x1xf32>
    %314 = vector.extract %313[0, 0, 0] : f32 from vector<1x1x1xf32>
    %315 = vector.broadcast %314 : f32 to vector<1x1xf32>
    %cst_131 = arith.constant 9.765625E-4 : f32
    %316 = vector.broadcast %cst_131 : f32 to vector<1x1xf32>
    %317 = arith.mulf %315, %316 : vector<1x1xf32>
    %318 = vector.broadcast %317 : vector<1x1xf32> to vector<4x256xf32>
    %319 = arith.subf %310, %318 : vector<4x256xf32>
    %320 = arith.mulf %319, %319 : vector<4x256xf32>
    %321 = vector.shape_cast %320 : vector<4x256xf32> to vector<1x4x256xf32>
    %cst_132 = arith.constant dense<0.000000e+00> : vector<1xf32>
    %322 = vector.multi_reduction <add>, %321, %cst_132 [1, 2] : vector<1x4x256xf32> to vector<1xf32>
    %323 = vector.shape_cast %322 : vector<1xf32> to vector<1x1x1xf32>
    %324 = vector.extract %323[0, 0, 0] : f32 from vector<1x1x1xf32>
    %325 = vector.broadcast %324 : f32 to vector<1x1xf32>
    %cst_133 = arith.constant 9.765625E-4 : f32
    %326 = vector.broadcast %cst_133 : f32 to vector<1x1xf32>
    %327 = arith.mulf %325, %326 : vector<1x1xf32>
    %cst_134 = arith.constant 9.99999974E-6 : f32
    %328 = vector.broadcast %cst_134 : f32 to vector<1x1xf32>
    %329 = arith.addf %327, %328 : vector<1x1xf32>
    %330 = math.rsqrt %329 : vector<1x1xf32>
    %331 = vector.broadcast %330 : vector<1x1xf32> to vector<4x256xf32>
    %332 = arith.mulf %319, %331 : vector<4x256xf32>
    %333 = vector.extract_strided_slice %284 {offsets = [8, 0], sizes = [4, 256], strides = [1, 1]} : vector<16x256xf32> to vector<4x256xf32>
    %334 = vector.shape_cast %333 : vector<4x256xf32> to vector<1x4x256xf32>
    %cst_135 = arith.constant dense<0.000000e+00> : vector<1xf32>
    %335 = vector.multi_reduction <add>, %334, %cst_135 [1, 2] : vector<1x4x256xf32> to vector<1xf32>
    %336 = vector.shape_cast %335 : vector<1xf32> to vector<1x1x1xf32>
    %337 = vector.extract %336[0, 0, 0] : f32 from vector<1x1x1xf32>
    %338 = vector.broadcast %337 : f32 to vector<1x1xf32>
    %cst_136 = arith.constant 9.765625E-4 : f32
    %339 = vector.broadcast %cst_136 : f32 to vector<1x1xf32>
    %340 = arith.mulf %338, %339 : vector<1x1xf32>
    %341 = vector.broadcast %340 : vector<1x1xf32> to vector<4x256xf32>
    %342 = arith.subf %333, %341 : vector<4x256xf32>
    %343 = arith.mulf %342, %342 : vector<4x256xf32>
    %344 = vector.shape_cast %343 : vector<4x256xf32> to vector<1x4x256xf32>
    %cst_137 = arith.constant dense<0.000000e+00> : vector<1xf32>
    %345 = vector.multi_reduction <add>, %344, %cst_137 [1, 2] : vector<1x4x256xf32> to vector<1xf32>
    %346 = vector.shape_cast %345 : vector<1xf32> to vector<1x1x1xf32>
    %347 = vector.extract %346[0, 0, 0] : f32 from vector<1x1x1xf32>
    %348 = vector.broadcast %347 : f32 to vector<1x1xf32>
    %cst_138 = arith.constant 9.765625E-4 : f32
    %349 = vector.broadcast %cst_138 : f32 to vector<1x1xf32>
    %350 = arith.mulf %348, %349 : vector<1x1xf32>
    %cst_139 = arith.constant 9.99999974E-6 : f32
    %351 = vector.broadcast %cst_139 : f32 to vector<1x1xf32>
    %352 = arith.addf %350, %351 : vector<1x1xf32>
    %353 = math.rsqrt %352 : vector<1x1xf32>
    %354 = vector.broadcast %353 : vector<1x1xf32> to vector<4x256xf32>
    %355 = arith.mulf %342, %354 : vector<4x256xf32>
    %356 = vector.extract_strided_slice %284 {offsets = [12, 0], sizes = [4, 256], strides = [1, 1]} : vector<16x256xf32> to vector<4x256xf32>
    %357 = vector.shape_cast %356 : vector<4x256xf32> to vector<1x4x256xf32>
    %cst_140 = arith.constant dense<0.000000e+00> : vector<1xf32>
    %358 = vector.multi_reduction <add>, %357, %cst_140 [1, 2] : vector<1x4x256xf32> to vector<1xf32>
    %359 = vector.shape_cast %358 : vector<1xf32> to vector<1x1x1xf32>
    %360 = vector.extract %359[0, 0, 0] : f32 from vector<1x1x1xf32>
    %361 = vector.broadcast %360 : f32 to vector<1x1xf32>
    %cst_141 = arith.constant 9.765625E-4 : f32
    %362 = vector.broadcast %cst_141 : f32 to vector<1x1xf32>
    %363 = arith.mulf %361, %362 : vector<1x1xf32>
    %364 = vector.broadcast %363 : vector<1x1xf32> to vector<4x256xf32>
    %365 = arith.subf %356, %364 : vector<4x256xf32>
    %366 = arith.mulf %365, %365 : vector<4x256xf32>
    %367 = vector.shape_cast %366 : vector<4x256xf32> to vector<1x4x256xf32>
    %cst_142 = arith.constant dense<0.000000e+00> : vector<1xf32>
    %368 = vector.multi_reduction <add>, %367, %cst_142 [1, 2] : vector<1x4x256xf32> to vector<1xf32>
    %369 = vector.shape_cast %368 : vector<1xf32> to vector<1x1x1xf32>
    %370 = vector.extract %369[0, 0, 0] : f32 from vector<1x1x1xf32>
    %371 = vector.broadcast %370 : f32 to vector<1x1xf32>
    %cst_143 = arith.constant 9.765625E-4 : f32
    %372 = vector.broadcast %cst_143 : f32 to vector<1x1xf32>
    %373 = arith.mulf %371, %372 : vector<1x1xf32>
    %cst_144 = arith.constant 9.99999974E-6 : f32
    %374 = vector.broadcast %cst_144 : f32 to vector<1x1xf32>
    %375 = arith.addf %373, %374 : vector<1x1xf32>
    %376 = math.rsqrt %375 : vector<1x1xf32>
    %377 = vector.broadcast %376 : vector<1x1xf32> to vector<4x256xf32>
    %378 = arith.mulf %365, %377 : vector<4x256xf32>
    %379 = tpu.concatenate %309, %332, %355, %378 in 0 : vector<4x256xf32>, vector<4x256xf32>, vector<4x256xf32>, vector<4x256xf32> -> vector<16x256xf32>
    %380 = vector.broadcast %285 : vector<16x1xf32> to vector<16x256xf32>
    %381 = arith.mulf %379, %380 : vector<16x256xf32>
    %382 = vector.broadcast %286 : vector<16x1xf32> to vector<16x256xf32>
    %383 = arith.addf %381, %382 : vector<16x256xf32>
    %cst_145 = arith.constant 1.000000e+00 : f32
    %384 = vector.broadcast %cst_145 : f32 to vector<16x1xf32>
    %385 = arith.addf %17, %384 : vector<16x1xf32>
    %386 = vector.broadcast %385 : vector<16x1xf32> to vector<16x256xf32>
    %387 = arith.mulf %383, %386 : vector<16x256xf32>
    %388 = vector.broadcast %18 : vector<16x1xf32> to vector<16x256xf32>
    %389 = arith.addf %387, %388 : vector<16x256xf32>
    %390 = arith.negf %389 : vector<16x256xf32>
    %391 = math.exp %390 : vector<16x256xf32>
    %cst_146 = arith.constant 1.000000e+00 : f32
    %392 = vector.broadcast %cst_146 : f32 to vector<16x256xf32>
    %393 = arith.addf %392, %391 : vector<16x256xf32>
    %394 = arith.divf %392, %393 : vector<16x256xf32>
    %395 = arith.mulf %389, %394 : vector<16x256xf32>
    %396 = vector.extract_strided_slice %395 {offsets = [0, 239], sizes = [16, 17], strides = [1, 1]} : vector<16x256xf32> to vector<16x17xf32>
    %397 = vector.extract_strided_slice %395 {offsets = [0, 0], sizes = [16, 239], strides = [1, 1]} : vector<16x256xf32> to vector<16x239xf32>
    %398 = tpu.concatenate %396, %397 in 1 : vector<16x17xf32>, vector<16x239xf32> -> vector<16x256xf32>
    %c0_147 = arith.constant 0 : index
    %c0_148 = arith.constant 0 : index
    %399 = vector.load %arg27[%c0_147, %c0_148] : memref<9x256xf32, #tpu.memory_space<vmem>>, vector<1x256xf32>
    %400 = vector.broadcast %399 : vector<1x256xf32> to vector<16x256xf32>
    %401 = arith.mulf %398, %400 : vector<16x256xf32>
    %c0_149 = arith.constant 0 : index
    %c0_150 = arith.constant 0 : index
    %402 = vector.load %arg29[%c0_149, %c0_150] : memref<152x256xf32, #tpu.memory_space<vmem>>, vector<16x256xf32>
    tpu.vector_store %arg29[%c0_149, %c0_150], %401 {strides = array<i32>} : memref<152x256xf32, #tpu.memory_space<vmem>>, vector<16x256xf32>,
    %403 = vector.extract_strided_slice %395 {offsets = [0, 240], sizes = [16, 16], strides = [1, 1]} : vector<16x256xf32> to vector<16x16xf32>
    %404 = vector.extract_strided_slice %395 {offsets = [0, 0], sizes = [16, 240], strides = [1, 1]} : vector<16x256xf32> to vector<16x240xf32>
    %405 = tpu.concatenate %403, %404 in 1 : vector<16x16xf32>, vector<16x240xf32> -> vector<16x256xf32>
    %c1_151 = arith.constant 1 : index
    %c0_152 = arith.constant 0 : index
    %406 = vector.load %arg27[%c1_151, %c0_152] : memref<9x256xf32, #tpu.memory_space<vmem>>, vector<1x256xf32>
    %407 = vector.broadcast %406 : vector<1x256xf32> to vector<16x256xf32>
    %408 = arith.mulf %405, %407 : vector<16x256xf32>
    %c16_153 = arith.constant 16 : index
    %c0_154 = arith.constant 0 : index
    %409 = vector.load %arg29[%c16_153, %c0_154] : memref<152x256xf32, #tpu.memory_space<vmem>>, vector<16x256xf32>
    tpu.vector_store %arg29[%c16_153, %c0_154], %408 {strides = array<i32>} : memref<152x256xf32, #tpu.memory_space<vmem>>, vector<16x256xf32>,
    %410 = vector.extract_strided_slice %395 {offsets = [0, 241], sizes = [16, 15], strides = [1, 1]} : vector<16x256xf32> to vector<16x15xf32>
    %411 = vector.extract_strided_slice %395 {offsets = [0, 0], sizes = [16, 241], strides = [1, 1]} : vector<16x256xf32> to vector<16x241xf32>
    %412 = tpu.concatenate %410, %411 in 1 : vector<16x15xf32>, vector<16x241xf32> -> vector<16x256xf32>
    %c2_155 = arith.constant 2 : index
    %c0_156 = arith.constant 0 : index
    %413 = vector.load %arg27[%c2_155, %c0_156] : memref<9x256xf32, #tpu.memory_space<vmem>>, vector<1x256xf32>
    %414 = vector.broadcast %413 : vector<1x256xf32> to vector<16x256xf32>
    %415 = arith.mulf %412, %414 : vector<16x256xf32>
    %c32_157 = arith.constant 32 : index
    %c0_158 = arith.constant 0 : index
    %416 = vector.load %arg29[%c32_157, %c0_158] : memref<152x256xf32, #tpu.memory_space<vmem>>, vector<16x256xf32>
    tpu.vector_store %arg29[%c32_157, %c0_158], %415 {strides = array<i32>} : memref<152x256xf32, #tpu.memory_space<vmem>>, vector<16x256xf32>,
    %417 = vector.extract_strided_slice %395 {offsets = [0, 255], sizes = [16, 1], strides = [1, 1]} : vector<16x256xf32> to vector<16x1xf32>
    %418 = vector.extract_strided_slice %395 {offsets = [0, 0], sizes = [16, 255], strides = [1, 1]} : vector<16x256xf32> to vector<16x255xf32>
    %419 = tpu.concatenate %417, %418 in 1 : vector<16x1xf32>, vector<16x255xf32> -> vector<16x256xf32>
    %c3_159 = arith.constant 3 : index
    %c0_160 = arith.constant 0 : index
    %420 = vector.load %arg27[%c3_159, %c0_160] : memref<9x256xf32, #tpu.memory_space<vmem>>, vector<1x256xf32>
    %421 = vector.broadcast %420 : vector<1x256xf32> to vector<16x256xf32>
    %422 = arith.mulf %419, %421 : vector<16x256xf32>
    %c48_161 = arith.constant 48 : index
    %c0_162 = arith.constant 0 : index
    %423 = vector.load %arg29[%c48_161, %c0_162] : memref<152x256xf32, #tpu.memory_space<vmem>>, vector<16x256xf32>
    tpu.vector_store %arg29[%c48_161, %c0_162], %422 {strides = array<i32>} : memref<152x256xf32, #tpu.memory_space<vmem>>, vector<16x256xf32>,
    %c64_163 = arith.constant 64 : index
    %c0_164 = arith.constant 0 : index
    %424 = vector.load %arg29[%c64_163, %c0_164] : memref<152x256xf32, #tpu.memory_space<vmem>>, vector<16x256xf32>
    tpu.vector_store %arg29[%c64_163, %c0_164], %395 {strides = array<i32>} : memref<152x256xf32, #tpu.memory_space<vmem>>, vector<16x256xf32>,
    %425 = vector.extract_strided_slice %395 {offsets = [0, 1], sizes = [16, 255], strides = [1, 1]} : vector<16x256xf32> to vector<16x255xf32>
    %426 = vector.extract_strided_slice %395 {offsets = [0, 0], sizes = [16, 1], strides = [1, 1]} : vector<16x256xf32> to vector<16x1xf32>
    %427 = tpu.concatenate %425, %426 in 1 : vector<16x255xf32>, vector<16x1xf32> -> vector<16x256xf32>
    %c5_165 = arith.constant 5 : index
    %c0_166 = arith.constant 0 : index
    %428 = vector.load %arg27[%c5_165, %c0_166] : memref<9x256xf32, #tpu.memory_space<vmem>>, vector<1x256xf32>
    %429 = vector.broadcast %428 : vector<1x256xf32> to vector<16x256xf32>
    %430 = arith.mulf %427, %429 : vector<16x256xf32>
    %c80 = arith.constant 80 : index
    %c0_167 = arith.constant 0 : index
    %431 = vector.load %arg29[%c80, %c0_167] : memref<152x256xf32, #tpu.memory_space<vmem>>, vector<16x256xf32>
    tpu.vector_store %arg29[%c80, %c0_167], %430 {strides = array<i32>} : memref<152x256xf32, #tpu.memory_space<vmem>>, vector<16x256xf32>,
    %432 = vector.extract_strided_slice %395 {offsets = [0, 15], sizes = [16, 241], strides = [1, 1]} : vector<16x256xf32> to vector<16x241xf32>
    %433 = vector.extract_strided_slice %395 {offsets = [0, 0], sizes = [16, 15], strides = [1, 1]} : vector<16x256xf32> to vector<16x15xf32>
    %434 = tpu.concatenate %432, %433 in 1 : vector<16x241xf32>, vector<16x15xf32> -> vector<16x256xf32>
    %c6_168 = arith.constant 6 : index
    %c0_169 = arith.constant 0 : index
    %435 = vector.load %arg27[%c6_168, %c0_169] : memref<9x256xf32, #tpu.memory_space<vmem>>, vector<1x256xf32>
    %436 = vector.broadcast %435 : vector<1x256xf32> to vector<16x256xf32>
    %437 = arith.mulf %434, %436 : vector<16x256xf32>
    %c96 = arith.constant 96 : index
    %c0_170 = arith.constant 0 : index
    %438 = vector.load %arg29[%c96, %c0_170] : memref<152x256xf32, #tpu.memory_space<vmem>>, vector<16x256xf32>
    tpu.vector_store %arg29[%c96, %c0_170], %437 {strides = array<i32>} : memref<152x256xf32, #tpu.memory_space<vmem>>, vector<16x256xf32>,
    %439 = vector.extract_strided_slice %395 {offsets = [0, 16], sizes = [16, 240], strides = [1, 1]} : vector<16x256xf32> to vector<16x240xf32>
    %440 = vector.extract_strided_slice %395 {offsets = [0, 0], sizes = [16, 16], strides = [1, 1]} : vector<16x256xf32> to vector<16x16xf32>
    %441 = tpu.concatenate %439, %440 in 1 : vector<16x240xf32>, vector<16x16xf32> -> vector<16x256xf32>
    %c7_171 = arith.constant 7 : index
    %c0_172 = arith.constant 0 : index
    %442 = vector.load %arg27[%c7_171, %c0_172] : memref<9x256xf32, #tpu.memory_space<vmem>>, vector<1x256xf32>
    %443 = vector.broadcast %442 : vector<1x256xf32> to vector<16x256xf32>
    %444 = arith.mulf %441, %443 : vector<16x256xf32>
    %c112 = arith.constant 112 : index
    %c0_173 = arith.constant 0 : index
    %445 = vector.load %arg29[%c112, %c0_173] : memref<152x256xf32, #tpu.memory_space<vmem>>, vector<16x256xf32>
    tpu.vector_store %arg29[%c112, %c0_173], %444 {strides = array<i32>} : memref<152x256xf32, #tpu.memory_space<vmem>>, vector<16x256xf32>,
    %446 = vector.extract_strided_slice %395 {offsets = [0, 17], sizes = [16, 239], strides = [1, 1]} : vector<16x256xf32> to vector<16x239xf32>
    %447 = vector.extract_strided_slice %395 {offsets = [0, 0], sizes = [16, 17], strides = [1, 1]} : vector<16x256xf32> to vector<16x17xf32>
    %448 = tpu.concatenate %446, %447 in 1 : vector<16x239xf32>, vector<16x17xf32> -> vector<16x256xf32>
    %c8_174 = arith.constant 8 : index
    %c0_175 = arith.constant 0 : index
    %449 = vector.load %arg27[%c8_174, %c0_175] : memref<9x256xf32, #tpu.memory_space<vmem>>, vector<1x256xf32>
    %450 = vector.broadcast %449 : vector<1x256xf32> to vector<16x256xf32>
    %451 = arith.mulf %448, %450 : vector<16x256xf32>
    %c128 = arith.constant 128 : index
    %c0_176 = arith.constant 0 : index
    %452 = vector.load %arg29[%c128, %c0_176] : memref<152x256xf32, #tpu.memory_space<vmem>>, vector<16x256xf32>
    tpu.vector_store %arg29[%c128, %c0_176], %451 {strides = array<i32>} : memref<152x256xf32, #tpu.memory_space<vmem>>, vector<16x256xf32>,
    %c0_177 = arith.constant 0 : index
    %c0_178 = arith.constant 0 : index
    %453 = vector.load %arg26[%c0_177, %c0_178] : memref<16x1xf32, #tpu.memory_space<vmem>>, vector<16x1xf32>
    %c0_179 = arith.constant 0 : index
    %c0_180 = arith.constant 0 : index
    %454 = vector.load %arg25[%c0_179, %c0_180] : memref<16x152xf32, #tpu.memory_space<vmem>>, vector<16x152xf32>
    %c0_181 = arith.constant 0 : index
    %c0_182 = arith.constant 0 : index
    %455 = vector.load %arg29[%c0_181, %c0_182] : memref<152x256xf32, #tpu.memory_space<vmem>>, vector<152x256xf32>
    %cst_183 = arith.constant dense<0.000000e+00> : vector<16x256xf32>
    %456 = tpu.matmul %454, %455, %cst_183 {dimension_numbers = #tpu.dot_dimension_numbers<[1], [0], [0], [1], [0, 0, 1, 1], [], []>} : vector<16x152xf32>, vector<152x256xf32>, vector<16x256xf32> -> vector<16x256xf32>
    %457 = vector.broadcast %453 : vector<16x1xf32> to vector<16x256xf32>
    %458 = arith.addf %456, %457 : vector<16x256xf32>
    %c0_184 = arith.constant 0 : index
    %c0_185 = arith.constant 0 : index
    %c0_186 = arith.constant 0 : index
    %459 = vector.load %arg28[%c0_184, %c0_185, %c0_186] : memref<1x16x256xf32, #tpu.memory_space<vmem>>, vector<1x16x256xf32>
    %460 = vector.shape_cast %459 : vector<1x16x256xf32> to vector<16x256xf32>
    %461 = vector.shape_cast %458 : vector<16x256xf32> to vector<1x16x256xf32>
    tpu.vector_store %arg28[%c0_184, %c0_185, %c0_186], %461 {strides = array<i32>} : memref<1x16x256xf32, #tpu.memory_space<vmem>>, vector<1x16x256xf32>,
    return
  }
  func.func @transform_0(%arg0: i32) -> (i32, i32, i32) {
    %c0_i32 = arith.constant 0 : i32
    %c0_i32_0 = arith.constant 0 : i32
    %c0_i32_1 = arith.constant 0 : i32
    return %arg0, %c0_i32, %c0_i32_0 : i32, i32, i32
  }
  func.func @transform_1(%arg0: i32) -> (i32, i32, i32) {
    %c0_i32 = arith.constant 0 : i32
    %c0_i32_0 = arith.constant 0 : i32
    %c0_i32_1 = arith.constant 0 : i32
    return %arg0, %c0_i32, %c0_i32_0 : i32, i32, i32
  }
  func.func @transform_2(%arg0: i32) -> (i32, i32, i32) {
    %c0_i32 = arith.constant 0 : i32
    %c0_i32_0 = arith.constant 0 : i32
    %c0_i32_1 = arith.constant 0 : i32
    return %arg0, %c0_i32, %c0_i32_0 : i32, i32, i32
  }
  func.func @transform_3(%arg0: i32) -> (i32, i32, i32) {
    %c0_i32 = arith.constant 0 : i32
    %c0_i32_0 = arith.constant 0 : i32
    %c0_i32_1 = arith.constant 0 : i32
    return %arg0, %c0_i32, %c0_i32_0 : i32, i32, i32
  }
  func.func @transform_4(%arg0: i32) -> (i32, i32) {
    %c0_i32 = arith.constant 0 : i32
    %c0_i32_0 = arith.constant 0 : i32
    %c0_i32_1 = arith.constant 0 : i32
    return %c0_i32, %c0_i32_0 : i32, i32
  }
  func.func @transform_5(%arg0: i32) -> (i32, i32) {
    %c0_i32 = arith.constant 0 : i32
    %c0_i32_0 = arith.constant 0 : i32
    %c0_i32_1 = arith.constant 0 : i32
    return %c0_i32, %c0_i32_0 : i32, i32
  }
  func.func @transform_6(%arg0: i32) -> (i32, i32) {
    %c0_i32 = arith.constant 0 : i32
    %c0_i32_0 = arith.constant 0 : i32
    %c0_i32_1 = arith.constant 0 : i32
    return %c0_i32, %c0_i32_0 : i32, i32
  }
  func.func @transform_7(%arg0: i32) -> (i32, i32) {
    %c0_i32 = arith.constant 0 : i32
    %c0_i32_0 = arith.constant 0 : i32
    %c0_i32_1 = arith.constant 0 : i32
    return %c0_i32, %c0_i32_0 : i32, i32
  }
  func.func @transform_8(%arg0: i32) -> (i32, i32) {
    %c0_i32 = arith.constant 0 : i32
    %c0_i32_0 = arith.constant 0 : i32
    %c0_i32_1 = arith.constant 0 : i32
    return %c0_i32, %c0_i32_0 : i32, i32
  }
  func.func @transform_9(%arg0: i32) -> (i32, i32) {
    %c0_i32 = arith.constant 0 : i32
    %c0_i32_0 = arith.constant 0 : i32
    %c0_i32_1 = arith.constant 0 : i32
    return %c0_i32, %c0_i32_0 : i32, i32
  }
  func.func @transform_10(%arg0: i32) -> (i32, i32) {
    %c0_i32 = arith.constant 0 : i32
    %c0_i32_0 = arith.constant 0 : i32
    %c0_i32_1 = arith.constant 0 : i32
    return %c0_i32, %c0_i32_0 : i32, i32
  }
  func.func @transform_11(%arg0: i32) -> (i32, i32) {
    %c0_i32 = arith.constant 0 : i32
    %c0_i32_0 = arith.constant 0 : i32
    %c0_i32_1 = arith.constant 0 : i32
    return %c0_i32, %c0_i32_0 : i32, i32
  }
  func.func @transform_12(%arg0: i32) -> (i32, i32) {
    %c0_i32 = arith.constant 0 : i32
    %c0_i32_0 = arith.constant 0 : i32
    %c0_i32_1 = arith.constant 0 : i32
    return %c0_i32, %c0_i32_0 : i32, i32
  }
  func.func @transform_13(%arg0: i32) -> (i32, i32) {
    %c0_i32 = arith.constant 0 : i32
    %c0_i32_0 = arith.constant 0 : i32
    %c0_i32_1 = arith.constant 0 : i32
    return %c0_i32, %c0_i32_0 : i32, i32
  }
  func.func @transform_14(%arg0: i32) -> (i32, i32) {
    %c0_i32 = arith.constant 0 : i32
    %c0_i32_0 = arith.constant 0 : i32
    %c0_i32_1 = arith.constant 0 : i32
    return %c0_i32, %c0_i32_0 : i32, i32
  }
  func.func @transform_15(%arg0: i32) -> (i32, i32) {
    %c0_i32 = arith.constant 0 : i32
    %c0_i32_0 = arith.constant 0 : i32
    %c0_i32_1 = arith.constant 0 : i32
    return %c0_i32, %c0_i32_0 : i32, i32
  }
  func.func @transform_16(%arg0: i32) -> (i32, i32) {
    %c0_i32 = arith.constant 0 : i32
    %c0_i32_0 = arith.constant 0 : i32
    %c0_i32_1 = arith.constant 0 : i32
    return %c0_i32, %c0_i32_0 : i32, i32
  }
  func.func @transform_17(%arg0: i32) -> (i32, i32) {
    %c0_i32 = arith.constant 0 : i32
    %c0_i32_0 = arith.constant 0 : i32
    %c0_i32_1 = arith.constant 0 : i32
    return %c0_i32, %c0_i32_0 : i32, i32
  }
  func.func @transform_18(%arg0: i32) -> (i32, i32) {
    %c0_i32 = arith.constant 0 : i32
    %c0_i32_0 = arith.constant 0 : i32
    %c0_i32_1 = arith.constant 0 : i32
    return %c0_i32, %c0_i32_0 : i32, i32
  }
  func.func @transform_19(%arg0: i32) -> (i32, i32) {
    %c0_i32 = arith.constant 0 : i32
    %c0_i32_0 = arith.constant 0 : i32
    %c0_i32_1 = arith.constant 0 : i32
    return %c0_i32, %c0_i32_0 : i32, i32
  }
  func.func @transform_20(%arg0: i32) -> (i32, i32) {
    %c0_i32 = arith.constant 0 : i32
    %c0_i32_0 = arith.constant 0 : i32
    %c0_i32_1 = arith.constant 0 : i32
    return %c0_i32, %c0_i32_0 : i32, i32
  }
  func.func @transform_21(%arg0: i32) -> (i32, i32) {
    %c0_i32 = arith.constant 0 : i32
    %c0_i32_0 = arith.constant 0 : i32
    %c0_i32_1 = arith.constant 0 : i32
    return %c0_i32, %c0_i32_0 : i32, i32
  }
  func.func @transform_22(%arg0: i32) -> (i32, i32) {
    %c0_i32 = arith.constant 0 : i32
    %c0_i32_0 = arith.constant 0 : i32
    %c0_i32_1 = arith.constant 0 : i32
    return %c0_i32, %c0_i32_0 : i32, i32
  }
  func.func @transform_23(%arg0: i32) -> (i32, i32) {
    %c0_i32 = arith.constant 0 : i32
    %c0_i32_0 = arith.constant 0 : i32
    %c0_i32_1 = arith.constant 0 : i32
    return %c0_i32, %c0_i32_0 : i32, i32
  }
  func.func @transform_24(%arg0: i32) -> (i32, i32) {
    %c0_i32 = arith.constant 0 : i32
    %c0_i32_0 = arith.constant 0 : i32
    %c0_i32_1 = arith.constant 0 : i32
    return %c0_i32, %c0_i32_0 : i32, i32
  }
  func.func @transform_25(%arg0: i32) -> (i32, i32) {
    %c0_i32 = arith.constant 0 : i32
    %c0_i32_0 = arith.constant 0 : i32
    %c0_i32_1 = arith.constant 0 : i32
    return %c0_i32, %c0_i32_0 : i32, i32
  }
  func.func @transform_26(%arg0: i32) -> (i32, i32) {
    %c0_i32 = arith.constant 0 : i32
    %c0_i32_0 = arith.constant 0 : i32
    %c0_i32_1 = arith.constant 0 : i32
    return %c0_i32, %c0_i32_0 : i32, i32
  }
  func.func @transform_27(%arg0: i32) -> (i32, i32, i32) {
    %c0_i32 = arith.constant 0 : i32
    %c0_i32_0 = arith.constant 0 : i32
    %c0_i32_1 = arith.constant 0 : i32
    return %arg0, %c0_i32, %c0_i32_0 : i32, i32, i32
  }
}

</mosaic_0001>

<llo_original>
// kernel: resnet_block_forward.1
$region0: #{resnet_block_forward.1}
  #allocation0 [shape = 'u32[]', space=smem, size = 0x4, offset = 0x4, fixed_abs, tag = 'smem constant byte address 0x4 - core index']
  #allocation1 [shape = 'u32[72,128]{1,0:T(1,128)}', space=vmem, size = 0x9000, scoped, tag = 'internal scratch']
  #allocation2 [shape = 'f32[152,256]{1,0:T(8,128)}', space=vmem, size = 0x26000, scoped, tag = 'scratch operand']
  %s0 = inlined_call_operand.vmem [shape: f32[2,8,256], index: 0, kind: input, shape index: {}]
  %s1 = inlined_call_operand.vmem [shape: f32[2,16,1], index: 1, kind: input, shape index: {}]
  %s2 = inlined_call_operand.vmem [shape: f32[2,8,32], index: 2, kind: input, shape index: {}]
  %s3 = inlined_call_operand.vmem [shape: f32[2,32,8], index: 3, kind: input, shape index: {}]
  %s4 = inlined_call_operand.vmem [shape: f32[8,1], index: 4, kind: input, shape index: {}]
  %s5 = inlined_call_operand.vmem [shape: f32[8,1], index: 5, kind: input, shape index: {}]
  %s6 = inlined_call_operand.vmem [shape: f32[16,72], index: 6, kind: input, shape index: {}]
  %s7 = inlined_call_operand.vmem [shape: f32[16,1], index: 7, kind: input, shape index: {}]
  %s8 = inlined_call_operand.vmem [shape: f32[32,16], index: 8, kind: input, shape index: {}]
  %s9 = inlined_call_operand.vmem [shape: f32[32,1], index: 9, kind: input, shape index: {}]
  %s10 = inlined_call_operand.vmem [shape: f32[32,16], index: 10, kind: input, shape index: {}]
  %s11 = inlined_call_operand.vmem [shape: f32[32,32], index: 11, kind: input, shape index: {}]
  %s12 = inlined_call_operand.vmem [shape: f32[32,32], index: 12, kind: input, shape index: {}]
  %s13 = inlined_call_operand.vmem [shape: f32[32,32], index: 13, kind: input, shape index: {}]
  %s14 = inlined_call_operand.vmem [shape: f32[1,32], index: 14, kind: input, shape index: {}]
  %s15 = inlined_call_operand.vmem [shape: f32[32,1], index: 15, kind: input, shape index: {}]
  %s16 = inlined_call_operand.vmem [shape: f32[32,1], index: 16, kind: input, shape index: {}]
  %s17 = inlined_call_operand.vmem [shape: f32[1,32], index: 17, kind: input, shape index: {}]
  %s18 = inlined_call_operand.vmem [shape: f32[36,32], index: 18, kind: input, shape index: {}]
  %s19 = inlined_call_operand.vmem [shape: f32[32,36], index: 19, kind: input, shape index: {}]
  %s20 = inlined_call_operand.vmem [shape: f32[16,32], index: 20, kind: input, shape index: {}]
  %s21 = inlined_call_operand.vmem [shape: f32[16,1], index: 21, kind: input, shape index: {}]
  %s22 = inlined_call_operand.vmem [shape: f32[16,1], index: 22, kind: input, shape index: {}]
  %s23 = inlined_call_operand.vmem [shape: f32[16,1], index: 23, kind: input, shape index: {}]
  %s24 = inlined_call_operand.vmem [shape: f32[16,152], index: 24, kind: input, shape index: {}]
  %s25 = inlined_call_operand.vmem [shape: f32[16,1], index: 25, kind: input, shape index: {}]
  %s26 = inlined_call_operand.vmem [shape: f32[9,256], index: 26, kind: input, shape index: {}]
  %s27 = inlined_call_operand.vmem [shape: f32[2,16,256], index: 27, kind: output, shape index: {}]
  %s28 = sld [smem:[#allocation0]]
  $region141: #{resnet_block_forward.1} parent=0
    _
  %s30 = ssub.s32 1, %s28
  %s31 = scalar_select 0, %s30, %s28
  loop: start=0, step=1, limit=4
  $region2: #{resnet_block_forward.1} parent=0 // loop_pre_header
    _
  $region3: #{resnet_block_forward.1} parent=0 // loop_header
    %s33 = sphi 0, %s37
    %p34 = scmp.ge.s32.totalorder %s33, 4
    %s43 = sphi 0, %s45
    %s46 = sphi 0, %s43
    %s47 = sphi 0, %s46
    %s63 = sphi 0, %s47
    %s69 = sphi 0, %s71
    %s72 = sphi 0, %s69
    %s73 = sphi 0, %s72
    %s89 = sphi 0, %s73
    %s95 = sphi 0, %s97
    %s98 = sphi 0, %s95
    %s99 = sphi 0, %s98
    %s115 = sphi 0, %s99
    %s121 = sphi 0, %s123
    %s124 = sphi 0, %s121
    %s125 = sphi 0, %s124
    %s141 = sphi 0, %s125
    %s145 = sphi 0, %s145
    %s147 = sphi 0, %s145
    %s148 = sphi 0, %s147
    %s162 = sphi 0, %s148
    %s166 = sphi 0, %s166
    %s168 = sphi 0, %s166
    %s169 = sphi 0, %s168
    %s183 = sphi 0, %s169
    %s187 = sphi 0, %s187
    %s189 = sphi 0, %s187
    %s190 = sphi 0, %s189
    %s204 = sphi 0, %s190
    %s208 = sphi 0, %s208
    %s210 = sphi 0, %s208
    %s211 = sphi 0, %s210
    %s225 = sphi 0, %s211
    %s229 = sphi 0, %s229
    %s231 = sphi 0, %s229
    %s232 = sphi 0, %s231
    %s246 = sphi 0, %s232
    %s250 = sphi 0, %s250
    %s252 = sphi 0, %s250
    %s253 = sphi 0, %s252
    %s267 = sphi 0, %s253
    %s271 = sphi 0, %s271
    %s273 = sphi 0, %s271
    %s274 = sphi 0, %s273
    %s288 = sphi 0, %s274
    %s292 = sphi 0, %s292
    %s294 = sphi 0, %s292
    %s295 = sphi 0, %s294
    %s309 = sphi 0, %s295
    %s313 = sphi 0, %s313
    %s315 = sphi 0, %s313
    %s316 = sphi 0, %s315
    %s330 = sphi 0, %s316
    %s334 = sphi 0, %s334
    %s336 = sphi 0, %s334
    %s337 = sphi 0, %s336
    %s351 = sphi 0, %s337
    %s355 = sphi 0, %s355
    %s357 = sphi 0, %s355
    %s358 = sphi 0, %s357
    %s372 = sphi 0, %s358
    %s376 = sphi 0, %s376
    %s378 = sphi 0, %s376
    %s379 = sphi 0, %s378
    %s393 = sphi 0, %s379
    %s397 = sphi 0, %s397
    %s399 = sphi 0, %s397
    %s400 = sphi 0, %s399
    %s414 = sphi 0, %s400
    %s418 = sphi 0, %s418
    %s420 = sphi 0, %s418
    %s421 = sphi 0, %s420
    %s435 = sphi 0, %s421
    %s439 = sphi 0, %s439
    %s441 = sphi 0, %s439
    %s442 = sphi 0, %s441
    %s456 = sphi 0, %s442
    %s460 = sphi 0, %s460
    %s462 = sphi 0, %s460
    %s463 = sphi 0, %s462
    %s477 = sphi 0, %s463
    %s481 = sphi 0, %s481
    %s483 = sphi 0, %s481
    %s484 = sphi 0, %s483
    %s498 = sphi 0, %s484
    %s502 = sphi 0, %s502
    %s504 = sphi 0, %s502
    %s505 = sphi 0, %s504
    %s519 = sphi 0, %s505
    %s523 = sphi 0, %s523
    %s525 = sphi 0, %s523
    %s526 = sphi 0, %s525
    %s540 = sphi 0, %s526
    %s544 = sphi 0, %s544
    %s546 = sphi 0, %s544
    %s547 = sphi 0, %s546
    %s561 = sphi 0, %s547
    %s565 = sphi 0, %s565
    %s567 = sphi 0, %s565
    %s568 = sphi 0, %s567
    %s582 = sphi 0, %s568
    %s586 = sphi 0, %s586
    %s588 = sphi 0, %s586
    %s589 = sphi 0, %s588
    %s603 = sphi 0, %s589
    %s607 = sphi 0, %s607
    %s609 = sphi 0, %s607
    %s610 = sphi 0, %s609
    %s624 = sphi 0, %s610
    %s630 = sphi 0, %s632
    %s633 = sphi 0, %s630
    %s634 = sphi 0, %s633
    %s650 = sphi 0, %s634
  $region4: #{resnet_block_forward.1} parent=0 // loop_header_branch
    %36 = sbr.rel (%p34) target = $region8
  $region5: #{resnet_block_forward.1} parent=0 // loop_body
    %s38 = ssub.s32 %s33, 1
    %s39 = ssub.s32 %s33, 2
    %s40 = sadd.s32 %s33, 1
    %s41 = ssub.s32 %s33, %s40
    %p42 = scmp.eq.s32.totalorder %s41, 0
    %s44 = sadd.s32 %s43, 1
    %s45 = scalar_select %p42, %s43, %s44
    %p48 = pneg %p42
    %p49 = scmp.eq.s32.totalorder %s33, 1
    %p50 = por %p48, %p49
    %p51 = scmp.ne.s32.totalorder %s43, %s46
    %p52 = scmp.eq.s32.totalorder %s33, 0
    %p53 = por %p51, %p52
    %p54 = scmp.ne.s32.totalorder %s43, %s46
    %p55 = scmp.eq.s32.totalorder %s38, 1
    %p56 = por %p54, %p55
    %p57 = scmp.ne.s32.totalorder %s46, %s47
    %p58 = scmp.eq.s32.totalorder %s38, 0
    %p59 = por %p57, %p58
    %p60 = scmp.ne.s32.totalorder %s46, %s47
    %p61 = scmp.eq.s32.totalorder %s39, 1
    %p62 = por %p60, %p61
    %p64 = scmp.ne.s32.totalorder %s47, %s63
    %p65 = scmp.eq.s32.totalorder %s39, 0
    %p66 = por %p64, %p65
    %s67 = ssub.s32 %s33, %s40
    %p68 = scmp.eq.s32.totalorder %s67, 0
    %s70 = sadd.s32 %s69, 1
    %s71 = scalar_select %p68, %s69, %s70
    %p74 = pneg %p68
    %p75 = scmp.eq.s32.totalorder %s33, 1
    %p76 = por %p74, %p75
    %p77 = scmp.ne.s32.totalorder %s69, %s72
    %p78 = scmp.eq.s32.totalorder %s33, 0
    %p79 = por %p77, %p78
    %p80 = scmp.ne.s32.totalorder %s69, %s72
    %p81 = scmp.eq.s32.totalorder %s38, 1
    %p82 = por %p80, %p81
    %p83 = scmp.ne.s32.totalorder %s72, %s73
    %p84 = scmp.eq.s32.totalorder %s38, 0
    %p85 = por %p83, %p84
    %p86 = scmp.ne.s32.totalorder %s72, %s73
    %p87 = scmp.eq.s32.totalorder %s39, 1
    %p88 = por %p86, %p87
    %p90 = scmp.ne.s32.totalorder %s73, %s89
    %p91 = scmp.eq.s32.totalorder %s39, 0
    %p92 = por %p90, %p91
    %s93 = ssub.s32 %s33, %s40
    %p94 = scmp.eq.s32.totalorder %s93, 0
    %s96 = sadd.s32 %s95, 1
    %s97 = scalar_select %p94, %s95, %s96
    %p100 = pneg %p94
    %p101 = scmp.eq.s32.totalorder %s33, 1
    %p102 = por %p100, %p101
    %p103 = scmp.ne.s32.totalorder %s95, %s98
    %p104 = scmp.eq.s32.totalorder %s33, 0
    %p105 = por %p103, %p104
    %p106 = scmp.ne.s32.totalorder %s95, %s98
    %p107 = scmp.eq.s32.totalorder %s38, 1
    %p108 = por %p106, %p107
    %p109 = scmp.ne.s32.totalorder %s98, %s99
    %p110 = scmp.eq.s32.totalorder %s38, 0
    %p111 = por %p109, %p110
    %p112 = scmp.ne.s32.totalorder %s98, %s99
    %p113 = scmp.eq.s32.totalorder %s39, 1
    %p114 = por %p112, %p113
    %p116 = scmp.ne.s32.totalorder %s99, %s115
    %p117 = scmp.eq.s32.totalorder %s39, 0
    %p118 = por %p116, %p117
    %s119 = ssub.s32 %s33, %s40
    %p120 = scmp.eq.s32.totalorder %s119, 0
    %s122 = sadd.s32 %s121, 1
    %s123 = scalar_select %p120, %s121, %s122
    %p126 = pneg %p120
    %p127 = scmp.eq.s32.totalorder %s33, 1
    %p128 = por %p126, %p127
    %p129 = scmp.ne.s32.totalorder %s121, %s124
    %p130 = scmp.eq.s32.totalorder %s33, 0
    %p131 = por %p129, %p130
    %p132 = scmp.ne.s32.totalorder %s121, %s124
    %p133 = scmp.eq.s32.totalorder %s38, 1
    %p134 = por %p132, %p133
    %p135 = scmp.ne.s32.totalorder %s124, %s125
    %p136 = scmp.eq.s32.totalorder %s38, 0
    %p137 = por %p135, %p136
    %p138 = scmp.ne.s32.totalorder %s124, %s125
    %p139 = scmp.eq.s32.totalorder %s39, 1
    %p140 = por %p138, %p139
    %p142 = scmp.ne.s32.totalorder %s125, %s141
    %p143 = scmp.eq.s32.totalorder %s39, 0
    %p144 = por %p142, %p143
    %s146 = sadd.s32 %s145, 1
    %p149 = scmp.eq.s32.totalorder %s33, 1
    %p150 = scmp.ne.s32.totalorder %s145, %s147
    %p151 = scmp.eq.s32.totalorder %s33, 0
    %p152 = por %p150, %p151
    %p153 = scmp.ne.s32.totalorder %s145, %s147
    %p154 = scmp.eq.s32.totalorder %s38, 1
    %p155 = por %p153, %p154
    %p156 = scmp.ne.s32.totalorder %s147, %s148
    %p157 = scmp.eq.s32.totalorder %s38, 0
    %p158 = por %p156, %p157
    %p159 = scmp.ne.s32.totalorder %s147, %s148
    %p160 = scmp.eq.s32.totalorder %s39, 1
    %p161 = por %p159, %p160
    %p163 = scmp.ne.s32.totalorder %s148, %s162
    %p164 = scmp.eq.s32.totalorder %s39, 0
    %p165 = por %p163, %p164
    %s167 = sadd.s32 %s166, 1
    %p170 = scmp.eq.s32.totalorder %s33, 1
    %p171 = scmp.ne.s32.totalorder %s166, %s168
    %p172 = scmp.eq.s32.totalorder %s33, 0
    %p173 = por %p171, %p172
    %p174 = scmp.ne.s32.totalorder %s166, %s168
    %p175 = scmp.eq.s32.totalorder %s38, 1
    %p176 = por %p174, %p175
    %p177 = scmp.ne.s32.totalorder %s168, %s169
    %p178 = scmp.eq.s32.totalorder %s38, 0
    %p179 = por %p177, %p178
    %p180 = scmp.ne.s32.totalorder %s168, %s169
    %p181 = scmp.eq.s32.totalorder %s39, 1
    %p182 = por %p180, %p181
    %p184 = scmp.ne.s32.totalorder %s169, %s183
    %p185 = scmp.eq.s32.totalorder %s39, 0
    %p186 = por %p184, %p185
    %s188 = sadd.s32 %s187, 1
    %p191 = scmp.eq.s32.totalorder %s33, 1
    %p192 = scmp.ne.s32.totalorder %s187, %s189
    %p193 = scmp.eq.s32.totalorder %s33, 0
    %p194 = por %p192, %p193
    %p195 = scmp.ne.s32.totalorder %s187, %s189
    %p196 = scmp.eq.s32.totalorder %s38, 1
    %p197 = por %p195, %p196
    %p198 = scmp.ne.s32.totalorder %s189, %s190
    %p199 = scmp.eq.s32.totalorder %s38, 0
    %p200 = por %p198, %p199
    %p201 = scmp.ne.s32.totalorder %s189, %s190
    %p202 = scmp.eq.s32.totalorder %s39, 1
    %p203 = por %p201, %p202
    %p205 = scmp.ne.s32.totalorder %s190, %s204
    %p206 = scmp.eq.s32.totalorder %s39, 0
    %p207 = por %p205, %p206
    %s209 = sadd.s32 %s208, 1
    %p212 = scmp.eq.s32.totalorder %s33, 1
    %p213 = scmp.ne.s32.totalorder %s208, %s210
    %p214 = scmp.eq.s32.totalorder %s33, 0
    %p215 = por %p213, %p214
    %p216 = scmp.ne.s32.totalorder %s208, %s210
    %p217 = scmp.eq.s32.totalorder %s38, 1
    %p218 = por %p216, %p217
    %p219 = scmp.ne.s32.totalorder %s210, %s211
    %p220 = scmp.eq.s32.totalorder %s38, 0
    %p221 = por %p219, %p220
    %p222 = scmp.ne.s32.totalorder %s210, %s211
    %p223 = scmp.eq.s32.totalorder %s39, 1
    %p224 = por %p222, %p223
    %p226 = scmp.ne.s32.totalorder %s211, %s225
    %p227 = scmp.eq.s32.totalorder %s39, 0
    %p228 = por %p226, %p227
    %s230 = sadd.s32 %s229, 1
    %p233 = scmp.eq.s32.totalorder %s33, 1
    %p234 = scmp.ne.s32.totalorder %s229, %s231
    %p235 = scmp.eq.s32.totalorder %s33, 0
    %p236 = por %p234, %p235
    %p237 = scmp.ne.s32.totalorder %s229, %s231
    %p238 = scmp.eq.s32.totalorder %s38, 1
    %p239 = por %p237, %p238
    %p240 = scmp.ne.s32.totalorder %s231, %s232
    %p241 = scmp.eq.s32.totalorder %s38, 0
    %p242 = por %p240, %p241
    %p243 = scmp.ne.s32.totalorder %s231, %s232
    %p244 = scmp.eq.s32.totalorder %s39, 1
    %p245 = por %p243, %p244
    %p247 = scmp.ne.s32.totalorder %s232, %s246
    %p248 = scmp.eq.s32.totalorder %s39, 0
    %p249 = por %p247, %p248
    %s251 = sadd.s32 %s250, 1
    %p254 = scmp.eq.s32.totalorder %s33, 1
    %p255 = scmp.ne.s32.totalorder %s250, %s252
    %p256 = scmp.eq.s32.totalorder %s33, 0
    %p257 = por %p255, %p256
    %p258 = scmp.ne.s32.totalorder %s250, %s252
    %p259 = scmp.eq.s32.totalorder %s38, 1
    %p260 = por %p258, %p259
    %p261 = scmp.ne.s32.totalorder %s252, %s253
    %p262 = scmp.eq.s32.totalorder %s38, 0
    %p263 = por %p261, %p262
    %p264 = scmp.ne.s32.totalorder %s252, %s253
    %p265 = scmp.eq.s32.totalorder %s39, 1
    %p266 = por %p264, %p265
    %p268 = scmp.ne.s32.totalorder %s253, %s267
    %p269 = scmp.eq.s32.totalorder %s39, 0
    %p270 = por %p268, %p269
    %s272 = sadd.s32 %s271, 1
    %p275 = scmp.eq.s32.totalorder %s33, 1
    %p276 = scmp.ne.s32.totalorder %s271, %s273
    %p277 = scmp.eq.s32.totalorder %s33, 0
    %p278 = por %p276, %p277
    %p279 = scmp.ne.s32.totalorder %s271, %s273
    %p280 = scmp.eq.s32.totalorder %s38, 1
    %p281 = por %p279, %p280
    %p282 = scmp.ne.s32.totalorder %s273, %s274
    %p283 = scmp.eq.s32.totalorder %s38, 0
    %p284 = por %p282, %p283
    %p285 = scmp.ne.s32.totalorder %s273, %s274
    %p286 = scmp.eq.s32.totalorder %s39, 1
    %p287 = por %p285, %p286
    %p289 = scmp.ne.s32.totalorder %s274, %s288
    %p290 = scmp.eq.s32.totalorder %s39, 0
    %p291 = por %p289, %p290
    %s293 = sadd.s32 %s292, 1
    %p296 = scmp.eq.s32.totalorder %s33, 1
    %p297 = scmp.ne.s32.totalorder %s292, %s294
    %p298 = scmp.eq.s32.totalorder %s33, 0
    %p299 = por %p297, %p298
    %p300 = scmp.ne.s32.totalorder %s292, %s294
    %p301 = scmp.eq.s32.totalorder %s38, 1
    %p302 = por %p300, %p301
    %p303 = scmp.ne.s32.totalorder %s294, %s295
    %p304 = scmp.eq.s32.totalorder %s38, 0
    %p305 = por %p303, %p304
    %p306 = scmp.ne.s32.totalorder %s294, %s295
    %p307 = scmp.eq.s32.totalorder %s39, 1
    %p308 = por %p306, %p307
    %p310 = scmp.ne.s32.totalorder %s295, %s309
    %p311 = scmp.eq.s32.totalorder %s39, 0
    %p312 = por %p310, %p311
    %s314 = sadd.s32 %s313, 1
    %p317 = scmp.eq.s32.totalorder %s33, 1
    %p318 = scmp.ne.s32.totalorder %s313, %s315
    %p319 = scmp.eq.s32.totalorder %s33, 0
    %p320 = por %p318, %p319
    %p321 = scmp.ne.s32.totalorder %s313, %s315
    %p322 = scmp.eq.s32.totalorder %s38, 1
    %p323 = por %p321, %p322
    %p324 = scmp.ne.s32.totalorder %s315, %s316
    %p325 = scmp.eq.s32.totalorder %s38, 0
    %p326 = por %p324, %p325
    %p327 = scmp.ne.s32.totalorder %s315, %s316
    %p328 = scmp.eq.s32.totalorder %s39, 1
    %p329 = por %p327, %p328
    %p331 = scmp.ne.s32.totalorder %s316, %s330
    %p332 = scmp.eq.s32.totalorder %s39, 0
    %p333 = por %p331, %p332
    %s335 = sadd.s32 %s334, 1
    %p338 = scmp.eq.s32.totalorder %s33, 1
    %p339 = scmp.ne.s32.totalorder %s334, %s336
    %p340 = scmp.eq.s32.totalorder %s33, 0
    %p341 = por %p339, %p340
    %p342 = scmp.ne.s32.totalorder %s334, %s336
    %p343 = scmp.eq.s32.totalorder %s38, 1
    %p344 = por %p342, %p343
    %p345 = scmp.ne.s32.totalorder %s336, %s337
    %p346 = scmp.eq.s32.totalorder %s38, 0
    %p347 = por %p345, %p346
    %p348 = scmp.ne.s32.totalorder %s336, %s337
    %p349 = scmp.eq.s32.totalorder %s39, 1
    %p350 = por %p348, %p349
    %p352 = scmp.ne.s32.totalorder %s337, %s351
    %p353 = scmp.eq.s32.totalorder %s39, 0
    %p354 = por %p352, %p353
    %s356 = sadd.s32 %s355, 1
    %p359 = scmp.eq.s32.totalorder %s33, 1
    %p360 = scmp.ne.s32.totalorder %s355, %s357
    %p361 = scmp.eq.s32.totalorder %s33, 0
    %p362 = por %p360, %p361
    %p363 = scmp.ne.s32.totalorder %s355, %s357
    %p364 = scmp.eq.s32.totalorder %s38, 1
    %p365 = por %p363, %p364
    %p366 = scmp.ne.s32.totalorder %s357, %s358
    %p367 = scmp.eq.s32.totalorder %s38, 0
    %p368 = por %p366, %p367
    %p369 = scmp.ne.s32.totalorder %s357, %s358
    %p370 = scmp.eq.s32.totalorder %s39, 1
    %p371 = por %p369, %p370
    %p373 = scmp.ne.s32.totalorder %s358, %s372
    %p374 = scmp.eq.s32.totalorder %s39, 0
    %p375 = por %p373, %p374
    %s377 = sadd.s32 %s376, 1
    %p380 = scmp.eq.s32.totalorder %s33, 1
    %p381 = scmp.ne.s32.totalorder %s376, %s378
    %p382 = scmp.eq.s32.totalorder %s33, 0
    %p383 = por %p381, %p382
    %p384 = scmp.ne.s32.totalorder %s376, %s378
    %p385 = scmp.eq.s32.totalorder %s38, 1
    %p386 = por %p384, %p385
    %p387 = scmp.ne.s32.totalorder %s378, %s379
    %p388 = scmp.eq.s32.totalorder %s38, 0
    %p389 = por %p387, %p388
    %p390 = scmp.ne.s32.totalorder %s378, %s379
    %p391 = scmp.eq.s32.totalorder %s39, 1
    %p392 = por %p390, %p391
    %p394 = scmp.ne.s32.totalorder %s379, %s393
    %p395 = scmp.eq.s32.totalorder %s39, 0
    %p396 = por %p394, %p395
    %s398 = sadd.s32 %s397, 1
    %p401 = scmp.eq.s32.totalorder %s33, 1
    %p402 = scmp.ne.s32.totalorder %s397, %s399
    %p403 = scmp.eq.s32.totalorder %s33, 0
    %p404 = por %p402, %p403
    %p405 = scmp.ne.s32.totalorder %s397, %s399
    %p406 = scmp.eq.s32.totalorder %s38, 1
    %p407 = por %p405, %p406
    %p408 = scmp.ne.s32.totalorder %s399, %s400
    %p409 = scmp.eq.s32.totalorder %s38, 0
    %p410 = por %p408, %p409
    %p411 = scmp.ne.s32.totalorder %s399, %s400
    %p412 = scmp.eq.s32.totalorder %s39, 1
    %p413 = por %p411, %p412
    %p415 = scmp.ne.s32.totalorder %s400, %s414
    %p416 = scmp.eq.s32.totalorder %s39, 0
    %p417 = por %p415, %p416
    %s419 = sadd.s32 %s418, 1
    %p422 = scmp.eq.s32.totalorder %s33, 1
    %p423 = scmp.ne.s32.totalorder %s418, %s420
    %p424 = scmp.eq.s32.totalorder %s33, 0
    %p425 = por %p423, %p424
    %p426 = scmp.ne.s32.totalorder %s418, %s420
    %p427 = scmp.eq.s32.totalorder %s38, 1
    %p428 = por %p426, %p427
    %p429 = scmp.ne.s32.totalorder %s420, %s421
    %p430 = scmp.eq.s32.totalorder %s38, 0
    %p431 = por %p429, %p430
    %p432 = scmp.ne.s32.totalorder %s420, %s421
    %p433 = scmp.eq.s32.totalorder %s39, 1
    %p434 = por %p432, %p433
    %p436 = scmp.ne.s32.totalorder %s421, %s435
    %p437 = scmp.eq.s32.totalorder %s39, 0
    %p438 = por %p436, %p437
    %s440 = sadd.s32 %s439, 1
    %p443 = scmp.eq.s32.totalorder %s33, 1
    %p444 = scmp.ne.s32.totalorder %s439, %s441
    %p445 = scmp.eq.s32.totalorder %s33, 0
    %p446 = por %p444, %p445
    %p447 = scmp.ne.s32.totalorder %s439, %s441
    %p448 = scmp.eq.s32.totalorder %s38, 1
    %p449 = por %p447, %p448
    %p450 = scmp.ne.s32.totalorder %s441, %s442
    %p451 = scmp.eq.s32.totalorder %s38, 0
    %p452 = por %p450, %p451
    %p453 = scmp.ne.s32.totalorder %s441, %s442
    %p454 = scmp.eq.s32.totalorder %s39, 1
    %p455 = por %p453, %p454
    %p457 = scmp.ne.s32.totalorder %s442, %s456
    %p458 = scmp.eq.s32.totalorder %s39, 0
    %p459 = por %p457, %p458
    %s461 = sadd.s32 %s460, 1
    %p464 = scmp.eq.s32.totalorder %s33, 1
    %p465 = scmp.ne.s32.totalorder %s460, %s462
    %p466 = scmp.eq.s32.totalorder %s33, 0
    %p467 = por %p465, %p466
    %p468 = scmp.ne.s32.totalorder %s460, %s462
    %p469 = scmp.eq.s32.totalorder %s38, 1
    %p470 = por %p468, %p469
    %p471 = scmp.ne.s32.totalorder %s462, %s463
    %p472 = scmp.eq.s32.totalorder %s38, 0
    %p473 = por %p471, %p472
    %p474 = scmp.ne.s32.totalorder %s462, %s463
    %p475 = scmp.eq.s32.totalorder %s39, 1
    %p476 = por %p474, %p475
    %p478 = scmp.ne.s32.totalorder %s463, %s477
    %p479 = scmp.eq.s32.totalorder %s39, 0
    %p480 = por %p478, %p479
    %s482 = sadd.s32 %s481, 1
    %p485 = scmp.eq.s32.totalorder %s33, 1
    %p486 = scmp.ne.s32.totalorder %s481, %s483
    %p487 = scmp.eq.s32.totalorder %s33, 0
    %p488 = por %p486, %p487
    %p489 = scmp.ne.s32.totalorder %s481, %s483
    %p490 = scmp.eq.s32.totalorder %s38, 1
    %p491 = por %p489, %p490
    %p492 = scmp.ne.s32.totalorder %s483, %s484
    %p493 = scmp.eq.s32.totalorder %s38, 0
    %p494 = por %p492, %p493
    %p495 = scmp.ne.s32.totalorder %s483, %s484
    %p496 = scmp.eq.s32.totalorder %s39, 1
    %p497 = por %p495, %p496
    %p499 = scmp.ne.s32.totalorder %s484, %s498
    %p500 = scmp.eq.s32.totalorder %s39, 0
    %p501 = por %p499, %p500
    %s503 = sadd.s32 %s502, 1
    %p506 = scmp.eq.s32.totalorder %s33, 1
    %p507 = scmp.ne.s32.totalorder %s502, %s504
    %p508 = scmp.eq.s32.totalorder %s33, 0
    %p509 = por %p507, %p508
    %p510 = scmp.ne.s32.totalorder %s502, %s504
    %p511 = scmp.eq.s32.totalorder %s38, 1
    %p512 = por %p510, %p511
    %p513 = scmp.ne.s32.totalorder %s504, %s505
    %p514 = scmp.eq.s32.totalorder %s38, 0
    %p515 = por %p513, %p514
    %p516 = scmp.ne.s32.totalorder %s504, %s505
    %p517 = scmp.eq.s32.totalorder %s39, 1
    %p518 = por %p516, %p517
    %p520 = scmp.ne.s32.totalorder %s505, %s519
    %p521 = scmp.eq.s32.totalorder %s39, 0
    %p522 = por %p520, %p521
    %s524 = sadd.s32 %s523, 1
    %p527 = scmp.eq.s32.totalorder %s33, 1
    %p528 = scmp.ne.s32.totalorder %s523, %s525
    %p529 = scmp.eq.s32.totalorder %s33, 0
    %p530 = por %p528, %p529
    %p531 = scmp.ne.s32.totalorder %s523, %s525
    %p532 = scmp.eq.s32.totalorder %s38, 1
    %p533 = por %p531, %p532
    %p534 = scmp.ne.s32.totalorder %s525, %s526
    %p535 = scmp.eq.s32.totalorder %s38, 0
    %p536 = por %p534, %p535
    %p537 = scmp.ne.s32.totalorder %s525, %s526
    %p538 = scmp.eq.s32.totalorder %s39, 1
    %p539 = por %p537, %p538
    %p541 = scmp.ne.s32.totalorder %s526, %s540
    %p542 = scmp.eq.s32.totalorder %s39, 0
    %p543 = por %p541, %p542
    %s545 = sadd.s32 %s544, 1
    %p548 = scmp.eq.s32.totalorder %s33, 1
    %p549 = scmp.ne.s32.totalorder %s544, %s546
    %p550 = scmp.eq.s32.totalorder %s33, 0
    %p551 = por %p549, %p550
    %p552 = scmp.ne.s32.totalorder %s544, %s546
    %p553 = scmp.eq.s32.totalorder %s38, 1
    %p554 = por %p552, %p553
    %p555 = scmp.ne.s32.totalorder %s546, %s547
    %p556 = scmp.eq.s32.totalorder %s38, 0
    %p557 = por %p555, %p556
    %p558 = scmp.ne.s32.totalorder %s546, %s547
    %p559 = scmp.eq.s32.totalorder %s39, 1
    %p560 = por %p558, %p559
    %p562 = scmp.ne.s32.totalorder %s547, %s561
    %p563 = scmp.eq.s32.totalorder %s39, 0
    %p564 = por %p562, %p563
    %s566 = sadd.s32 %s565, 1
    %p569 = scmp.eq.s32.totalorder %s33, 1
    %p570 = scmp.ne.s32.totalorder %s565, %s567
    %p571 = scmp.eq.s32.totalorder %s33, 0
    %p572 = por %p570, %p571
    %p573 = scmp.ne.s32.totalorder %s565, %s567
    %p574 = scmp.eq.s32.totalorder %s38, 1
    %p575 = por %p573, %p574
    %p576 = scmp.ne.s32.totalorder %s567, %s568
    %p577 = scmp.eq.s32.totalorder %s38, 0
    %p578 = por %p576, %p577
    %p579 = scmp.ne.s32.totalorder %s567, %s568
    %p580 = scmp.eq.s32.totalorder %s39, 1
    %p581 = por %p579, %p580
    %p583 = scmp.ne.s32.totalorder %s568, %s582
    %p584 = scmp.eq.s32.totalorder %s39, 0
    %p585 = por %p583, %p584
    %s587 = sadd.s32 %s586, 1
    %p590 = scmp.eq.s32.totalorder %s33, 1
    %p591 = scmp.ne.s32.totalorder %s586, %s588
    %p592 = scmp.eq.s32.totalorder %s33, 0
    %p593 = por %p591, %p592
    %p594 = scmp.ne.s32.totalorder %s586, %s588
    %p595 = scmp.eq.s32.totalorder %s38, 1
    %p596 = por %p594, %p595
    %p597 = scmp.ne.s32.totalorder %s588, %s589
    %p598 = scmp.eq.s32.totalorder %s38, 0
    %p599 = por %p597, %p598
    %p600 = scmp.ne.s32.totalorder %s588, %s589
    %p601 = scmp.eq.s32.totalorder %s39, 1
    %p602 = por %p600, %p601
    %p604 = scmp.ne.s32.totalorder %s589, %s603
    %p605 = scmp.eq.s32.totalorder %s39, 0
    %p606 = por %p604, %p605
    %s608 = sadd.s32 %s607, 1
    %p611 = scmp.eq.s32.totalorder %s33, 1
    %p612 = scmp.ne.s32.totalorder %s607, %s609
    %p613 = scmp.eq.s32.totalorder %s33, 0
    %p614 = por %p612, %p613
    %p615 = scmp.ne.s32.totalorder %s607, %s609
    %p616 = scmp.eq.s32.totalorder %s38, 1
    %p617 = por %p615, %p616
    %p618 = scmp.ne.s32.totalorder %s609, %s610
    %p619 = scmp.eq.s32.totalorder %s38, 0
    %p620 = por %p618, %p619
    %p621 = scmp.ne.s32.totalorder %s609, %s610
    %p622 = scmp.eq.s32.totalorder %s39, 1
    %p623 = por %p621, %p622
    %p625 = scmp.ne.s32.totalorder %s610, %s624
    %p626 = scmp.eq.s32.totalorder %s39, 0
    %p627 = por %p625, %p626
    %s628 = ssub.s32 %s33, %s40
    %p629 = scmp.eq.s32.totalorder %s628, 0
    %s631 = sadd.s32 %s630, 1
    %s632 = scalar_select %p629, %s630, %s631
    %p635 = pneg %p629
    %p636 = scmp.eq.s32.totalorder %s33, 1
    %p637 = por %p635, %p636
    %p638 = scmp.ne.s32.totalorder %s630, %s633
    %p639 = scmp.eq.s32.totalorder %s33, 0
    %p640 = por %p638, %p639
    %p641 = scmp.ne.s32.totalorder %s630, %s633
    %p642 = scmp.eq.s32.totalorder %s38, 1
    %p643 = por %p641, %p642
    %p644 = scmp.ne.s32.totalorder %s633, %s634
    %p645 = scmp.eq.s32.totalorder %s38, 0
    %p646 = por %p644, %p645
    %p647 = scmp.ne.s32.totalorder %s633, %s634
    %p648 = scmp.eq.s32.totalorder %s39, 1
    %p649 = por %p647, %p648
    %p651 = scmp.ne.s32.totalorder %s634, %s650
    %p652 = scmp.eq.s32.totalorder %s39, 0
    %p653 = por %p651, %p652
    %p654 = scmp.le.s32.totalorder 1, %s33
    %p655 = scmp.lt.s32.totalorder %s33, 3
    %p656 = pnand %p654, %p655
    %p657 = pneg %p656
    // Predicated region
    $region9: #{resnet_block_forward.1} parent=5 // pred_check
      _
    $region10: #{resnet_block_forward.1} parent=5 // pred_check_branch
      %659 = sbr.rel (%p656) target = $region12
    $region11: #{resnet_block_forward.1} parent=5 // pred_region
      %s660 = ssub.s32 %s33, 1
      // Predicated region
      $region13: #{resnet_block_forward.1} parent=11 // pred_check
        %p661 = pneg %p158
      $region14: #{resnet_block_forward.1} parent=11 // pred_check_branch
        %663 = sbr.rel (%p661) target = $region16
      $region15: #{resnet_block_forward.1} parent=11 // pred_region
        _
      $region16: #{resnet_block_forward.1} parent=11 // pred_fallthru
        _
      // Predicated region
      $region17: #{resnet_block_forward.1} parent=11 // pred_check
        %p664 = pneg %p179
      $region18: #{resnet_block_forward.1} parent=11 // pred_check_branch
        %666 = sbr.rel (%p664) target = $region20
      $region19: #{resnet_block_forward.1} parent=11 // pred_region
        _
      $region20: #{resnet_block_forward.1} parent=11 // pred_fallthru
        _
      // Predicated region
      $region21: #{resnet_block_forward.1} parent=11 // pred_check
        %p667 = pneg %p200
      $region22: #{resnet_block_forward.1} parent=11 // pred_check_branch
        %669 = sbr.rel (%p667) target = $region24
      $region23: #{resnet_block_forward.1} parent=11 // pred_region
        _
      $region24: #{resnet_block_forward.1} parent=11 // pred_fallthru
        _
      // Predicated region
      $region25: #{resnet_block_forward.1} parent=11 // pred_check
        %p670 = pneg %p221
      $region26: #{resnet_block_forward.1} parent=11 // pred_check_branch
        %672 = sbr.rel (%p670) target = $region28
      $region27: #{resnet_block_forward.1} parent=11 // pred_region
        _
      $region28: #{resnet_block_forward.1} parent=11 // pred_fallthru
        _
      // Predicated region
      $region29: #{resnet_block_forward.1} parent=11 // pred_check
        %p673 = pneg %p242
      $region30: #{resnet_block_forward.1} parent=11 // pred_check_branch
        %675 = sbr.rel (%p673) target = $region32
      $region31: #{resnet_block_forward.1} parent=11 // pred_region
        _
      $region32: #{resnet_block_forward.1} parent=11 // pred_fallthru
        _
      // Predicated region
      $region33: #{resnet_block_forward.1} parent=11 // pred_check
        %p676 = pneg %p263
      $region34: #{resnet_block_forward.1} parent=11 // pred_check_branch
        %678 = sbr.rel (%p676) target = $region36
      $region35: #{resnet_block_forward.1} parent=11 // pred_region
        _
      $region36: #{resnet_block_forward.1} parent=11 // pred_fallthru
        _
      // Predicated region
      $region37: #{resnet_block_forward.1} parent=11 // pred_check
        %p679 = pneg %p284
      $region38: #{resnet_block_forward.1} parent=11 // pred_check_branch
        %681 = sbr.rel (%p679) target = $region40
      $region39: #{resnet_block_forward.1} parent=11 // pred_region
        _
      $region40: #{resnet_block_forward.1} parent=11 // pred_fallthru
        _
      // Predicated region
      $region41: #{resnet_block_forward.1} parent=11 // pred_check
        %p682 = pneg %p305
      $region42: #{resnet_block_forward.1} parent=11 // pred_check_branch
        %684 = sbr.rel (%p682) target = $region44
      $region43: #{resnet_block_forward.1} parent=11 // pred_region
        _
      $region44: #{resnet_block_forward.1} parent=11 // pred_fallthru
        _
      // Predicated region
      $region45: #{resnet_block_forward.1} parent=11 // pred_check
        %p685 = pneg %p326
      $region46: #{resnet_block_forward.1} parent=11 // pred_check_branch
        %687 = sbr.rel (%p685) target = $region48
      $region47: #{resnet_block_forward.1} parent=11 // pred_region
        _
      $region48: #{resnet_block_forward.1} parent=11 // pred_fallthru
        _
      // Predicated region
      $region49: #{resnet_block_forward.1} parent=11 // pred_check
        %p688 = pneg %p347
      $region50: #{resnet_block_forward.1} parent=11 // pred_check_branch
        %690 = sbr.rel (%p688) target = $region52
      $region51: #{resnet_block_forward.1} parent=11 // pred_region
        _
      $region52: #{resnet_block_forward.1} parent=11 // pred_fallthru
        _
      // Predicated region
      $region53: #{resnet_block_forward.1} parent=11 // pred_check
        %p691 = pneg %p368
      $region54: #{resnet_block_forward.1} parent=11 // pred_check_branch
        %693 = sbr.rel (%p691) target = $region56
      $region55: #{resnet_block_forward.1} parent=11 // pred_region
        _
      $region56: #{resnet_block_forward.1} parent=11 // pred_fallthru
        _
      // Predicated region
      $region57: #{resnet_block_forward.1} parent=11 // pred_check
        %p694 = pneg %p389
      $region58: #{resnet_block_forward.1} parent=11 // pred_check_branch
        %696 = sbr.rel (%p694) target = $region60
      $region59: #{resnet_block_forward.1} parent=11 // pred_region
        _
      $region60: #{resnet_block_forward.1} parent=11 // pred_fallthru
        _
      // Predicated region
      $region61: #{resnet_block_forward.1} parent=11 // pred_check
        %p697 = pneg %p410
      $region62: #{resnet_block_forward.1} parent=11 // pred_check_branch
        %699 = sbr.rel (%p697) target = $region64
      $region63: #{resnet_block_forward.1} parent=11 // pred_region
        _
      $region64: #{resnet_block_forward.1} parent=11 // pred_fallthru
        _
      // Predicated region
      $region65: #{resnet_block_forward.1} parent=11 // pred_check
        %p700 = pneg %p431
      $region66: #{resnet_block_forward.1} parent=11 // pred_check_branch
        %702 = sbr.rel (%p700) target = $region68
      $region67: #{resnet_block_forward.1} parent=11 // pred_region
        _
      $region68: #{resnet_block_forward.1} parent=11 // pred_fallthru
        _
      // Predicated region
      $region69: #{resnet_block_forward.1} parent=11 // pred_check
        %p703 = pneg %p452
      $region70: #{resnet_block_forward.1} parent=11 // pred_check_branch
        %705 = sbr.rel (%p703) target = $region72
      $region71: #{resnet_block_forward.1} parent=11 // pred_region
        _
      $region72: #{resnet_block_forward.1} parent=11 // pred_fallthru
        _
      // Predicated region
      $region73: #{resnet_block_forward.1} parent=11 // pred_check
        %p706 = pneg %p473
      $region74: #{resnet_block_forward.1} parent=11 // pred_check_branch
        %708 = sbr.rel (%p706) target = $region76
      $region75: #{resnet_block_forward.1} parent=11 // pred_region
        _
      $region76: #{resnet_block_forward.1} parent=11 // pred_fallthru
        _
      // Predicated region
      $region77: #{resnet_block_forward.1} parent=11 // pred_check
        %p709 = pneg %p494
      $region78: #{resnet_block_forward.1} parent=11 // pred_check_branch
        %711 = sbr.rel (%p709) target = $region80
      $region79: #{resnet_block_forward.1} parent=11 // pred_region
        _
      $region80: #{resnet_block_forward.1} parent=11 // pred_fallthru
        _
      // Predicated region
      $region81: #{resnet_block_forward.1} parent=11 // pred_check
        %p712 = pneg %p515
      $region82: #{resnet_block_forward.1} parent=11 // pred_check_branch
        %714 = sbr.rel (%p712) target = $region84
      $region83: #{resnet_block_forward.1} parent=11 // pred_region
        _
      $region84: #{resnet_block_forward.1} parent=11 // pred_fallthru
        _
      // Predicated region
      $region85: #{resnet_block_forward.1} parent=11 // pred_check
        %p715 = pneg %p536
      $region86: #{resnet_block_forward.1} parent=11 // pred_check_branch
        %717 = sbr.rel (%p715) target = $region88
      $region87: #{resnet_block_forward.1} parent=11 // pred_region
        _
      $region88: #{resnet_block_forward.1} parent=11 // pred_fallthru
        _
      // Predicated region
      $region89: #{resnet_block_forward.1} parent=11 // pred_check
        %p718 = pneg %p557
      $region90: #{resnet_block_forward.1} parent=11 // pred_check_branch
        %720 = sbr.rel (%p718) target = $region92
      $region91: #{resnet_block_forward.1} parent=11 // pred_region
        _
      $region92: #{resnet_block_forward.1} parent=11 // pred_fallthru
        _
      // Predicated region
      $region93: #{resnet_block_forward.1} parent=11 // pred_check
        %p721 = pneg %p578
      $region94: #{resnet_block_forward.1} parent=11 // pred_check_branch
        %723 = sbr.rel (%p721) target = $region96
      $region95: #{resnet_block_forward.1} parent=11 // pred_region
        _
      $region96: #{resnet_block_forward.1} parent=11 // pred_fallthru
        _
      // Predicated region
      $region97: #{resnet_block_forward.1} parent=11 // pred_check
        %p724 = pneg %p599
      $region98: #{resnet_block_forward.1} parent=11 // pred_check_branch
        %726 = sbr.rel (%p724) target = $region100
      $region99: #{resnet_block_forward.1} parent=11 // pred_region
        _
      $region100: #{resnet_block_forward.1} parent=11 // pred_fallthru
        _
      // Predicated region
      $region101: #{resnet_block_forward.1} parent=11 // pred_check
        %p727 = pneg %p620
      $region102: #{resnet_block_forward.1} parent=11 // pred_check_branch
        %729 = sbr.rel (%p727) target = $region104
      $region103: #{resnet_block_forward.1} parent=11 // pred_region
        _
      $region104: #{resnet_block_forward.1} parent=11 // pred_fallthru
        _
    $region12: #{resnet_block_forward.1} parent=5 // pred_fallthru
      _
    %p730 = scmp.lt.s32.totalorder %s33, 2
    // Predicated region
    $region105: #{resnet_block_forward.1} parent=5 // pred_check
      %p731 = pneg %p730
    $region106: #{resnet_block_forward.1} parent=5 // pred_check_branch
      %733 = sbr.rel (%p731) target = $region108
    $region107: #{resnet_block_forward.1} parent=5 // pred_region
      // Predicated region
      $region109: #{resnet_block_forward.1} parent=107 // pred_check
        %p734 = pneg %p53
      $region110: #{resnet_block_forward.1} parent=107 // pred_check_branch
        %736 = sbr.rel (%p734) target = $region112
      $region111: #{resnet_block_forward.1} parent=107 // pred_region
        %p737 = scmp.lt.s32.totalorder %s33, 1
        %s738 = scalar_select %p737, %s33, 1
        %s739 = smul.addr %s738, 2
        %s740 = smul.addr %s739, 8
        %s741 = scalar_lea.vmem %s0, %s740
      $region112: #{resnet_block_forward.1} parent=107 // pred_fallthru
        _
      // Predicated region
      $region113: #{resnet_block_forward.1} parent=107 // pred_check
        %p742 = pneg %p79
      $region114: #{resnet_block_forward.1} parent=107 // pred_check_branch
        %744 = sbr.rel (%p742) target = $region116
      $region115: #{resnet_block_forward.1} parent=107 // pred_region
        %p745 = scmp.lt.s32.totalorder %s33, 1
        %s746 = scalar_select %p745, %s33, 1
        %s747 = smul.addr %s746, 2
        %s748 = smul.addr %s747, 8
        %s749 = scalar_lea.vmem %s1, %s748
      $region116: #{resnet_block_forward.1} parent=107 // pred_fallthru
        _
      // Predicated region
      $region117: #{resnet_block_forward.1} parent=107 // pred_check
        %p750 = pneg %p105
      $region118: #{resnet_block_forward.1} parent=107 // pred_check_branch
        %752 = sbr.rel (%p750) target = $region120
      $region119: #{resnet_block_forward.1} parent=107 // pred_region
        %p753 = scmp.lt.s32.totalorder %s33, 1
        %s754 = scalar_select %p753, %s33, 1
        %s755 = smul.addr %s754, 8
        %s756 = scalar_lea.vmem %s2, %s755
      $region120: #{resnet_block_forward.1} parent=107 // pred_fallthru
        _
      // Predicated region
      $region121: #{resnet_block_forward.1} parent=107 // pred_check
        %p757 = pneg %p131
      $region122: #{resnet_block_forward.1} parent=107 // pred_check_branch
        %759 = sbr.rel (%p757) target = $region124
      $region123: #{resnet_block_forward.1} parent=107 // pred_region
        %p760 = scmp.lt.s32.totalorder %s33, 1
        %s761 = scalar_select %p760, %s33, 1
        %s762 = smul.addr %s761, 4
        %s763 = smul.addr %s762, 8
        %s764 = scalar_lea.vmem %s3, %s763
      $region124: #{resnet_block_forward.1} parent=107 // pred_fallthru
        _
    $region108: #{resnet_block_forward.1} parent=5 // pred_fallthru
      _
    %p765 = scmp.le.s32.totalorder 1, %s33
    %p766 = scmp.lt.s32.totalorder %s33, 3
    %p767 = pnand %p765, %p766
    %p768 = pneg %p767
    // Predicated region
    $region125: #{resnet_block_forward.1} parent=5 // pred_check
      _
    $region126: #{resnet_block_forward.1} parent=5 // pred_check_branch
      %770 = sbr.rel (%p767) target = $region128
    $region127: #{resnet_block_forward.1} parent=5 // pred_region
      %s771 = ssub.s32 %s33, 1
      %p772 = scmp.lt.s32.totalorder %s38, 1
      %s773 = scalar_select %p772, %s38, 1
      %s774 = smul.addr %s773, 2
      %s775 = smul.addr %s774, 8
      %s776 = scalar_lea.vmem %s0, %s775
      %p777 = pneg %p59
      %p778 = pneg %p56
      %p779 = scmp.lt.s32.totalorder %s38, 1
      %s780 = scalar_select %p779, %s38, 1
      %s781 = smul.addr %s780, 2
      %s782 = smul.addr %s781, 8
      %s783 = scalar_lea.vmem %s1, %s782
      %p784 = pneg %p85
      %p785 = pneg %p82
      %p786 = scmp.lt.s32.totalorder %s38, 1
      %s787 = scalar_select %p786, %s38, 1
      %s788 = smul.addr %s787, 8
      %s789 = scalar_lea.vmem %s2, %s788
      %p790 = pneg %p111
      %p791 = pneg %p108
      %p792 = scmp.lt.s32.totalorder %s38, 1
      %s793 = scalar_select %p792, %s38, 1
      %s794 = smul.addr %s793, 4
      %s795 = smul.addr %s794, 8
      %s796 = scalar_lea.vmem %s3, %s795
      %p797 = pneg %p137
      %p798 = pneg %p134
      %p799 = pneg %p158
      %p800 = pneg %p155
      %p801 = pneg %p179
      %p802 = pneg %p176
      %p803 = pneg %p200
      %p804 = pneg %p197
      %p805 = pneg %p221
      %p806 = pneg %p218
      %p807 = pneg %p242
      %p808 = pneg %p239
      %p809 = pneg %p263
      %p810 = pneg %p260
      %p811 = pneg %p284
      %p812 = pneg %p281
      %p813 = pneg %p305
      %p814 = pneg %p302
      %p815 = pneg %p326
      %p816 = pneg %p323
      %p817 = pneg %p347
      %p818 = pneg %p344
      %p819 = pneg %p368
      %p820 = pneg %p365
      %p821 = pneg %p389
      %p822 = pneg %p386
      %p823 = pneg %p410
      %p824 = pneg %p407
      %p825 = pneg %p431
      %p826 = pneg %p428
      %p827 = pneg %p452
      %p828 = pneg %p449
      %p829 = pneg %p473
      %p830 = pneg %p470
      %p831 = pneg %p494
      %p832 = pneg %p491
      %p833 = pneg %p515
      %p834 = pneg %p512
      %p835 = pneg %p536
      %p836 = pneg %p533
      %p837 = pneg %p557
      %p838 = pneg %p554
      %p839 = pneg %p578
      %p840 = pneg %p575
      %p841 = pneg %p599
      %p842 = pneg %p596
      %p843 = pneg %p620
      %p844 = pneg %p617
      %p845 = pneg %p646
      %p846 = pneg %p643
      %p847 = scmp.lt.s32.totalorder %s38, 1
      %s848 = scalar_select %p847, %s38, 1
      %s849 = smul.addr %s848, 4
      %s850 = smul.addr %s849, 8
      %s851 = scalar_lea.vmem %s27, %s850
      %p852 = scmp.lt.s32.totalorder %s38, 1
      %s853 = scalar_select %p852, %s38, 1
      %s854 = smul.addr %s853, 2
      %s855 = smul.addr %s854, 8
      %s856 = scalar_lea.vmem %s0, %s855
      %p857 = scmp.lt.s32.totalorder %s38, 1
      %s858 = scalar_select %p857, %s38, 1
      %s859 = smul.addr %s858, 2
      %s860 = smul.addr %s859, 8
      %s861 = scalar_lea.vmem %s1, %s860
      %p862 = scmp.lt.s32.totalorder %s38, 1
      %s863 = scalar_select %p862, %s38, 1
      %s864 = smul.addr %s863, 8
      %s865 = scalar_lea.vmem %s2, %s864
      %p866 = scmp.lt.s32.totalorder %s38, 1
      %s867 = scalar_select %p866, %s38, 1
      %s868 = smul.addr %s867, 4
      %s869 = smul.addr %s868, 8
      %s870 = scalar_lea.vmem %s3, %s869
      %p871 = scmp.lt.s32.totalorder %s38, 1
      %s872 = scalar_select %p871, %s38, 1
      %s873 = smul.addr %s872, 4
      %s874 = smul.addr %s873, 8
      %s875 = scalar_lea.vmem %s27, %s874
      %v876 = vld [vmem:[%s856] sm:$0xff]
      %v877 = vld [vmem:[%s856 + $0x8] sm:$0xff]
      %878 = vst [vmem:[#allocation2 + $0x120] sm:$0xff] %v876
      %879 = vst [vmem:[#allocation2 + $0x128] sm:$0xff] %v877
      %v880 = vld [vmem:[%s861] sm:$0xff]
      %v881 = vld [vmem:[%s861 + $0x8] sm:$0xff]
      %v882 = vxor.u32 %v880, 2147483648
      %v883 = vxor.u32 %v881, 2147483648
      %v884 = vmul.f32 %v882, 1.442695
      %v885 = vpow.pop %v884
      %v886 = vmul.f32 %v883, 1.442695
      %v887 = vpow.pop %v886
      %v888 = vadd.f32 %v885, 1.0
      %v889 = vadd.f32 %v887, 1.0
      %v890 = vrcp.pop %v888
      %v891 = vmul.f32 %v888, %v890
      %v892 = vsub.f32 1.0, %v891
      %v893 = vmul.f32 %v890, %v892
      %v894 = vadd.f32 %v890, %v893
      %vm895 = vweird.f32 %v888
      %vm896 = vweird.f32 %v890
      %vm897 = vmor %vm895, %vm896
      %v898 = vsel %vm897, %v890, %v894
      %v899 = vand.u32 2147483647, %v888
      %vm900 = vcmp.eq.f32.partialorder %v899, 8.507059e+37
      %v901 = vand.u32 %v888, 2147483648
      %v902 = vor.u32 1.1754944e-38, %v901
      %v903 = vsel %vm900, %v902, %v898
      %v904 = vmul.f32 1.0, %v903
      %v905 = vrcp.pop %v889
      %v906 = vmul.f32 %v889, %v905
      %v907 = vsub.f32 1.0, %v906
      %v908 = vmul.f32 %v905, %v907
      %v909 = vadd.f32 %v905, %v908
      %vm910 = vweird.f32 %v889
      %vm911 = vweird.f32 %v905
      %vm912 = vmor %vm910, %vm911
      %v913 = vsel %vm912, %v905, %v909
      %v914 = vand.u32 2147483647, %v889
      %vm915 = vcmp.eq.f32.partialorder %v914, 8.507059e+37
      %v916 = vand.u32 %v889, 2147483648
      %v917 = vor.u32 1.1754944e-38, %v916
      %v918 = vsel %vm915, %v917, %v913
      %v919 = vmul.f32 1.0, %v918
      %v920 = vmul.f32 %v880, %v904
      %v921 = vmul.f32 %v881, %v919
      %v922 = vld [vmem:[%s8] sm:$0xff]
      %v923 = vld [vmem:[%s8 + $0x8] sm:$0xff]
      %v924 = vld [vmem:[%s8 + $0x10] sm:$0xff]
      %v925 = vld [vmem:[%s8 + $0x18] sm:$0xff]
      %v926 = vld [vmem:[%s9] sm:$0xff]
      %v927 = vld [vmem:[%s9 + $0x8] sm:$0xff]
      %v928 = vld [vmem:[%s9 + $0x10] sm:$0xff]
      %v929 = vld [vmem:[%s9 + $0x18] sm:$0xff]
      %vm930 = vcmask 130048
      %v932 = vsel %vm930, %v922, 0
      %v935 = vsel %vm930, %v923, 0
      %v938 = vsel %vm930, %v924, 0
      %v941 = vsel %vm930, %v925, 0
      %943 = vmatpush.msra.mxu0 0.0
      %944 = vmatpush.msra.mxu0 0.0
      %945 = vmatpush.msra.mxu0 0.0
      %946 = vmatpush.msra.mxu0 0.0
      %947 = vmatpush.msra.mxu0 0.0
      %948 = vmatpush.msra.mxu0 0.0
      %949 = vmatpush.msra.mxu0 0.0
      %950 = vmatpush.msra.mxu0 0.0
      %951 = vmatpush.msra.mxu0 0.0
      %952 = vmatpush.msra.mxu0 0.0
      %953 = vmatpush.msra.mxu0 0.0
      %954 = vmatpush.msra.mxu0 0.0
      %955 = vmatpush.msra.mxu0 0.0
      %956 = vmatpush.msra.mxu0 0.0
      %957 = vmatpush.msra.mxu0 %v921
      %958 = vmatpush.msra.mxu0 %v920
      %959 = vmatmul.f32.gmra.mxu0 %v932
      %v960 = vpop.f32.mrf.mxu0
      %v961 = vadd.f32 %v926, %v960
      %962 = vmatmul.f32.gmra.mxu0 %v935
      %v963 = vpop.f32.mrf.mxu0
      %v964 = vadd.f32 %v927, %v963
      %965 = vmatmul.f32.gmra.mxu0 %v938
      %v966 = vpop.f32.mrf.mxu0
      %v967 = vadd.f32 %v928, %v966
      %968 = vmatmul.f32.gmra.mxu0 %v941
      %v969 = vpop.f32.mrf.mxu0
      %v970 = vadd.f32 %v929, %v969
      %971 = vdwg.mxu0
      %v972 = vld [vmem:[%s4] sm:$0xff]
      %v973 = vld [vmem:[%s5] sm:$0xff]
      %vm974 = vcmask 1043456
      %v975 = vsel %vm974, %v876, 0.0
      %v976 = vsel %vm974, %v877, 0.0
      %v977 = vadd.f32 %v975, %v976
      %978 = vadd.xlane.f32.xlu0 %v977
      %v979 = vpop.xlane.xlu0 %978
      %v980 = vrot.slane %v979, 4
      %v981 = vadd.f32 %v979, %v980
      %v982 = vrot.slane %v981, 2
      %v983 = vadd.f32 %v981, %v982
      %v984 = vrot.slane %v983, 1
      %v985 = vadd.f32 %v983, %v984
      %s986 = vtos %v985
      %v987 = vstv %s986
      %v988 = vmul.f32 %v987, 0.0009765625
      %v989 = vsub.f32 %v876, %v988
      %v990 = vsub.f32 %v877, %v988
      %v991 = vmul.f32 %v989, %v989
      %v992 = vmul.f32 %v990, %v990
      %v993 = vsel %vm974, %v991, 0.0
      %v994 = vsel %vm974, %v992, 0.0
      %v995 = vadd.f32 %v993, %v994
      %996 = vadd.xlane.f32.xlu0 %v995
      %v997 = vpop.xlane.xlu0 %996
      %v998 = vrot.slane %v997, 4
      %v999 = vadd.f32 %v997, %v998
      %v1000 = vrot.slane %v999, 2
      %v1001 = vadd.f32 %v999, %v1000
      %v1002 = vrot.slane %v1001, 1
      %v1003 = vadd.f32 %v1001, %v1002
      %s1004 = vtos %v1003
      %v1005 = vstv %s1004
      %v1006 = vmul.f32 %v1005, 0.0009765625
      %v1007 = vadd.f32 %v1006, 1e-05
      %v1008 = vrsqrt.pop %v1007
      %v1009 = vmul.f32 %v1008, %v1007
      %v1010 = vmul.f32 %v1009, %v1008
      %v1011 = vmul.f32 0.5, %v1010
      %v1012 = vsub.f32 1.5, %v1011
      %v1013 = vmul.f32 %v1008, %v1012
      %vm1014 = vweird.f32 %v1007
      %vm1015 = vweird.f32 %v1008
      %vm1016 = vmor %vm1014, %vm1015
      %v1017 = vsel %vm1016, %v1008, %v1013
      %v1018 = vmul.f32 %v989, %v1017
      %v1019 = vmul.f32 %v990, %v1017
      %v1022 = vrot.slane %v876, 4
      %v1023 = vrot.slane %v877, 4
      %v1026 = vsel %vm974, %v1022, 0.0
      %v1027 = vsel %vm974, %v1023, 0.0
      %v1028 = vadd.f32 %v1026, %v1027
      %1029 = vadd.xlane.f32.xlu0 %v1028
      %v1030 = vpop.xlane.xlu0 %1029
      %v1031 = vrot.slane %v1030, 4
      %v1032 = vadd.f32 %v1030, %v1031
      %v1033 = vrot.slane %v1032, 2
      %v1034 = vadd.f32 %v1032, %v1033
      %v1035 = vrot.slane %v1034, 1
      %v1036 = vadd.f32 %v1034, %v1035
      %s1037 = vtos %v1036
      %v1038 = vstv %s1037
      %v1039 = vmul.f32 %v1038, 0.0009765625
      %v1040 = vsub.f32 %v876, %v1039
      %v1041 = vsub.f32 %v877, %v1039
      %v1042 = vmul.f32 %v1040, %v1040
      %v1043 = vmul.f32 %v1041, %v1041
      %v1046 = vrot.slane %v1042, 4
      %v1047 = vrot.slane %v1043, 4
      %v1050 = vsel %vm974, %v1046, 0.0
      %v1051 = vsel %vm974, %v1047, 0.0
      %v1052 = vadd.f32 %v1050, %v1051
      %1053 = vadd.xlane.f32.xlu0 %v1052
      %v1054 = vpop.xlane.xlu0 %1053
      %v1055 = vrot.slane %v1054, 4
      %v1056 = vadd.f32 %v1054, %v1055
      %v1057 = vrot.slane %v1056, 2
      %v1058 = vadd.f32 %v1056, %v1057
      %v1059 = vrot.slane %v1058, 1
      %v1060 = vadd.f32 %v1058, %v1059
      %s1061 = vtos %v1060
      %v1062 = vstv %s1061
      %v1063 = vmul.f32 %v1062, 0.0009765625
      %v1064 = vadd.f32 %v1063, 1e-05
      %v1065 = vrsqrt.pop %v1064
      %v1066 = vmul.f32 %v1065, %v1064
      %v1067 = vmul.f32 %v1066, %v1065
      %v1068 = vmul.f32 0.5, %v1067
      %v1069 = vsub.f32 1.5, %v1068
      %v1070 = vmul.f32 %v1065, %v1069
      %vm1071 = vweird.f32 %v1064
      %vm1072 = vweird.f32 %v1065
      %vm1073 = vmor %vm1071, %vm1072
      %v1074 = vsel %vm1073, %v1065, %v1070
      %v1075 = vmul.f32 %v1040, %v1074
      %v1076 = vmul.f32 %v1041, %v1074
      %v1077 = vsel %vm974, %v1018, %v1075
      %v1078 = vsel %vm974, %v1019, %v1076
      %1080 = vset.pattern.permute.xlu0 0
      %1081 = vperm.xlu0 %1080, %v972
      %v1082 = vpop.permute.xlu0 %1081
      %v1084 = vmul.f32 %v1077, %v1082
      %v1085 = vmul.f32 %v1078, %v1082
      %1087 = vset.pattern.permute.xlu0 0
      %1088 = vperm.xlu0 %1087, %v973
      %v1089 = vpop.permute.xlu0 %1088
      %v1091 = vadd.f32 %v1084, %v1089
      %v1092 = vadd.f32 %v1085, %v1089
      %v1093 = vxor.u32 %v1091, 2147483648
      %v1094 = vxor.u32 %v1092, 2147483648
      %v1095 = vmul.f32 %v1093, 1.442695
      %v1096 = vpow.pop %v1095
      %v1097 = vmul.f32 %v1094, 1.442695
      %v1098 = vpow.pop %v1097
      %v1099 = vadd.f32 %v1096, 1.0
      %v1100 = vadd.f32 %v1098, 1.0
      %v1101 = vrcp.pop %v1099
      %v1102 = vmul.f32 %v1099, %v1101
      %v1103 = vsub.f32 1.0, %v1102
      %v1104 = vmul.f32 %v1101, %v1103
      %v1105 = vadd.f32 %v1101, %v1104
      %vm1106 = vweird.f32 %v1099
      %vm1107 = vweird.f32 %v1101
      %vm1108 = vmor %vm1106, %vm1107
      %v1109 = vsel %vm1108, %v1101, %v1105
      %v1110 = vand.u32 2147483647, %v1099
      %vm1111 = vcmp.eq.f32.partialorder %v1110, 8.507059e+37
      %v1112 = vand.u32 %v1099, 2147483648
      %v1113 = vor.u32 1.1754944e-38, %v1112
      %v1114 = vsel %vm1111, %v1113, %v1109
      %v1115 = vmul.f32 1.0, %v1114
      %v1116 = vrcp.pop %v1100
      %v1117 = vmul.f32 %v1100, %v1116
      %v1118 = vsub.f32 1.0, %v1117
      %v1119 = vmul.f32 %v1116, %v1118
      %v1120 = vadd.f32 %v1116, %v1119
      %vm1121 = vweird.f32 %v1100
      %vm1122 = vweird.f32 %v1116
      %vm1123 = vmor %vm1121, %vm1122
      %v1124 = vsel %vm1123, %v1116, %v1120
      %v1125 = vand.u32 2147483647, %v1100
      %vm1126 = vcmp.eq.f32.partialorder %v1125, 8.507059e+37
      %v1127 = vand.u32 %v1100, 2147483648
      %v1128 = vor.u32 1.1754944e-38, %v1127
      %v1129 = vsel %vm1126, %v1128, %v1124
      %v1130 = vmul.f32 1.0, %v1129
      %v1131 = vmul.f32 %v1091, %v1115
      %v1132 = vmul.f32 %v1092, %v1130
      %1134 = vrot.lane.b32.xlu0 %v1132, 17
      %v1135 = vpop.permute.xlu0 %1134
      %1138 = vrot.lane.b32.xlu0 %v1131, 17
      %v1139 = vpop.permute.xlu0 %1138
      %vm1140 = vcmask 138240
      %v1141 = vsel %vm1140, %v1139, %v1135
      %v1144 = vsel %vm1140, %v1135, %v1139
      %v1145 = vld [vmem:[%s26] ss:$8 sm:$0x3]
      %v1147 = vperm.slane %v1145, 0
      %v1148 = vperm.slane %v1145, 1
      %v1151 = vmul.f32 %v1144, %v1147
      %v1152 = vmul.f32 %v1141, %v1148
      %1153 = vst [vmem:[#allocation2] sm:$0xff] %v1151
      %1154 = vst [vmem:[#allocation2 + $0x8] sm:$0xff] %v1152
      %1155 = vrot.lane.b32.xlu0 %v1132, 16
      %v1156 = vpop.permute.xlu0 %1155
      %1158 = vrot.lane.b32.xlu0 %v1131, 16
      %v1159 = vpop.permute.xlu0 %1158
      %v1160 = vsel %vm930, %v1159, %v1156
      %v1163 = vsel %vm930, %v1156, %v1159
      %s1164 = scalar_lea.vmem %s26, 1
      %v1165 = vld [vmem:[%s1164] ss:$8 sm:$0x3]
      %v1167 = vperm.slane %v1165, 0
      %v1168 = vperm.slane %v1165, 1
      %v1171 = vmul.f32 %v1163, %v1167
      %v1172 = vmul.f32 %v1160, %v1168
      %1173 = vst [vmem:[#allocation2 + $0x10] sm:$0xff] %v1171
      %1174 = vst [vmem:[#allocation2 + $0x18] sm:$0xff] %v1172
      %1175 = vrot.lane.b32.xlu0 %v1132, 15
      %v1176 = vpop.permute.xlu0 %1175
      %1178 = vrot.lane.b32.xlu0 %v1131, 15
      %v1179 = vpop.permute.xlu0 %1178
      %vm1180 = vcmask 121856
      %v1181 = vsel %vm1180, %v1179, %v1176
      %v1184 = vsel %vm1180, %v1176, %v1179
      %s1185 = scalar_lea.vmem %s26, 2
      %v1186 = vld [vmem:[%s1185] ss:$8 sm:$0x3]
      %v1188 = vperm.slane %v1186, 0
      %v1189 = vperm.slane %v1186, 1
      %v1192 = vmul.f32 %v1184, %v1188
      %v1193 = vmul.f32 %v1181, %v1189
      %1194 = vst [vmem:[#allocation2 + $0x20] sm:$0xff] %v1192
      %1195 = vst [vmem:[#allocation2 + $0x28] sm:$0xff] %v1193
      %1196 = vrot.lane.b32.xlu0 %v1132, 1
      %v1197 = vpop.permute.xlu0 %1196
      %1199 = vrot.lane.b32.xlu0 %v1131, 1
      %v1200 = vpop.permute.xlu0 %1199
      %vm1201 = vcmask 7168
      %v1202 = vsel %vm1201, %v1200, %v1197
      %v1205 = vsel %vm1201, %v1197, %v1200
      %s1206 = scalar_lea.vmem %s26, 3
      %v1207 = vld [vmem:[%s1206] ss:$8 sm:$0x3]
      %v1209 = vperm.slane %v1207, 0
      %v1210 = vperm.slane %v1207, 1
      %v1213 = vmul.f32 %v1205, %v1209
      %v1214 = vmul.f32 %v1202, %v1210
      %1215 = vst [vmem:[#allocation2 + $0x30] sm:$0xff] %v1213
      %1216 = vst [vmem:[#allocation2 + $0x38] sm:$0xff] %v1214
      %1217 = vst [vmem:[#allocation2 + $0x40] sm:$0xff] %v1131
      %1218 = vst [vmem:[#allocation2 + $0x48] sm:$0xff] %v1132
      %1219 = vrot.lane.b32.xlu0 %v1131, 127
      %v1220 = vpop.permute.xlu0 %1219
      %1221 = vrot.lane.b32.xlu0 %v1132, 127
      %v1222 = vpop.permute.xlu0 %1221
      %vm1223 = vcmask 1039360
      %v1224 = vsel %vm1223, %v1220, %v1222
      %v1228 = vsel %vm1223, %v1222, %v1220
      %s1229 = scalar_lea.vmem %s26, 5
      %v1230 = vld [vmem:[%s1229] ss:$8 sm:$0x3]
      %v1232 = vperm.slane %v1230, 0
      %v1233 = vperm.slane %v1230, 1
      %v1236 = vmul.f32 %v1224, %v1232
      %v1237 = vmul.f32 %v1228, %v1233
      %1238 = vst [vmem:[#allocation2 + $0x50] sm:$0xff] %v1236
      %1239 = vst [vmem:[#allocation2 + $0x58] sm:$0xff] %v1237
      %1240 = vrot.lane.b32.xlu0 %v1131, 113
      %v1241 = vpop.permute.xlu0 %1240
      %1242 = vrot.lane.b32.xlu0 %v1132, 113
      %v1243 = vpop.permute.xlu0 %1242
      %vm1244 = vcmask 924672
      %v1245 = vsel %vm1244, %v1241, %v1243
      %v1249 = vsel %vm1244, %v1243, %v1241
      %s1250 = scalar_lea.vmem %s26, 6
      %v1251 = vld [vmem:[%s1250] ss:$8 sm:$0x3]
      %v1253 = vperm.slane %v1251, 0
      %v1254 = vperm.slane %v1251, 1
      %v1257 = vmul.f32 %v1245, %v1253
      %v1258 = vmul.f32 %v1249, %v1254
      %1259 = vst [vmem:[#allocation2 + $0x60] sm:$0xff] %v1257
      %1260 = vst [vmem:[#allocation2 + $0x68] sm:$0xff] %v1258
      %1261 = vrot.lane.b32.xlu0 %v1131, 112
      %v1262 = vpop.permute.xlu0 %1261
      %1263 = vrot.lane.b32.xlu0 %v1132, 112
      %v1264 = vpop.permute.xlu0 %1263
      %vm1265 = vcmask 916480
      %v1266 = vsel %vm1265, %v1262, %v1264
      %v1270 = vsel %vm1265, %v1264, %v1262
      %s1271 = scalar_lea.vmem %s26, 7
      %v1272 = vld [vmem:[%s1271] ss:$8 sm:$0x3]
      %v1274 = vperm.slane %v1272, 0
      %v1275 = vperm.slane %v1272, 1
      %v1278 = vmul.f32 %v1266, %v1274
      %v1279 = vmul.f32 %v1270, %v1275
      %1280 = vst [vmem:[#allocation2 + $0x70] sm:$0xff] %v1278
      %1281 = vst [vmem:[#allocation2 + $0x78] sm:$0xff] %v1279
      %1282 = vrot.lane.b32.xlu0 %v1131, 111
      %v1283 = vpop.permute.xlu0 %1282
      %1284 = vrot.lane.b32.xlu0 %v1132, 111
      %v1285 = vpop.permute.xlu0 %1284
      %vm1286 = vcmask 908288
      %v1287 = vsel %vm1286, %v1283, %v1285
      %v1291 = vsel %vm1286, %v1285, %v1283
      %s1292 = scalar_lea.vmem %s26, 16
      %v1293 = vld [vmem:[%s1292] ss:$8 sm:$0x3]
      %v1295 = vperm.slane %v1293, 0
      %v1296 = vperm.slane %v1293, 1
      %v1299 = vmul.f32 %v1287, %v1295
      %v1300 = vmul.f32 %v1291, %v1296
      %1301 = vst [vmem:[#allocation2 + $0x80] sm:$0xff] %v1299
      %1302 = vst [vmem:[#allocation2 + $0x88] sm:$0xff] %v1300
      %v1303 = vld [vmem:[%s7] sm:$0xff]
      %v1304 = vld [vmem:[%s7 + $0x8] sm:$0xff]
      %v1305 = vld [vmem:[%s6] sm:$0xff]
      %v1306 = vld [vmem:[%s6 + $0x8] sm:$0xff]
      %v1307 = vld [vmem:[#allocation2] sm:$0xff]
      %v1308 = vld [vmem:[#allocation2 + $0x8] sm:$0xff]
      %v1309 = vld [vmem:[#allocation2 + $0x10] sm:$0xff]
      %v1310 = vld [vmem:[#allocation2 + $0x18] sm:$0xff]
      %v1311 = vld [vmem:[#allocation2 + $0x20] sm:$0xff]
      %v1312 = vld [vmem:[#allocation2 + $0x28] sm:$0xff]
      %v1313 = vld [vmem:[#allocation2 + $0x30] sm:$0xff]
      %v1314 = vld [vmem:[#allocation2 + $0x38] sm:$0xff]
      %v1315 = vld [vmem:[#allocation2 + $0x40] sm:$0xff]
      %v1316 = vld [vmem:[#allocation2 + $0x48] sm:$0xff]
      %v1317 = vld [vmem:[#allocation2 + $0x50] sm:$0xff]
      %v1318 = vld [vmem:[#allocation2 + $0x58] sm:$0xff]
      %v1319 = vld [vmem:[#allocation2 + $0x60] sm:$0xff]
      %v1320 = vld [vmem:[#allocation2 + $0x68] sm:$0xff]
      %v1321 = vld [vmem:[#allocation2 + $0x70] sm:$0xff]
      %v1322 = vld [vmem:[#allocation2 + $0x78] sm:$0xff]
      %v1323 = vld [vmem:[#allocation2 + $0x80] sm:$0xff]
      %v1324 = vld [vmem:[#allocation2 + $0x88] sm:$0xff]
      %1326 = vset.pattern.permute.xlu0 0
      %1327 = vperm.xlu0 %1326, %v1303
      %v1328 = vpop.permute.xlu0 %1327
      %1331 = vset.pattern.permute.xlu0 0
      %1332 = vperm.xlu0 %1331, %v1304
      %v1333 = vpop.permute.xlu0 %1332
      %vm1335 = vcmask 588800
      %v1337 = vsel %vm1335, %v1305, 0
      %v1340 = vsel %vm1335, %v1306, 0
      %1342 = vmatpush.msra.mxu0 0.0
      %1343 = vmatpush.msra.mxu0 0.0
      %1344 = vmatpush.msra.mxu0 0.0
      %1345 = vmatpush.msra.mxu0 0.0
      %1346 = vmatpush.msra.mxu0 0.0
      %1347 = vmatpush.msra.mxu0 0.0
      %1348 = vmatpush.msra.mxu0 0.0
      %1349 = vmatpush.msra.mxu0 %v1323
      %1350 = vmatpush.msra.mxu0 %v1321
      %1351 = vmatpush.msra.mxu0 %v1319
      %1352 = vmatpush.msra.mxu0 %v1317
      %1353 = vmatpush.msra.mxu0 %v1315
      %1354 = vmatpush.msra.mxu0 %v1313
      %1355 = vmatpush.msra.mxu0 %v1311
      %1356 = vmatpush.msra.mxu0 %v1309
      %1357 = vmatpush.msra.mxu0 %v1307
      %1358 = vmatmul.f32.gmra.mxu0 %v1337
      %v1359 = vpop.f32.mrf.mxu0
      %v1360 = vadd.f32 %v1328, %v1359
      %1361 = vmatmul.f32.gmra.mxu0 %v1340
      %v1362 = vpop.f32.mrf.mxu0
      %v1363 = vadd.f32 %v1333, %v1362
      %1364 = vdwg.mxu0
      %1365 = vmatpush.msra.mxu0 0.0
      %1366 = vmatpush.msra.mxu0 0.0
      %1367 = vmatpush.msra.mxu0 0.0
      %1368 = vmatpush.msra.mxu0 0.0
      %1369 = vmatpush.msra.mxu0 0.0
      %1370 = vmatpush.msra.mxu0 0.0
      %1371 = vmatpush.msra.mxu0 0.0
      %1372 = vmatpush.msra.mxu0 %v1324
      %1373 = vmatpush.msra.mxu0 %v1322
      %1374 = vmatpush.msra.mxu0 %v1320
      %1375 = vmatpush.msra.mxu0 %v1318
      %1376 = vmatpush.msra.mxu0 %v1316
      %1377 = vmatpush.msra.mxu0 %v1314
      %1378 = vmatpush.msra.mxu0 %v1312
      %1379 = vmatpush.msra.mxu0 %v1310
      %1380 = vmatpush.msra.mxu0 %v1308
      %1381 = vmatmul.f32.gmra.mxu0 %v1337
      %v1382 = vpop.f32.mrf.mxu0
      %v1383 = vadd.f32 %v1328, %v1382
      %1384 = vmatmul.f32.gmra.mxu0 %v1340
      %v1385 = vpop.f32.mrf.mxu0
      %v1386 = vadd.f32 %v1333, %v1385
      %1387 = vdwg.mxu0
      %v1388 = vmax.f32 %v1360, %v1363
      %v1389 = vrot.slane %v1388, 4
      %v1390 = vmax.f32 %v1388, %v1389
      %v1391 = vrot.slane %v1390, 2
      %v1392 = vmax.f32 %v1390, %v1391
      %v1393 = vrot.slane %v1392, 1
      %v1394 = vmax.f32 %v1392, %v1393
      %v1395 = vmax.f32 %v1383, %v1386
      %v1396 = vrot.slane %v1395, 4
      %v1397 = vmax.f32 %v1395, %v1396
      %v1398 = vrot.slane %v1397, 2
      %v1399 = vmax.f32 %v1397, %v1398
      %v1400 = vrot.slane %v1399, 1
      %v1401 = vmax.f32 %v1399, %v1400
      %v1402 = vrcp.pop %v1394
      %v1403 = vmul.f32 %v1394, %v1402
      %v1404 = vsub.f32 1.0, %v1403
      %v1405 = vmul.f32 %v1402, %v1404
      %v1406 = vadd.f32 %v1402, %v1405
      %vm1407 = vweird.f32 %v1394
      %vm1408 = vweird.f32 %v1402
      %vm1409 = vmor %vm1407, %vm1408
      %v1410 = vsel %vm1409, %v1402, %v1406
      %v1411 = vand.u32 2147483647, %v1394
      %vm1412 = vcmp.eq.f32.partialorder %v1411, 8.507059e+37
      %v1413 = vand.u32 %v1394, 2147483648
      %v1414 = vor.u32 1.1754944e-38, %v1413
      %v1415 = vsel %vm1412, %v1414, %v1410
      %v1416 = vmul.f32 %v1360, %v1415
      %v1417 = vrcp.pop %v1401
      %v1418 = vmul.f32 %v1401, %v1417
      %v1419 = vsub.f32 1.0, %v1418
      %v1420 = vmul.f32 %v1417, %v1419
      %v1421 = vadd.f32 %v1417, %v1420
      %vm1422 = vweird.f32 %v1401
      %vm1423 = vweird.f32 %v1417
      %vm1424 = vmor %vm1422, %vm1423
      %v1425 = vsel %vm1424, %v1417, %v1421
      %v1426 = vand.u32 2147483647, %v1401
      %vm1427 = vcmp.eq.f32.partialorder %v1426, 8.507059e+37
      %v1428 = vand.u32 %v1401, 2147483648
      %v1429 = vor.u32 1.1754944e-38, %v1428
      %v1430 = vsel %vm1427, %v1429, %v1425
      %v1431 = vmul.f32 %v1383, %v1430
      %v1432 = vmul.f32 %v1363, %v1415
      %v1433 = vmul.f32 %v1386, %v1430
      %v1434 = vadd.f32 %v1416, %v1432
      %v1435 = vrot.slane %v1434, 4
      %v1436 = vadd.f32 %v1434, %v1435
      %v1437 = vrot.slane %v1436, 2
      %v1438 = vadd.f32 %v1436, %v1437
      %v1439 = vrot.slane %v1438, 1
      %v1440 = vadd.f32 %v1438, %v1439
      %v1441 = vadd.f32 %v1431, %v1433
      %v1442 = vrot.slane %v1441, 4
      %v1443 = vadd.f32 %v1441, %v1442
      %v1444 = vrot.slane %v1443, 2
      %v1445 = vadd.f32 %v1443, %v1444
      %v1446 = vrot.slane %v1445, 1
      %v1447 = vadd.f32 %v1445, %v1446
      %v1448 = vrcp.pop 16.0
      %v1449 = vmul.f32 16.0, %v1448
      %v1450 = vsub.f32 1.0, %v1449
      %v1451 = vmul.f32 %v1448, %v1450
      %v1452 = vadd.f32 %v1448, %v1451
      %vm1453 = vweird.f32 %v1448
      %v1454 = vsel %vm1453, %v1448, %v1452
      %v1455 = vmul.f32 %v1440, %v1454
      %v1456 = vmul.f32 %v1447, %v1454
      %v1457 = vsub.f32 %v1416, %v1455
      %v1458 = vsub.f32 %v1431, %v1456
      %v1459 = vsub.f32 %v1432, %v1455
      %v1460 = vsub.f32 %v1433, %v1456
      %v1461 = vmul.f32 %v1457, %v1457
      %v1462 = vmul.f32 %v1458, %v1458
      %v1463 = vmul.f32 %v1459, %v1459
      %v1464 = vmul.f32 %v1460, %v1460
      %v1465 = vadd.f32 %v1461, %v1463
      %v1466 = vrot.slane %v1465, 4
      %v1467 = vadd.f32 %v1465, %v1466
      %v1468 = vrot.slane %v1467, 2
      %v1469 = vadd.f32 %v1467, %v1468
      %v1470 = vrot.slane %v1469, 1
      %v1471 = vadd.f32 %v1469, %v1470
      %v1472 = vadd.f32 %v1462, %v1464
      %v1473 = vrot.slane %v1472, 4
      %v1474 = vadd.f32 %v1472, %v1473
      %v1475 = vrot.slane %v1474, 2
      %v1476 = vadd.f32 %v1474, %v1475
      %v1477 = vrot.slane %v1476, 1
      %v1478 = vadd.f32 %v1476, %v1477
      %v1479 = vmul.f32 %v1471, %v1454
      %v1480 = vmul.f32 %v1478, %v1454
      %v1481 = vadd.f32 %v1479, 1e-05
      %v1482 = vadd.f32 %v1480, 1e-05
      %v1483 = vrsqrt.pop %v1481
      %v1484 = vmul.f32 %v1483, %v1481
      %v1485 = vmul.f32 %v1484, %v1483
      %v1486 = vmul.f32 0.5, %v1485
      %v1487 = vsub.f32 1.5, %v1486
      %v1488 = vmul.f32 %v1483, %v1487
      %vm1489 = vweird.f32 %v1481
      %vm1490 = vweird.f32 %v1483
      %vm1491 = vmor %vm1489, %vm1490
      %v1492 = vsel %vm1491, %v1483, %v1488
      %v1493 = vrsqrt.pop %v1482
      %v1494 = vmul.f32 %v1493, %v1482
      %v1495 = vmul.f32 %v1494, %v1493
      %v1496 = vmul.f32 0.5, %v1495
      %v1497 = vsub.f32 1.5, %v1496
      %v1498 = vmul.f32 %v1493, %v1497
      %vm1499 = vweird.f32 %v1482
      %vm1500 = vweird.f32 %v1493
      %vm1501 = vmor %vm1499, %vm1500
      %v1502 = vsel %vm1501, %v1493, %v1498
      %v1503 = vmul.f32 %v1457, %v1492
      %v1504 = vmul.f32 %v1458, %v1502
      %v1505 = vmul.f32 %v1459, %v1492
      %v1506 = vmul.f32 %v1460, %v1502
      %v1507 = vld [vmem:[%s10] sm:$0xff]
      %v1508 = vld [vmem:[%s10 + $0x8] sm:$0xff]
      %v1509 = vld [vmem:[%s10 + $0x10] sm:$0xff]
      %v1510 = vld [vmem:[%s10 + $0x18] sm:$0xff]
      %v1512 = vsel %vm930, %v1507, 0
      %v1515 = vsel %vm930, %v1508, 0
      %v1518 = vsel %vm930, %v1509, 0
      %v1521 = vsel %vm930, %v1510, 0
      %1523 = vmatpush.msra.mxu0 0.0
      %1524 = vmatpush.msra.mxu0 0.0
      %1525 = vmatpush.msra.mxu0 0.0
      %1526 = vmatpush.msra.mxu0 0.0
      %1527 = vmatpush.msra.mxu0 0.0
      %1528 = vmatpush.msra.mxu0 0.0
      %1529 = vmatpush.msra.mxu0 0.0
      %1530 = vmatpush.msra.mxu0 0.0
      %1531 = vmatpush.msra.mxu0 0.0
      %1532 = vmatpush.msra.mxu0 0.0
      %1533 = vmatpush.msra.mxu0 0.0
      %1534 = vmatpush.msra.mxu0 0.0
      %1535 = vmatpush.msra.mxu0 0.0
      %1536 = vmatpush.msra.mxu0 0.0
      %1537 = vmatpush.msra.mxu0 %v1505
      %1538 = vmatpush.msra.mxu0 %v1503
      %1539 = vmatmul.f32.gmra.mxu0 %v1512
      %v1540 = vpop.f32.mrf.mxu0
      %v1541 = vadd.f32 0.0, %v1540
      %1542 = vmatmul.f32.gmra.mxu0 %v1515
      %v1543 = vpop.f32.mrf.mxu0
      %v1544 = vadd.f32 0.0, %v1543
      %1545 = vmatmul.f32.gmra.mxu0 %v1518
      %v1546 = vpop.f32.mrf.mxu0
      %v1547 = vadd.f32 0.0, %v1546
      %1548 = vmatmul.f32.gmra.mxu0 %v1521
      %v1549 = vpop.f32.mrf.mxu0
      %v1550 = vadd.f32 0.0, %v1549
      %1551 = vdwg.mxu0
      %1552 = vmatpush.msra.mxu0 0.0
      %1553 = vmatpush.msra.mxu0 0.0
      %1554 = vmatpush.msra.mxu0 0.0
      %1555 = vmatpush.msra.mxu0 0.0
      %1556 = vmatpush.msra.mxu0 0.0
      %1557 = vmatpush.msra.mxu0 0.0
      %1558 = vmatpush.msra.mxu0 0.0
      %1559 = vmatpush.msra.mxu0 0.0
      %1560 = vmatpush.msra.mxu0 0.0
      %1561 = vmatpush.msra.mxu0 0.0
      %1562 = vmatpush.msra.mxu0 0.0
      %1563 = vmatpush.msra.mxu0 0.0
      %1564 = vmatpush.msra.mxu0 0.0
      %1565 = vmatpush.msra.mxu0 0.0
      %1566 = vmatpush.msra.mxu0 %v1506
      %1567 = vmatpush.msra.mxu0 %v1504
      %1568 = vmatmul.f32.gmra.mxu0 %v1512
      %v1569 = vpop.f32.mrf.mxu0
      %v1570 = vadd.f32 0.0, %v1569
      %1571 = vmatmul.f32.gmra.mxu0 %v1515
      %v1572 = vpop.f32.mrf.mxu0
      %v1573 = vadd.f32 0.0, %v1572
      %1574 = vmatmul.f32.gmra.mxu0 %v1518
      %v1575 = vpop.f32.mrf.mxu0
      %v1576 = vadd.f32 0.0, %v1575
      %1577 = vmatmul.f32.gmra.mxu0 %v1521
      %v1578 = vpop.f32.mrf.mxu0
      %v1579 = vadd.f32 0.0, %v1578
      %1580 = vdwg.mxu0
      %v1581 = vld [vmem:[%s865] sm:$0xff]
      %v1582 = vld [vmem:[%s11] sm:$0xff]
      %v1583 = vld [vmem:[%s11 + $0x8] sm:$0xff]
      %v1584 = vld [vmem:[%s11 + $0x10] sm:$0xff]
      %v1585 = vld [vmem:[%s11 + $0x18] sm:$0xff]
      %vm1586 = vcmask 261120
      %v1588 = vsel %vm1586, %v1581, 0
      %1590 = vmatpush.msra.mxu0 0.0
      %1591 = vmatpush.msra.mxu0 0.0
      %1592 = vmatpush.msra.mxu0 0.0
      %1593 = vmatpush.msra.mxu0 0.0
      %1594 = vmatpush.msra.mxu0 0.0
      %1595 = vmatpush.msra.mxu0 0.0
      %1596 = vmatpush.msra.mxu0 0.0
      %1597 = vmatpush.msra.mxu0 0.0
      %1598 = vmatpush.msra.mxu0 0.0
      %1599 = vmatpush.msra.mxu0 0.0
      %1600 = vmatpush.msra.mxu0 0.0
      %1601 = vmatpush.msra.mxu0 0.0
      %1602 = vmatpush.msra.mxu0 %v1585
      %1603 = vmatpush.msra.mxu0 %v1584
      %1604 = vmatpush.msra.mxu0 %v1583
      %1605 = vmatpush.msra.mxu0 %v1582
      %1606 = vmatmul.f32.gmra.mxu0 %v1588
      %v1607 = vpop.f32.mrf.mxu0
      %v1608 = vadd.f32 0.0, %v1607
      %1609 = vdwg.mxu0
      %v1610 = vld [vmem:[%s12] sm:$0xff]
      %v1611 = vld [vmem:[%s12 + $0x8] sm:$0xff]
      %v1612 = vld [vmem:[%s12 + $0x10] sm:$0xff]
      %v1613 = vld [vmem:[%s12 + $0x18] sm:$0xff]
      %v1614 = vld [vmem:[%s870] sm:$0xff]
      %v1615 = vld [vmem:[%s870 + $0x8] sm:$0xff]
      %v1616 = vld [vmem:[%s870 + $0x10] sm:$0xff]
      %v1617 = vld [vmem:[%s870 + $0x18] sm:$0xff]
      %v1619 = vsel %vm1586, %v1610, 0
      %v1622 = vsel %vm1586, %v1611, 0
      %v1625 = vsel %vm1586, %v1612, 0
      %v1628 = vsel %vm1586, %v1613, 0
      %1630 = vmatpush.msra.mxu0 0.0
      %1631 = vmatpush.msra.mxu0 0.0
      %1632 = vmatpush.msra.mxu0 0.0
      %1633 = vmatpush.msra.mxu0 0.0
      %1634 = vmatpush.msra.mxu0 0.0
      %1635 = vmatpush.msra.mxu0 0.0
      %1636 = vmatpush.msra.mxu0 0.0
      %1637 = vmatpush.msra.mxu0 0.0
      %1638 = vmatpush.msra.mxu0 0.0
      %1639 = vmatpush.msra.mxu0 0.0
      %1640 = vmatpush.msra.mxu0 0.0
      %1641 = vmatpush.msra.mxu0 0.0
      %1642 = vmatpush.msra.mxu0 %v1617
      %1643 = vmatpush.msra.mxu0 %v1616
      %1644 = vmatpush.msra.mxu0 %v1615
      %1645 = vmatpush.msra.mxu0 %v1614
      %1646 = vmatmul.f32.gmra.mxu0 %v1619
      %v1647 = vpop.f32.mrf.mxu0
      %v1648 = vadd.f32 0.0, %v1647
      %1649 = vmatmul.f32.gmra.mxu0 %v1622
      %v1650 = vpop.f32.mrf.mxu0
      %v1651 = vadd.f32 0.0, %v1650
      %1652 = vmatmul.f32.gmra.mxu0 %v1625
      %v1653 = vpop.f32.mrf.mxu0
      %v1654 = vadd.f32 0.0, %v1653
      %1655 = vmatmul.f32.gmra.mxu0 %v1628
      %v1656 = vpop.f32.mrf.mxu0
      %v1657 = vadd.f32 0.0, %v1656
      %1658 = vdwg.mxu0
      %v1659 = vld [vmem:[%s13] sm:$0xff]
      %v1660 = vld [vmem:[%s13 + $0x8] sm:$0xff]
      %v1661 = vld [vmem:[%s13 + $0x10] sm:$0xff]
      %v1662 = vld [vmem:[%s13 + $0x18] sm:$0xff]
      %v1663 = vmul.f32 %v1541, %v1541
      %v1664 = vmul.f32 %v1570, %v1570
      %v1665 = vmul.f32 %v1544, %v1544
      %v1666 = vmul.f32 %v1573, %v1573
      %v1667 = vmul.f32 %v1547, %v1547
      %v1668 = vmul.f32 %v1576, %v1576
      %v1669 = vmul.f32 %v1550, %v1550
      %v1670 = vmul.f32 %v1579, %v1579
      %v1672 = vsel %vm1586, %v1659, 0
      %v1675 = vsel %vm1586, %v1660, 0
      %v1678 = vsel %vm1586, %v1661, 0
      %v1681 = vsel %vm1586, %v1662, 0
      %1683 = vmatpush.msra.mxu0 0.0
      %1684 = vmatpush.msra.mxu0 0.0
      %1685 = vmatpush.msra.mxu0 0.0
      %1686 = vmatpush.msra.mxu0 0.0
      %1687 = vmatpush.msra.mxu0 0.0
      %1688 = vmatpush.msra.mxu0 0.0
      %1689 = vmatpush.msra.mxu0 0.0
      %1690 = vmatpush.msra.mxu0 0.0
      %1691 = vmatpush.msra.mxu0 0.0
      %1692 = vmatpush.msra.mxu0 0.0
      %1693 = vmatpush.msra.mxu0 0.0
      %1694 = vmatpush.msra.mxu0 0.0
      %1695 = vmatpush.msra.mxu0 %v1669
      %1696 = vmatpush.msra.mxu0 %v1667
      %1697 = vmatpush.msra.mxu0 %v1665
      %1698 = vmatpush.msra.mxu0 %v1663
      %1699 = vmatmul.f32.gmra.mxu0 %v1672
      %v1700 = vpop.f32.mrf.mxu0
      %v1701 = vadd.f32 0.0, %v1700
      %1702 = vmatmul.f32.gmra.mxu0 %v1675
      %v1703 = vpop.f32.mrf.mxu0
      %v1704 = vadd.f32 0.0, %v1703
      %1705 = vmatmul.f32.gmra.mxu0 %v1678
      %v1706 = vpop.f32.mrf.mxu0
      %v1707 = vadd.f32 0.0, %v1706
      %1708 = vmatmul.f32.gmra.mxu0 %v1681
      %v1709 = vpop.f32.mrf.mxu0
      %v1710 = vadd.f32 0.0, %v1709
      %1711 = vdwg.mxu0
      %1712 = vmatpush.msra.mxu0 0.0
      %1713 = vmatpush.msra.mxu0 0.0
      %1714 = vmatpush.msra.mxu0 0.0
      %1715 = vmatpush.msra.mxu0 0.0
      %1716 = vmatpush.msra.mxu0 0.0
      %1717 = vmatpush.msra.mxu0 0.0
      %1718 = vmatpush.msra.mxu0 0.0
      %1719 = vmatpush.msra.mxu0 0.0
      %1720 = vmatpush.msra.mxu0 0.0
      %1721 = vmatpush.msra.mxu0 0.0
      %1722 = vmatpush.msra.mxu0 0.0
      %1723 = vmatpush.msra.mxu0 0.0
      %1724 = vmatpush.msra.mxu0 %v1670
      %1725 = vmatpush.msra.mxu0 %v1668
      %1726 = vmatpush.msra.mxu0 %v1666
      %1727 = vmatpush.msra.mxu0 %v1664
      %1728 = vmatmul.f32.gmra.mxu0 %v1672
      %v1729 = vpop.f32.mrf.mxu0
      %v1730 = vadd.f32 0.0, %v1729
      %1731 = vmatmul.f32.gmra.mxu0 %v1675
      %v1732 = vpop.f32.mrf.mxu0
      %v1733 = vadd.f32 0.0, %v1732
      %1734 = vmatmul.f32.gmra.mxu0 %v1678
      %v1735 = vpop.f32.mrf.mxu0
      %v1736 = vadd.f32 0.0, %v1735
      %1737 = vmatmul.f32.gmra.mxu0 %v1681
      %v1738 = vpop.f32.mrf.mxu0
      %v1739 = vadd.f32 0.0, %v1738
      %1740 = vdwg.mxu0
      %v1741 = vmax.f32 %v1701, 1e-24
      %v1742 = vmax.f32 %v1730, 1e-24
      %v1743 = vmax.f32 %v1704, 1e-24
      %v1744 = vmax.f32 %v1733, 1e-24
      %v1745 = vmax.f32 %v1707, 1e-24
      %v1746 = vmax.f32 %v1736, 1e-24
      %v1747 = vmax.f32 %v1710, 1e-24
      %v1748 = vmax.f32 %v1739, 1e-24
      %v1749 = vrsqrt.pop %v1741
      %v1750 = vmul.f32 %v1749, %v1741
      %v1751 = vmul.f32 %v1750, %v1749
      %v1752 = vmul.f32 0.5, %v1751
      %v1753 = vsub.f32 1.5, %v1752
      %v1754 = vmul.f32 %v1749, %v1753
      %vm1755 = vweird.f32 %v1741
      %vm1756 = vweird.f32 %v1749
      %vm1757 = vmor %vm1755, %vm1756
      %v1758 = vsel %vm1757, %v1749, %v1754
      %v1759 = vrsqrt.pop %v1742
      %v1760 = vmul.f32 %v1759, %v1742
      %v1761 = vmul.f32 %v1760, %v1759
      %v1762 = vmul.f32 0.5, %v1761
      %v1763 = vsub.f32 1.5, %v1762
      %v1764 = vmul.f32 %v1759, %v1763
      %vm1765 = vweird.f32 %v1742
      %vm1766 = vweird.f32 %v1759
      %vm1767 = vmor %vm1765, %vm1766
      %v1768 = vsel %vm1767, %v1759, %v1764
      %v1769 = vrsqrt.pop %v1743
      %v1770 = vmul.f32 %v1769, %v1743
      %v1771 = vmul.f32 %v1770, %v1769
      %v1772 = vmul.f32 0.5, %v1771
      %v1773 = vsub.f32 1.5, %v1772
      %v1774 = vmul.f32 %v1769, %v1773
      %vm1775 = vweird.f32 %v1743
      %vm1776 = vweird.f32 %v1769
      %vm1777 = vmor %vm1775, %vm1776
      %v1778 = vsel %vm1777, %v1769, %v1774
      %v1779 = vrsqrt.pop %v1744
      %v1780 = vmul.f32 %v1779, %v1744
      %v1781 = vmul.f32 %v1780, %v1779
      %v1782 = vmul.f32 0.5, %v1781
      %v1783 = vsub.f32 1.5, %v1782
      %v1784 = vmul.f32 %v1779, %v1783
      %vm1785 = vweird.f32 %v1744
      %vm1786 = vweird.f32 %v1779
      %vm1787 = vmor %vm1785, %vm1786
      %v1788 = vsel %vm1787, %v1779, %v1784
      %v1789 = vrsqrt.pop %v1745
      %v1790 = vmul.f32 %v1789, %v1745
      %v1791 = vmul.f32 %v1790, %v1789
      %v1792 = vmul.f32 0.5, %v1791
      %v1793 = vsub.f32 1.5, %v1792
      %v1794 = vmul.f32 %v1789, %v1793
      %vm1795 = vweird.f32 %v1745
      %vm1796 = vweird.f32 %v1789
      %vm1797 = vmor %vm1795, %vm1796
      %v1798 = vsel %vm1797, %v1789, %v1794
      %v1799 = vrsqrt.pop %v1746
      %v1800 = vmul.f32 %v1799, %v1746
      %v1801 = vmul.f32 %v1800, %v1799
      %v1802 = vmul.f32 0.5, %v1801
      %v1803 = vsub.f32 1.5, %v1802
      %v1804 = vmul.f32 %v1799, %v1803
      %vm1805 = vweird.f32 %v1746
      %vm1806 = vweird.f32 %v1799
      %vm1807 = vmor %vm1805, %vm1806
      %v1808 = vsel %vm1807, %v1799, %v1804
      %v1809 = vrsqrt.pop %v1747
      %v1810 = vmul.f32 %v1809, %v1747
      %v1811 = vmul.f32 %v1810, %v1809
      %v1812 = vmul.f32 0.5, %v1811
      %v1813 = vsub.f32 1.5, %v1812
      %v1814 = vmul.f32 %v1809, %v1813
      %vm1815 = vweird.f32 %v1747
      %vm1816 = vweird.f32 %v1809
      %vm1817 = vmor %vm1815, %vm1816
      %v1818 = vsel %vm1817, %v1809, %v1814
      %v1819 = vrsqrt.pop %v1748
      %v1820 = vmul.f32 %v1819, %v1748
      %v1821 = vmul.f32 %v1820, %v1819
      %v1822 = vmul.f32 0.5, %v1821
      %v1823 = vsub.f32 1.5, %v1822
      %v1824 = vmul.f32 %v1819, %v1823
      %vm1825 = vweird.f32 %v1748
      %vm1826 = vweird.f32 %v1819
      %vm1827 = vmor %vm1825, %vm1826
      %v1828 = vsel %vm1827, %v1819, %v1824
      %v1829 = vmul.f32 %v1541, %v1758
      %v1830 = vmul.f32 %v1570, %v1768
      %v1831 = vmul.f32 %v1544, %v1778
      %v1832 = vmul.f32 %v1573, %v1788
      %v1833 = vmul.f32 %v1547, %v1798
      %v1834 = vmul.f32 %v1576, %v1808
      %v1835 = vmul.f32 %v1550, %v1818
      %v1836 = vmul.f32 %v1579, %v1828
      %v1837 = vld [vmem:[%s16] sm:$0xff]
      %v1838 = vld [vmem:[%s16 + $0x8] sm:$0xff]
      %v1839 = vld [vmem:[%s16 + $0x10] sm:$0xff]
      %v1840 = vld [vmem:[%s16 + $0x18] sm:$0xff]
      %1842 = vset.pattern.permute.xlu0 0
      %1843 = vperm.xlu0 %1842, %v1837
      %v1844 = vpop.permute.xlu0 %1843
      %1847 = vset.pattern.permute.xlu0 0
      %1848 = vperm.xlu0 %1847, %v1838
      %v1849 = vpop.permute.xlu0 %1848
      %1852 = vset.pattern.permute.xlu0 0
      %1853 = vperm.xlu0 %1852, %v1839
      %v1854 = vpop.permute.xlu0 %1853
      %1857 = vset.pattern.permute.xlu0 0
      %1858 = vperm.xlu0 %1857, %v1840
      %v1859 = vpop.permute.xlu0 %1858
      %v1861 = vmul.f32 %v1829, %v1844
      %v1862 = vmul.f32 %v1830, %v1844
      %v1863 = vmul.f32 %v1831, %v1849
      %v1864 = vmul.f32 %v1832, %v1849
      %v1865 = vmul.f32 %v1833, %v1854
      %v1866 = vmul.f32 %v1834, %v1854
      %v1867 = vmul.f32 %v1835, %v1859
      %v1868 = vmul.f32 %v1836, %v1859
      %v1869 = vld [vmem:[%s14] sm:$0x1]
      %v1871 = vrot.slane %v1608, 7
      %vm1873 = vcmask 1040384
      %v1874 = vsel %vm1873, %v1869, %v1871
      %v1876 = vrot.slane %v1874, 7
      %v1877 = vrot.slane %v1871, 7
      %v1878 = vsel %vm1873, %v1876, %v1877
      %vm1881 = vcmask 1041408
      %v1882 = vrot.slane %v1874, 6
      %v1883 = vrot.slane %v1871, 6
      %v1884 = vsel %vm1881, %v1882, %v1883
      %vm1887 = vcmask 1042432
      %v1888 = vrot.slane %v1874, 5
      %v1889 = vrot.slane %v1871, 5
      %v1890 = vsel %vm1887, %v1888, %v1889
      %v1893 = vsel %vm1873, %v1871, %v1876
      %v1894 = vsel %vm1881, %v1878, %v1882
      %v1895 = vsel %vm1887, %v1884, %v1888
      %v1896 = vld [vmem:[%s18] sm:$0xff]
      %v1897 = vld [vmem:[%s18 + $0x8] sm:$0xff]
      %v1898 = vld [vmem:[%s18 + $0x10] sm:$0xff]
      %v1899 = vld [vmem:[%s18 + $0x18] sm:$0xff]
      %v1900 = vld [vmem:[%s18 + $0x20] sm:$0xf]
      %v1901 = vmul.f32 %v1874, %v1896
      %v1902 = vmul.f32 %v1893, %v1897
      %v1903 = vmul.f32 %v1894, %v1898
      %v1904 = vmul.f32 %v1895, %v1899
      %v1905 = vmul.f32 %v1890, %v1900
      %v1906 = vmul.f32 %v1901, %v1901
      %v1907 = vmul.f32 %v1902, %v1902
      %v1908 = vmul.f32 %v1903, %v1903
      %v1909 = vmul.f32 %v1904, %v1904
      %v1910 = vmul.f32 %v1905, %v1905
      %v1911 = vsel %vm1586, %v1906, 0.0
      %1912 = vadd.xlane.f32.xlu0 %v1911
      %v1913 = vpop.xlane.xlu0 %1912
      %v1914 = vsel %vm1586, %v1907, 0.0
      %1915 = vadd.xlane.f32.xlu0 %v1914
      %v1916 = vpop.xlane.xlu0 %1915
      %v1917 = vsel %vm1586, %v1908, 0.0
      %1918 = vadd.xlane.f32.xlu0 %v1917
      %v1919 = vpop.xlane.xlu0 %1918
      %v1920 = vsel %vm1586, %v1909, 0.0
      %1921 = vadd.xlane.f32.xlu0 %v1920
      %v1922 = vpop.xlane.xlu0 %1921
      %vm1923 = vcmask 257024
      %v1924 = vsel %vm1923, %v1910, 0.0
      %1925 = vadd.xlane.f32.xlu0 %v1924
      %v1926 = vpop.xlane.xlu0 %1925
      %v1927 = vmax.f32 %v1913, 1e-24
      %v1928 = vmax.f32 %v1916, 1e-24
      %v1929 = vmax.f32 %v1919, 1e-24
      %v1930 = vmax.f32 %v1922, 1e-24
      %v1931 = vmax.f32 %v1926, 1e-24
      %v1932 = vrsqrt.pop %v1927
      %v1933 = vmul.f32 %v1932, %v1927
      %v1934 = vmul.f32 %v1933, %v1932
      %v1935 = vmul.f32 0.5, %v1934
      %v1936 = vsub.f32 1.5, %v1935
      %v1937 = vmul.f32 %v1932, %v1936
      %vm1938 = vweird.f32 %v1927
      %vm1939 = vweird.f32 %v1932
      %vm1940 = vmor %vm1938, %vm1939
      %v1941 = vsel %vm1940, %v1932, %v1937
      %v1942 = vrsqrt.pop %v1928
      %v1943 = vmul.f32 %v1942, %v1928
      %v1944 = vmul.f32 %v1943, %v1942
      %v1945 = vmul.f32 0.5, %v1944
      %v1946 = vsub.f32 1.5, %v1945
      %v1947 = vmul.f32 %v1942, %v1946
      %vm1948 = vweird.f32 %v1928
      %vm1949 = vweird.f32 %v1942
      %vm1950 = vmor %vm1948, %vm1949
      %v1951 = vsel %vm1950, %v1942, %v1947
      %v1952 = vrsqrt.pop %v1929
      %v1953 = vmul.f32 %v1952, %v1929
      %v1954 = vmul.f32 %v1953, %v1952
      %v1955 = vmul.f32 0.5, %v1954
      %v1956 = vsub.f32 1.5, %v1955
      %v1957 = vmul.f32 %v1952, %v1956
      %vm1958 = vweird.f32 %v1929
      %vm1959 = vweird.f32 %v1952
      %vm1960 = vmor %vm1958, %vm1959
      %v1961 = vsel %vm1960, %v1952, %v1957
      %v1962 = vrsqrt.pop %v1930
      %v1963 = vmul.f32 %v1962, %v1930
      %v1964 = vmul.f32 %v1963, %v1962
      %v1965 = vmul.f32 0.5, %v1964
      %v1966 = vsub.f32 1.5, %v1965
      %v1967 = vmul.f32 %v1962, %v1966
      %vm1968 = vweird.f32 %v1930
      %vm1969 = vweird.f32 %v1962
      %vm1970 = vmor %vm1968, %vm1969
      %v1971 = vsel %vm1970, %v1962, %v1967
      %v1972 = vrsqrt.pop %v1931
      %v1973 = vmul.f32 %v1972, %v1931
      %v1974 = vmul.f32 %v1973, %v1972
      %v1975 = vmul.f32 0.5, %v1974
      %v1976 = vsub.f32 1.5, %v1975
      %v1977 = vmul.f32 %v1972, %v1976
      %vm1978 = vweird.f32 %v1931
      %vm1979 = vweird.f32 %v1972
      %vm1980 = vmor %vm1978, %vm1979
      %v1981 = vsel %vm1980, %v1972, %v1977
      %v1982 = vmul.f32 %v1901, %v1941
      %v1983 = vmul.f32 %v1902, %v1951
      %v1984 = vmul.f32 %v1903, %v1961
      %v1985 = vmul.f32 %v1904, %v1971
      %v1986 = vmul.f32 %v1905, %v1981
      %v1987 = vld [vmem:[%s17] sm:$0x1]
      %v1989 = vperm.slane %v1987, 0
      %v1991 = vmul.f32 %v1982, %v1989
      %v1992 = vmul.f32 %v1983, %v1989
      %v1993 = vmul.f32 %v1984, %v1989
      %v1994 = vmul.f32 %v1985, %v1989
      %v1995 = vmul.f32 %v1986, %v1989
      %v1997 = vsel %vm1586, %v1991, 0
      %v2000 = vsel %vm1586, %v1992, 0
      %v2003 = vsel %vm1586, %v1993, 0
      %v2006 = vsel %vm1586, %v1994, 0
      %v2009 = vsel %vm1586, %v1995, 0
      %2011 = vmatpush.msra.mxu0 0.0
      %2012 = vmatpush.msra.mxu0 0.0
      %2013 = vmatpush.msra.mxu0 0.0
      %2014 = vmatpush.msra.mxu0 0.0
      %2015 = vmatpush.msra.mxu0 0.0
      %2016 = vmatpush.msra.mxu0 0.0
      %2017 = vmatpush.msra.mxu0 0.0
      %2018 = vmatpush.msra.mxu0 0.0
      %2019 = vmatpush.msra.mxu0 0.0
      %2020 = vmatpush.msra.mxu0 0.0
      %2021 = vmatpush.msra.mxu0 0.0
      %2022 = vmatpush.msra.mxu0 0.0
      %2023 = vmatpush.msra.mxu0 %v1867
      %2024 = vmatpush.msra.mxu0 %v1865
      %2025 = vmatpush.msra.mxu0 %v1863
      %2026 = vmatpush.msra.mxu0 %v1861
      %2027 = vmatmul.f32.gmra.mxu0 %v1997
      %v2028 = vpop.f32.mrf.mxu0
      %v2029 = vadd.f32 0.0, %v2028
      %2030 = vmatmul.f32.gmra.mxu0 %v2000
      %v2031 = vpop.f32.mrf.mxu0
      %v2032 = vadd.f32 0.0, %v2031
      %2033 = vmatmul.f32.gmra.mxu0 %v2003
      %v2034 = vpop.f32.mrf.mxu0
      %v2035 = vadd.f32 0.0, %v2034
      %2036 = vmatmul.f32.gmra.mxu0 %v2006
      %v2037 = vpop.f32.mrf.mxu0
      %v2038 = vadd.f32 0.0, %v2037
      %2039 = vmatmul.f32.gmra.mxu0 %v2009
      %v2040 = vpop.f32.mrf.mxu0
      %v2041 = vadd.f32 0.0, %v2040
      %2042 = vdwg.mxu0
      %2043 = vmatpush.msra.mxu0 0.0
      %2044 = vmatpush.msra.mxu0 0.0
      %2045 = vmatpush.msra.mxu0 0.0
      %2046 = vmatpush.msra.mxu0 0.0
      %2047 = vmatpush.msra.mxu0 0.0
      %2048 = vmatpush.msra.mxu0 0.0
      %2049 = vmatpush.msra.mxu0 0.0
      %2050 = vmatpush.msra.mxu0 0.0
      %2051 = vmatpush.msra.mxu0 0.0
      %2052 = vmatpush.msra.mxu0 0.0
      %2053 = vmatpush.msra.mxu0 0.0
      %2054 = vmatpush.msra.mxu0 0.0
      %2055 = vmatpush.msra.mxu0 %v1868
      %2056 = vmatpush.msra.mxu0 %v1866
      %2057 = vmatpush.msra.mxu0 %v1864
      %2058 = vmatpush.msra.mxu0 %v1862
      %2059 = vmatmul.f32.gmra.mxu0 %v1997
      %v2060 = vpop.f32.mrf.mxu0
      %v2061 = vadd.f32 0.0, %v2060
      %2062 = vmatmul.f32.gmra.mxu0 %v2000
      %v2063 = vpop.f32.mrf.mxu0
      %v2064 = vadd.f32 0.0, %v2063
      %2065 = vmatmul.f32.gmra.mxu0 %v2003
      %v2066 = vpop.f32.mrf.mxu0
      %v2067 = vadd.f32 0.0, %v2066
      %2068 = vmatmul.f32.gmra.mxu0 %v2006
      %v2069 = vpop.f32.mrf.mxu0
      %v2070 = vadd.f32 0.0, %v2069
      %2071 = vmatmul.f32.gmra.mxu0 %v2009
      %v2072 = vpop.f32.mrf.mxu0
      %v2073 = vadd.f32 0.0, %v2072
      %2074 = vdwg.mxu0
      %v2075 = vmul.f32 %v2029, 8.0
      %v2076 = vmul.f32 %v2061, 8.0
      %v2077 = vmul.f32 %v2032, 8.0
      %v2078 = vmul.f32 %v2064, 8.0
      %v2079 = vmul.f32 %v2035, 8.0
      %v2080 = vmul.f32 %v2067, 8.0
      %v2081 = vmul.f32 %v2038, 8.0
      %v2082 = vmul.f32 %v2070, 8.0
      %v2083 = vmul.f32 %v2041, 8.0
      %v2084 = vmul.f32 %v2073, 8.0
      %v2085 = vsel %vm1873, %v2077, -inf
      %v2086 = vmax.f32 %v2075, %v2085
      %v2087 = vrot.slane %v2086, 4
      %v2088 = vmax.f32 %v2086, %v2087
      %v2089 = vrot.slane %v2088, 2
      %v2090 = vmax.f32 %v2088, %v2089
      %v2091 = vrot.slane %v2090, 1
      %v2092 = vmax.f32 %v2090, %v2091
      %v2093 = vsel %vm1873, %v2078, -inf
      %v2094 = vmax.f32 %v2076, %v2093
      %v2095 = vrot.slane %v2094, 4
      %v2096 = vmax.f32 %v2094, %v2095
      %v2097 = vrot.slane %v2096, 2
      %v2098 = vmax.f32 %v2096, %v2097
      %v2099 = vrot.slane %v2098, 1
      %v2100 = vmax.f32 %v2098, %v2099
      %v2101 = vsub.f32 %v2075, %v2092
      %v2102 = vsub.f32 %v2076, %v2100
      %v2103 = vsub.f32 %v2077, %v2092
      %v2104 = vsub.f32 %v2078, %v2100
      %v2105 = vmul.f32 %v2101, 1.442695
      %v2106 = vpow.pop %v2105
      %v2107 = vmul.f32 %v2102, 1.442695
      %v2108 = vpow.pop %v2107
      %v2109 = vmul.f32 %v2103, 1.442695
      %v2110 = vpow.pop %v2109
      %v2111 = vmul.f32 %v2104, 1.442695
      %v2112 = vpow.pop %v2111
      %v2113 = vsel %vm1873, %v2110, 0.0
      %v2114 = vadd.f32 %v2106, %v2113
      %v2115 = vrot.slane %v2114, 4
      %v2116 = vadd.f32 %v2114, %v2115
      %v2117 = vrot.slane %v2116, 2
      %v2118 = vadd.f32 %v2116, %v2117
      %v2119 = vrot.slane %v2118, 1
      %v2120 = vadd.f32 %v2118, %v2119
      %v2121 = vsel %vm1873, %v2112, 0.0
      %v2122 = vadd.f32 %v2108, %v2121
      %v2123 = vrot.slane %v2122, 4
      %v2124 = vadd.f32 %v2122, %v2123
      %v2125 = vrot.slane %v2124, 2
      %v2126 = vadd.f32 %v2124, %v2125
      %v2127 = vrot.slane %v2126, 1
      %v2128 = vadd.f32 %v2126, %v2127
      %v2129 = vrcp.pop %v2120
      %v2130 = vmul.f32 %v2120, %v2129
      %v2131 = vsub.f32 1.0, %v2130
      %v2132 = vmul.f32 %v2129, %v2131
      %v2133 = vadd.f32 %v2129, %v2132
      %vm2134 = vweird.f32 %v2120
      %vm2135 = vweird.f32 %v2129
      %vm2136 = vmor %vm2134, %vm2135
      %v2137 = vsel %vm2136, %v2129, %v2133
      %v2138 = vand.u32 2147483647, %v2120
      %vm2139 = vcmp.eq.f32.partialorder %v2138, 8.507059e+37
      %v2140 = vand.u32 %v2120, 2147483648
      %v2141 = vor.u32 1.1754944e-38, %v2140
      %v2142 = vsel %vm2139, %v2141, %v2137
      %v2143 = vmul.f32 1.0, %v2142
      %v2144 = vrcp.pop %v2128
      %v2145 = vmul.f32 %v2128, %v2144
      %v2146 = vsub.f32 1.0, %v2145
      %v2147 = vmul.f32 %v2144, %v2146
      %v2148 = vadd.f32 %v2144, %v2147
      %vm2149 = vweird.f32 %v2128
      %vm2150 = vweird.f32 %v2144
      %vm2151 = vmor %vm2149, %vm2150
      %v2152 = vsel %vm2151, %v2144, %v2148
      %v2153 = vand.u32 2147483647, %v2128
      %vm2154 = vcmp.eq.f32.partialorder %v2153, 8.507059e+37
      %v2155 = vand.u32 %v2128, 2147483648
      %v2156 = vor.u32 1.1754944e-38, %v2155
      %v2157 = vsel %vm2154, %v2156, %v2152
      %v2158 = vmul.f32 1.0, %v2157
      %v2159 = vmul.f32 %v2106, %v2143
      %v2160 = vmul.f32 %v2108, %v2158
      %v2161 = vmul.f32 %v2110, %v2143
      %v2162 = vmul.f32 %v2112, %v2158
      %vm2163 = vcmask 1047553
      %v2164 = vsel %vm2163, %v2077, -inf
      %v2165 = vsel %vm1881, %v2079, -inf
      %v2166 = vmax.f32 %v2164, %v2165
      %v2167 = vrot.slane %v2166, 4
      %v2168 = vmax.f32 %v2166, %v2167
      %v2169 = vrot.slane %v2168, 2
      %v2170 = vmax.f32 %v2168, %v2169
      %v2171 = vrot.slane %v2170, 1
      %v2172 = vmax.f32 %v2170, %v2171
      %v2173 = vsel %vm2163, %v2078, -inf
      %v2174 = vsel %vm1881, %v2080, -inf
      %v2175 = vmax.f32 %v2173, %v2174
      %v2176 = vrot.slane %v2175, 4
      %v2177 = vmax.f32 %v2175, %v2176
      %v2178 = vrot.slane %v2177, 2
      %v2179 = vmax.f32 %v2177, %v2178
      %v2180 = vrot.slane %v2179, 1
      %v2181 = vmax.f32 %v2179, %v2180
      %v2182 = vsub.f32 %v2077, %v2172
      %v2183 = vsub.f32 %v2078, %v2181
      %v2184 = vsub.f32 %v2079, %v2172
      %v2185 = vsub.f32 %v2080, %v2181
      %v2186 = vmul.f32 %v2182, 1.442695
      %v2187 = vpow.pop %v2186
      %v2188 = vmul.f32 %v2183, 1.442695
      %v2189 = vpow.pop %v2188
      %v2190 = vmul.f32 %v2184, 1.442695
      %v2191 = vpow.pop %v2190
      %v2192 = vmul.f32 %v2185, 1.442695
      %v2193 = vpow.pop %v2192
      %vm2198 = vcmask 1046528
      %v2199 = vrot.slane %v2187, 1
      %v2200 = vrot.slane %v2191, 1
      %v2201 = vsel %vm2198, %v2199, %v2200
      %v2202 = vrot.slane %v2189, 1
      %v2203 = vrot.slane %v2193, 1
      %v2204 = vsel %vm2198, %v2202, %v2203
      %v2209 = vsel %vm1873, %v2200, 0.0
      %v2210 = vadd.f32 %v2201, %v2209
      %v2211 = vrot.slane %v2210, 4
      %v2212 = vadd.f32 %v2210, %v2211
      %v2213 = vrot.slane %v2212, 2
      %v2214 = vadd.f32 %v2212, %v2213
      %v2215 = vrot.slane %v2214, 1
      %v2216 = vadd.f32 %v2214, %v2215
      %v2217 = vsel %vm1873, %v2203, 0.0
      %v2218 = vadd.f32 %v2204, %v2217
      %v2219 = vrot.slane %v2218, 4
      %v2220 = vadd.f32 %v2218, %v2219
      %v2221 = vrot.slane %v2220, 2
      %v2222 = vadd.f32 %v2220, %v2221
      %v2223 = vrot.slane %v2222, 1
      %v2224 = vadd.f32 %v2222, %v2223
      %v2225 = vrcp.pop %v2216
      %v2226 = vmul.f32 %v2216, %v2225
      %v2227 = vsub.f32 1.0, %v2226
      %v2228 = vmul.f32 %v2225, %v2227
      %v2229 = vadd.f32 %v2225, %v2228
      %vm2230 = vweird.f32 %v2216
      %vm2231 = vweird.f32 %v2225
      %vm2232 = vmor %vm2230, %vm2231
      %v2233 = vsel %vm2232, %v2225, %v2229
      %v2234 = vand.u32 2147483647, %v2216
      %vm2235 = vcmp.eq.f32.partialorder %v2234, 8.507059e+37
      %v2236 = vand.u32 %v2216, 2147483648
      %v2237 = vor.u32 1.1754944e-38, %v2236
      %v2238 = vsel %vm2235, %v2237, %v2233
      %v2239 = vmul.f32 1.0, %v2238
      %v2240 = vrcp.pop %v2224
      %v2241 = vmul.f32 %v2224, %v2240
      %v2242 = vsub.f32 1.0, %v2241
      %v2243 = vmul.f32 %v2240, %v2242
      %v2244 = vadd.f32 %v2240, %v2243
      %vm2245 = vweird.f32 %v2224
      %vm2246 = vweird.f32 %v2240
      %vm2247 = vmor %vm2245, %vm2246
      %v2248 = vsel %vm2247, %v2240, %v2244
      %v2249 = vand.u32 2147483647, %v2224
      %vm2250 = vcmp.eq.f32.partialorder %v2249, 8.507059e+37
      %v2251 = vand.u32 %v2224, 2147483648
      %v2252 = vor.u32 1.1754944e-38, %v2251
      %v2253 = vsel %vm2250, %v2252, %v2248
      %v2254 = vmul.f32 1.0, %v2253
      %v2255 = vmul.f32 %v2187, %v2239
      %v2256 = vmul.f32 %v2189, %v2254
      %v2257 = vmul.f32 %v2191, %v2239
      %v2258 = vmul.f32 %v2193, %v2254
      %vm2259 = vcmask 1047554
      %v2260 = vsel %vm2259, %v2079, -inf
      %v2261 = vsel %vm1887, %v2081, -inf
      %v2262 = vmax.f32 %v2260, %v2261
      %v2263 = vrot.slane %v2262, 4
      %v2264 = vmax.f32 %v2262, %v2263
      %v2265 = vrot.slane %v2264, 2
      %v2266 = vmax.f32 %v2264, %v2265
      %v2267 = vrot.slane %v2266, 1
      %v2268 = vmax.f32 %v2266, %v2267
      %v2269 = vsel %vm2259, %v2080, -inf
      %v2270 = vsel %vm1887, %v2082, -inf
      %v2271 = vmax.f32 %v2269, %v2270
      %v2272 = vrot.slane %v2271, 4
      %v2273 = vmax.f32 %v2271, %v2272
      %v2274 = vrot.slane %v2273, 2
      %v2275 = vmax.f32 %v2273, %v2274
      %v2276 = vrot.slane %v2275, 1
      %v2277 = vmax.f32 %v2275, %v2276
      %v2278 = vsub.f32 %v2079, %v2268
      %v2279 = vsub.f32 %v2080, %v2277
      %v2280 = vsub.f32 %v2081, %v2268
      %v2281 = vsub.f32 %v2082, %v2277
      %v2282 = vmul.f32 %v2278, 1.442695
      %v2283 = vpow.pop %v2282
      %v2284 = vmul.f32 %v2279, 1.442695
      %v2285 = vpow.pop %v2284
      %v2286 = vmul.f32 %v2280, 1.442695
      %v2287 = vpow.pop %v2286
      %v2288 = vmul.f32 %v2281, 1.442695
      %v2289 = vpow.pop %v2288
      %vm2294 = vcmask 1045504
      %v2295 = vrot.slane %v2283, 2
      %v2296 = vrot.slane %v2287, 2
      %v2297 = vsel %vm2294, %v2295, %v2296
      %v2298 = vrot.slane %v2285, 2
      %v2299 = vrot.slane %v2289, 2
      %v2300 = vsel %vm2294, %v2298, %v2299
      %v2305 = vsel %vm1873, %v2296, 0.0
      %v2306 = vadd.f32 %v2297, %v2305
      %v2307 = vrot.slane %v2306, 4
      %v2308 = vadd.f32 %v2306, %v2307
      %v2309 = vrot.slane %v2308, 2
      %v2310 = vadd.f32 %v2308, %v2309
      %v2311 = vrot.slane %v2310, 1
      %v2312 = vadd.f32 %v2310, %v2311
      %v2313 = vsel %vm1873, %v2299, 0.0
      %v2314 = vadd.f32 %v2300, %v2313
      %v2315 = vrot.slane %v2314, 4
      %v2316 = vadd.f32 %v2314, %v2315
      %v2317 = vrot.slane %v2316, 2
      %v2318 = vadd.f32 %v2316, %v2317
      %v2319 = vrot.slane %v2318, 1
      %v2320 = vadd.f32 %v2318, %v2319
      %v2321 = vrcp.pop %v2312
      %v2322 = vmul.f32 %v2312, %v2321
      %v2323 = vsub.f32 1.0, %v2322
      %v2324 = vmul.f32 %v2321, %v2323
      %v2325 = vadd.f32 %v2321, %v2324
      %vm2326 = vweird.f32 %v2312
      %vm2327 = vweird.f32 %v2321
      %vm2328 = vmor %vm2326, %vm2327
      %v2329 = vsel %vm2328, %v2321, %v2325
      %v2330 = vand.u32 2147483647, %v2312
      %vm2331 = vcmp.eq.f32.partialorder %v2330, 8.507059e+37
      %v2332 = vand.u32 %v2312, 2147483648
      %v2333 = vor.u32 1.1754944e-38, %v2332
      %v2334 = vsel %vm2331, %v2333, %v2329
      %v2335 = vmul.f32 1.0, %v2334
      %v2336 = vrcp.pop %v2320
      %v2337 = vmul.f32 %v2320, %v2336
      %v2338 = vsub.f32 1.0, %v2337
      %v2339 = vmul.f32 %v2336, %v2338
      %v2340 = vadd.f32 %v2336, %v2339
      %vm2341 = vweird.f32 %v2320
      %vm2342 = vweird.f32 %v2336
      %vm2343 = vmor %vm2341, %vm2342
      %v2344 = vsel %vm2343, %v2336, %v2340
      %v2345 = vand.u32 2147483647, %v2320
      %vm2346 = vcmp.eq.f32.partialorder %v2345, 8.507059e+37
      %v2347 = vand.u32 %v2320, 2147483648
      %v2348 = vor.u32 1.1754944e-38, %v2347
      %v2349 = vsel %vm2346, %v2348, %v2344
      %v2350 = vmul.f32 1.0, %v2349
      %v2351 = vmul.f32 %v2283, %v2335
      %v2352 = vmul.f32 %v2285, %v2350
      %v2353 = vmul.f32 %v2287, %v2335
      %v2354 = vmul.f32 %v2289, %v2350
      %vm2355 = vcmask 1047555
      %v2356 = vsel %vm2355, %v2081, -inf
      %v2357 = vsel %vm974, %v2083, -inf
      %v2358 = vmax.f32 %v2356, %v2357
      %v2359 = vrot.slane %v2358, 4
      %v2360 = vmax.f32 %v2358, %v2359
      %v2361 = vrot.slane %v2360, 2
      %v2362 = vmax.f32 %v2360, %v2361
      %v2363 = vrot.slane %v2362, 1
      %v2364 = vmax.f32 %v2362, %v2363
      %v2365 = vsel %vm2355, %v2082, -inf
      %v2366 = vsel %vm974, %v2084, -inf
      %v2367 = vmax.f32 %v2365, %v2366
      %v2368 = vrot.slane %v2367, 4
      %v2369 = vmax.f32 %v2367, %v2368
      %v2370 = vrot.slane %v2369, 2
      %v2371 = vmax.f32 %v2369, %v2370
      %v2372 = vrot.slane %v2371, 1
      %v2373 = vmax.f32 %v2371, %v2372
      %v2374 = vsub.f32 %v2081, %v2364
      %v2375 = vsub.f32 %v2082, %v2373
      %v2376 = vsub.f32 %v2083, %v2364
      %v2377 = vsub.f32 %v2084, %v2373
      %v2378 = vmul.f32 %v2374, 1.442695
      %v2379 = vpow.pop %v2378
      %v2380 = vmul.f32 %v2375, 1.442695
      %v2381 = vpow.pop %v2380
      %v2382 = vmul.f32 %v2376, 1.442695
      %v2383 = vpow.pop %v2382
      %v2384 = vmul.f32 %v2377, 1.442695
      %v2385 = vpow.pop %v2384
      %vm2390 = vcmask 1044480
      %v2391 = vrot.slane %v2379, 3
      %v2392 = vrot.slane %v2383, 3
      %v2393 = vsel %vm2390, %v2391, %v2392
      %v2394 = vrot.slane %v2381, 3
      %v2395 = vrot.slane %v2385, 3
      %v2396 = vsel %vm2390, %v2394, %v2395
      %v2401 = vsel %vm1873, %v2392, 0.0
      %v2402 = vadd.f32 %v2393, %v2401
      %v2403 = vrot.slane %v2402, 4
      %v2404 = vadd.f32 %v2402, %v2403
      %v2405 = vrot.slane %v2404, 2
      %v2406 = vadd.f32 %v2404, %v2405
      %v2407 = vrot.slane %v2406, 1
      %v2408 = vadd.f32 %v2406, %v2407
      %v2409 = vsel %vm1873, %v2395, 0.0
      %v2410 = vadd.f32 %v2396, %v2409
      %v2411 = vrot.slane %v2410, 4
      %v2412 = vadd.f32 %v2410, %v2411
      %v2413 = vrot.slane %v2412, 2
      %v2414 = vadd.f32 %v2412, %v2413
      %v2415 = vrot.slane %v2414, 1
      %v2416 = vadd.f32 %v2414, %v2415
      %v2417 = vrcp.pop %v2408
      %v2418 = vmul.f32 %v2408, %v2417
      %v2419 = vsub.f32 1.0, %v2418
      %v2420 = vmul.f32 %v2417, %v2419
      %v2421 = vadd.f32 %v2417, %v2420
      %vm2422 = vweird.f32 %v2408
      %vm2423 = vweird.f32 %v2417
      %vm2424 = vmor %vm2422, %vm2423
      %v2425 = vsel %vm2424, %v2417, %v2421
      %v2426 = vand.u32 2147483647, %v2408
      %vm2427 = vcmp.eq.f32.partialorder %v2426, 8.507059e+37
      %v2428 = vand.u32 %v2408, 2147483648
      %v2429 = vor.u32 1.1754944e-38, %v2428
      %v2430 = vsel %vm2427, %v2429, %v2425
      %v2431 = vmul.f32 1.0, %v2430
      %v2432 = vrcp.pop %v2416
      %v2433 = vmul.f32 %v2416, %v2432
      %v2434 = vsub.f32 1.0, %v2433
      %v2435 = vmul.f32 %v2432, %v2434
      %v2436 = vadd.f32 %v2432, %v2435
      %vm2437 = vweird.f32 %v2416
      %vm2438 = vweird.f32 %v2432
      %vm2439 = vmor %vm2437, %vm2438
      %v2440 = vsel %vm2439, %v2432, %v2436
      %v2441 = vand.u32 2147483647, %v2416
      %vm2442 = vcmp.eq.f32.partialorder %v2441, 8.507059e+37
      %v2443 = vand.u32 %v2416, 2147483648
      %v2444 = vor.u32 1.1754944e-38, %v2443
      %v2445 = vsel %vm2442, %v2444, %v2440
      %v2446 = vmul.f32 1.0, %v2445
      %v2447 = vmul.f32 %v2379, %v2431
      %v2448 = vmul.f32 %v2381, %v2446
      %v2449 = vmul.f32 %v2383, %v2431
      %v2450 = vmul.f32 %v2385, %v2446
      %v2451 = vsel %vm1873, %v2161, %v2255
      %v2452 = vsel %vm1873, %v2162, %v2256
      %v2453 = vsel %vm1881, %v2257, %v2351
      %v2454 = vsel %vm1881, %v2258, %v2352
      %v2455 = vsel %vm1887, %v2353, %v2447
      %v2456 = vsel %vm1887, %v2354, %v2448
      %v2457 = vld [vmem:[%s15] sm:$0xff]
      %v2458 = vld [vmem:[%s15 + $0x8] sm:$0xff]
      %v2459 = vld [vmem:[%s15 + $0x10] sm:$0xff]
      %v2460 = vld [vmem:[%s15 + $0x18] sm:$0xff]
      %2465 = vrot.lane.b32.xlu0 %v1648, 1
      %v2466 = vpop.permute.xlu0 %2465
      %2467 = vrot.lane.b32.xlu0 %v1651, 1
      %v2468 = vpop.permute.xlu0 %2467
      %2469 = vrot.lane.b32.xlu0 %v1654, 1
      %v2470 = vpop.permute.xlu0 %2469
      %2471 = vrot.lane.b32.xlu0 %v1657, 1
      %v2472 = vpop.permute.xlu0 %2471
      %v2477 = vsel %vm1201, %v2457, %v2466
      %v2478 = vsel %vm1201, %v2458, %v2468
      %v2479 = vsel %vm1201, %v2459, %v2470
      %v2480 = vsel %vm1201, %v2460, %v2472
      %2485 = vrot.lane.b32.xlu0 %v2477, 9
      %v2486 = vpop.permute.xlu0 %2485
      %2487 = vrot.lane.b32.xlu0 %v2478, 9
      %v2488 = vpop.permute.xlu0 %2487
      %2489 = vrot.lane.b32.xlu0 %v2479, 9
      %v2490 = vpop.permute.xlu0 %2489
      %2491 = vrot.lane.b32.xlu0 %v2480, 9
      %v2492 = vpop.permute.xlu0 %2491
      %2497 = vrot.lane.b32.xlu0 %v2477, 18
      %v2498 = vpop.permute.xlu0 %2497
      %2499 = vrot.lane.b32.xlu0 %v2478, 18
      %v2500 = vpop.permute.xlu0 %2499
      %2501 = vrot.lane.b32.xlu0 %v2479, 18
      %v2502 = vpop.permute.xlu0 %2501
      %2503 = vrot.lane.b32.xlu0 %v2480, 18
      %v2504 = vpop.permute.xlu0 %2503
      %2509 = vrot.lane.b32.xlu0 %v2477, 27
      %v2510 = vpop.permute.xlu0 %2509
      %2511 = vrot.lane.b32.xlu0 %v2478, 27
      %v2512 = vpop.permute.xlu0 %2511
      %2513 = vrot.lane.b32.xlu0 %v2479, 27
      %v2514 = vpop.permute.xlu0 %2513
      %2515 = vrot.lane.b32.xlu0 %v2480, 27
      %v2516 = vpop.permute.xlu0 %2515
      %vm2521 = vcmask 72704
      %v2522 = vsel %vm2521, %v2477, %v2486
      %v2523 = vsel %vm2521, %v2478, %v2488
      %v2524 = vsel %vm2521, %v2479, %v2490
      %v2525 = vsel %vm2521, %v2480, %v2492
      %vm2526 = vcmask 146432
      %v2527 = vsel %vm2526, %v2522, %v2498
      %v2528 = vsel %vm2526, %v2523, %v2500
      %v2529 = vsel %vm2526, %v2524, %v2502
      %v2530 = vsel %vm2526, %v2525, %v2504
      %vm2531 = vcmask 220160
      %v2532 = vsel %vm2531, %v2527, %v2510
      %v2533 = vsel %vm2531, %v2528, %v2512
      %v2534 = vsel %vm2531, %v2529, %v2514
      %v2535 = vsel %vm2531, %v2530, %v2516
      %v2536 = vld [vmem:[%s19] sm:$0xff]
      %v2537 = vld [vmem:[%s19 + $0x8] sm:$0xff]
      %v2538 = vld [vmem:[%s19 + $0x10] sm:$0xff]
      %v2539 = vld [vmem:[%s19 + $0x18] sm:$0xff]
      %v2540 = vmul.f32 %v2532, %v2536
      %v2541 = vmul.f32 %v2533, %v2537
      %v2542 = vmul.f32 %v2534, %v2538
      %v2543 = vmul.f32 %v2535, %v2539
      %vm2544 = vcmask 293888
      %v2546 = vsel %vm2544, %v2540, 0
      %v2549 = vsel %vm2544, %v2541, 0
      %v2552 = vsel %vm2544, %v2542, 0
      %v2555 = vsel %vm2544, %v2543, 0
      %v2558 = vsel %vm974, %v2449, 0
      %v2561 = vsel %vm974, %v2450, 0
      %2563 = vmatpush.msra.mxu0 0.0
      %2564 = vmatpush.msra.mxu0 0.0
      %2565 = vmatpush.msra.mxu0 0.0
      %2566 = vmatpush.msra.mxu0 0.0
      %2567 = vmatpush.msra.mxu0 0.0
      %2568 = vmatpush.msra.mxu0 0.0
      %2569 = vmatpush.msra.mxu0 0.0
      %2570 = vmatpush.msra.mxu0 0.0
      %2571 = vmatpush.msra.mxu0 0.0
      %2572 = vmatpush.msra.mxu0 0.0
      %2573 = vmatpush.msra.mxu0 0.0
      %2574 = vmatpush.msra.mxu0 %v2558
      %2575 = vmatpush.msra.mxu0 %v2455
      %2576 = vmatpush.msra.mxu0 %v2453
      %2577 = vmatpush.msra.mxu0 %v2451
      %2578 = vmatpush.msra.mxu0 %v2159
      %2579 = vmatmul.f32.gmra.mxu0 %v2546
      %v2580 = vpop.f32.mrf.mxu0
      %v2581 = vadd.f32 0.0, %v2580
      %2582 = vmatmul.f32.gmra.mxu0 %v2549
      %v2583 = vpop.f32.mrf.mxu0
      %v2584 = vadd.f32 0.0, %v2583
      %2585 = vmatmul.f32.gmra.mxu0 %v2552
      %v2586 = vpop.f32.mrf.mxu0
      %v2587 = vadd.f32 0.0, %v2586
      %2588 = vmatmul.f32.gmra.mxu0 %v2555
      %v2589 = vpop.f32.mrf.mxu0
      %v2590 = vadd.f32 0.0, %v2589
      %2591 = vdwg.mxu0
      %2592 = vmatpush.msra.mxu0 0.0
      %2593 = vmatpush.msra.mxu0 0.0
      %2594 = vmatpush.msra.mxu0 0.0
      %2595 = vmatpush.msra.mxu0 0.0
      %2596 = vmatpush.msra.mxu0 0.0
      %2597 = vmatpush.msra.mxu0 0.0
      %2598 = vmatpush.msra.mxu0 0.0
      %2599 = vmatpush.msra.mxu0 0.0
      %2600 = vmatpush.msra.mxu0 0.0
      %2601 = vmatpush.msra.mxu0 0.0
      %2602 = vmatpush.msra.mxu0 0.0
      %2603 = vmatpush.msra.mxu0 %v2561
      %2604 = vmatpush.msra.mxu0 %v2456
      %2605 = vmatpush.msra.mxu0 %v2454
      %2606 = vmatpush.msra.mxu0 %v2452
      %2607 = vmatpush.msra.mxu0 %v2160
      %2608 = vmatmul.f32.gmra.mxu0 %v2546
      %v2609 = vpop.f32.mrf.mxu0
      %v2610 = vadd.f32 0.0, %v2609
      %2611 = vmatmul.f32.gmra.mxu0 %v2549
      %v2612 = vpop.f32.mrf.mxu0
      %v2613 = vadd.f32 0.0, %v2612
      %2614 = vmatmul.f32.gmra.mxu0 %v2552
      %v2615 = vpop.f32.mrf.mxu0
      %v2616 = vadd.f32 0.0, %v2615
      %2617 = vmatmul.f32.gmra.mxu0 %v2555
      %v2618 = vpop.f32.mrf.mxu0
      %v2619 = vadd.f32 0.0, %v2618
      %2620 = vdwg.mxu0
      %v2621 = vld [vmem:[%s20] sm:$0xff]
      %v2622 = vld [vmem:[%s20 + $0x8] sm:$0xff]
      %v2624 = vsel %vm1586, %v2621, 0
      %v2627 = vsel %vm1586, %v2622, 0
      %2629 = vmatpush.msra.mxu0 0.0
      %2630 = vmatpush.msra.mxu0 0.0
      %2631 = vmatpush.msra.mxu0 0.0
      %2632 = vmatpush.msra.mxu0 0.0
      %2633 = vmatpush.msra.mxu0 0.0
      %2634 = vmatpush.msra.mxu0 0.0
      %2635 = vmatpush.msra.mxu0 0.0
      %2636 = vmatpush.msra.mxu0 0.0
      %2637 = vmatpush.msra.mxu0 0.0
      %2638 = vmatpush.msra.mxu0 0.0
      %2639 = vmatpush.msra.mxu0 0.0
      %2640 = vmatpush.msra.mxu0 0.0
      %2641 = vmatpush.msra.mxu0 %v2590
      %2642 = vmatpush.msra.mxu0 %v2587
      %2643 = vmatpush.msra.mxu0 %v2584
      %2644 = vmatpush.msra.mxu0 %v2581
      %2645 = vmatmul.f32.gmra.mxu0 %v2624
      %v2646 = vpop.f32.mrf.mxu0
      %v2647 = vadd.f32 0.0, %v2646
      %2648 = vmatmul.f32.gmra.mxu0 %v2627
      %v2649 = vpop.f32.mrf.mxu0
      %v2650 = vadd.f32 0.0, %v2649
      %2651 = vdwg.mxu0
      %2652 = vmatpush.msra.mxu0 0.0
      %2653 = vmatpush.msra.mxu0 0.0
      %2654 = vmatpush.msra.mxu0 0.0
      %2655 = vmatpush.msra.mxu0 0.0
      %2656 = vmatpush.msra.mxu0 0.0
      %2657 = vmatpush.msra.mxu0 0.0
      %2658 = vmatpush.msra.mxu0 0.0
      %2659 = vmatpush.msra.mxu0 0.0
      %2660 = vmatpush.msra.mxu0 0.0
      %2661 = vmatpush.msra.mxu0 0.0
      %2662 = vmatpush.msra.mxu0 0.0
      %2663 = vmatpush.msra.mxu0 0.0
      %2664 = vmatpush.msra.mxu0 %v2619
      %2665 = vmatpush.msra.mxu0 %v2616
      %2666 = vmatpush.msra.mxu0 %v2613
      %2667 = vmatpush.msra.mxu0 %v2610
      %2668 = vmatmul.f32.gmra.mxu0 %v2624
      %v2669 = vpop.f32.mrf.mxu0
      %v2670 = vadd.f32 0.0, %v2669
      %2671 = vmatmul.f32.gmra.mxu0 %v2627
      %v2672 = vpop.f32.mrf.mxu0
      %v2673 = vadd.f32 0.0, %v2672
      %2674 = vdwg.mxu0
      %v2675 = vld [vmem:[%s21] sm:$0xff]
      %v2676 = vld [vmem:[%s21 + $0x8] sm:$0xff]
      %v2677 = vmax.f32 %v2647, %v2650
      %v2678 = vrot.slane %v2677, 4
      %v2679 = vmax.f32 %v2677, %v2678
      %v2680 = vrot.slane %v2679, 2
      %v2681 = vmax.f32 %v2679, %v2680
      %v2682 = vrot.slane %v2681, 1
      %v2683 = vmax.f32 %v2681, %v2682
      %v2684 = vmax.f32 %v2670, %v2673
      %v2685 = vrot.slane %v2684, 4
      %v2686 = vmax.f32 %v2684, %v2685
      %v2687 = vrot.slane %v2686, 2
      %v2688 = vmax.f32 %v2686, %v2687
      %v2689 = vrot.slane %v2688, 1
      %v2690 = vmax.f32 %v2688, %v2689
      %v2691 = vrcp.pop %v2683
      %v2692 = vmul.f32 %v2683, %v2691
      %v2693 = vsub.f32 1.0, %v2692
      %v2694 = vmul.f32 %v2691, %v2693
      %v2695 = vadd.f32 %v2691, %v2694
      %vm2696 = vweird.f32 %v2683
      %vm2697 = vweird.f32 %v2691
      %vm2698 = vmor %vm2696, %vm2697
      %v2699 = vsel %vm2698, %v2691, %v2695
      %v2700 = vand.u32 2147483647, %v2683
      %vm2701 = vcmp.eq.f32.partialorder %v2700, 8.507059e+37
      %v2702 = vand.u32 %v2683, 2147483648
      %v2703 = vor.u32 1.1754944e-38, %v2702
      %v2704 = vsel %vm2701, %v2703, %v2699
      %v2705 = vmul.f32 %v2647, %v2704
      %v2706 = vrcp.pop %v2690
      %v2707 = vmul.f32 %v2690, %v2706
      %v2708 = vsub.f32 1.0, %v2707
      %v2709 = vmul.f32 %v2706, %v2708
      %v2710 = vadd.f32 %v2706, %v2709
      %vm2711 = vweird.f32 %v2690
      %vm2712 = vweird.f32 %v2706
      %vm2713 = vmor %vm2711, %vm2712
      %v2714 = vsel %vm2713, %v2706, %v2710
      %v2715 = vand.u32 2147483647, %v2690
      %vm2716 = vcmp.eq.f32.partialorder %v2715, 8.507059e+37
      %v2717 = vand.u32 %v2690, 2147483648
      %v2718 = vor.u32 1.1754944e-38, %v2717
      %v2719 = vsel %vm2716, %v2718, %v2714
      %v2720 = vmul.f32 %v2670, %v2719
      %v2721 = vmul.f32 %v2650, %v2704
      %v2722 = vmul.f32 %v2673, %v2719
      %v2723 = vadd.f32 %v2705, %v2721
      %v2724 = vrot.slane %v2723, 4
      %v2725 = vadd.f32 %v2723, %v2724
      %v2726 = vrot.slane %v2725, 2
      %v2727 = vadd.f32 %v2725, %v2726
      %v2728 = vrot.slane %v2727, 1
      %v2729 = vadd.f32 %v2727, %v2728
      %v2730 = vadd.f32 %v2720, %v2722
      %v2731 = vrot.slane %v2730, 4
      %v2732 = vadd.f32 %v2730, %v2731
      %v2733 = vrot.slane %v2732, 2
      %v2734 = vadd.f32 %v2732, %v2733
      %v2735 = vrot.slane %v2734, 1
      %v2736 = vadd.f32 %v2734, %v2735
      %v2737 = vmul.f32 %v2729, %v1454
      %v2738 = vmul.f32 %v2736, %v1454
      %v2739 = vsub.f32 %v2705, %v2737
      %v2740 = vsub.f32 %v2720, %v2738
      %v2741 = vsub.f32 %v2721, %v2737
      %v2742 = vsub.f32 %v2722, %v2738
      %v2743 = vmul.f32 %v2739, %v2739
      %v2744 = vmul.f32 %v2740, %v2740
      %v2745 = vmul.f32 %v2741, %v2741
      %v2746 = vmul.f32 %v2742, %v2742
      %v2747 = vadd.f32 %v2743, %v2745
      %v2748 = vrot.slane %v2747, 4
      %v2749 = vadd.f32 %v2747, %v2748
      %v2750 = vrot.slane %v2749, 2
      %v2751 = vadd.f32 %v2749, %v2750
      %v2752 = vrot.slane %v2751, 1
      %v2753 = vadd.f32 %v2751, %v2752
      %v2754 = vadd.f32 %v2744, %v2746
      %v2755 = vrot.slane %v2754, 4
      %v2756 = vadd.f32 %v2754, %v2755
      %v2757 = vrot.slane %v2756, 2
      %v2758 = vadd.f32 %v2756, %v2757
      %v2759 = vrot.slane %v2758, 1
      %v2760 = vadd.f32 %v2758, %v2759
      %v2761 = vmul.f32 %v2753, %v1454
      %v2762 = vmul.f32 %v2760, %v1454
      %v2763 = vadd.f32 %v2761, 1e-05
      %v2764 = vadd.f32 %v2762, 1e-05
      %v2765 = vrsqrt.pop %v2763
      %v2766 = vmul.f32 %v2765, %v2763
      %v2767 = vmul.f32 %v2766, %v2765
      %v2768 = vmul.f32 0.5, %v2767
      %v2769 = vsub.f32 1.5, %v2768
      %v2770 = vmul.f32 %v2765, %v2769
      %vm2771 = vweird.f32 %v2763
      %vm2772 = vweird.f32 %v2765
      %vm2773 = vmor %vm2771, %vm2772
      %v2774 = vsel %vm2773, %v2765, %v2770
      %v2775 = vrsqrt.pop %v2764
      %v2776 = vmul.f32 %v2775, %v2764
      %v2777 = vmul.f32 %v2776, %v2775
      %v2778 = vmul.f32 0.5, %v2777
      %v2779 = vsub.f32 1.5, %v2778
      %v2780 = vmul.f32 %v2775, %v2779
      %vm2781 = vweird.f32 %v2764
      %vm2782 = vweird.f32 %v2775
      %vm2783 = vmor %vm2781, %vm2782
      %v2784 = vsel %vm2783, %v2775, %v2780
      %v2785 = vmul.f32 %v2739, %v2774
      %v2786 = vmul.f32 %v2740, %v2784
      %v2787 = vmul.f32 %v2741, %v2774
      %v2788 = vmul.f32 %v2742, %v2784
      %2790 = vset.pattern.permute.xlu0 0
      %2791 = vperm.xlu0 %2790, %v2675
      %v2792 = vpop.permute.xlu0 %2791
      %2795 = vset.pattern.permute.xlu0 0
      %2796 = vperm.xlu0 %2795, %v2676
      %v2797 = vpop.permute.xlu0 %2796
      %v2799 = vmul.f32 %v2785, %v2792
      %v2800 = vmul.f32 %v2786, %v2792
      %v2801 = vmul.f32 %v2787, %v2797
      %v2802 = vmul.f32 %v2788, %v2797
      %v2803 = vadd.f32 %v2799, %v1360
      %v2804 = vadd.f32 %v2800, %v1383
      %v2805 = vadd.f32 %v2801, %v1363
      %v2806 = vadd.f32 %v2802, %v1386
      %v2807 = vld [vmem:[%s22] sm:$0xff]
      %v2808 = vld [vmem:[%s22 + $0x8] sm:$0xff]
      %v2809 = vld [vmem:[%s23] sm:$0xff]
      %v2810 = vld [vmem:[%s23 + $0x8] sm:$0xff]
      %v2811 = vsel %vm974, %v2803, 0.0
      %v2812 = vsel %vm974, %v2804, 0.0
      %v2813 = vadd.f32 %v2811, %v2812
      %2814 = vadd.xlane.f32.xlu0 %v2813
      %v2815 = vpop.xlane.xlu0 %2814
      %v2816 = vrot.slane %v2815, 4
      %v2817 = vadd.f32 %v2815, %v2816
      %v2818 = vrot.slane %v2817, 2
      %v2819 = vadd.f32 %v2817, %v2818
      %v2820 = vrot.slane %v2819, 1
      %v2821 = vadd.f32 %v2819, %v2820
      %s2822 = vtos %v2821
      %v2823 = vstv %s2822
      %v2824 = vmul.f32 %v2823, 0.0009765625
      %v2825 = vsub.f32 %v2803, %v2824
      %v2826 = vsub.f32 %v2804, %v2824
      %v2827 = vmul.f32 %v2825, %v2825
      %v2828 = vmul.f32 %v2826, %v2826
      %v2829 = vsel %vm974, %v2827, 0.0
      %v2830 = vsel %vm974, %v2828, 0.0
      %v2831 = vadd.f32 %v2829, %v2830
      %2832 = vadd.xlane.f32.xlu0 %v2831
      %v2833 = vpop.xlane.xlu0 %2832
      %v2834 = vrot.slane %v2833, 4
      %v2835 = vadd.f32 %v2833, %v2834
      %v2836 = vrot.slane %v2835, 2
      %v2837 = vadd.f32 %v2835, %v2836
      %v2838 = vrot.slane %v2837, 1
      %v2839 = vadd.f32 %v2837, %v2838
      %s2840 = vtos %v2839
      %v2841 = vstv %s2840
      %v2842 = vmul.f32 %v2841, 0.0009765625
      %v2843 = vadd.f32 %v2842, 1e-05
      %v2844 = vrsqrt.pop %v2843
      %v2845 = vmul.f32 %v2844, %v2843
      %v2846 = vmul.f32 %v2845, %v2844
      %v2847 = vmul.f32 0.5, %v2846
      %v2848 = vsub.f32 1.5, %v2847
      %v2849 = vmul.f32 %v2844, %v2848
      %vm2850 = vweird.f32 %v2843
      %vm2851 = vweird.f32 %v2844
      %vm2852 = vmor %vm2850, %vm2851
      %v2853 = vsel %vm2852, %v2844, %v2849
      %v2854 = vmul.f32 %v2825, %v2853
      %v2855 = vmul.f32 %v2826, %v2853
      %v2858 = vrot.slane %v2803, 4
      %v2859 = vrot.slane %v2804, 4
      %v2862 = vsel %vm974, %v2858, 0.0
      %v2863 = vsel %vm974, %v2859, 0.0
      %v2864 = vadd.f32 %v2862, %v2863
      %2865 = vadd.xlane.f32.xlu0 %v2864
      %v2866 = vpop.xlane.xlu0 %2865
      %v2867 = vrot.slane %v2866, 4
      %v2868 = vadd.f32 %v2866, %v2867
      %v2869 = vrot.slane %v2868, 2
      %v2870 = vadd.f32 %v2868, %v2869
      %v2871 = vrot.slane %v2870, 1
      %v2872 = vadd.f32 %v2870, %v2871
      %s2873 = vtos %v2872
      %v2874 = vstv %s2873
      %v2875 = vmul.f32 %v2874, 0.0009765625
      %v2876 = vsub.f32 %v2803, %v2875
      %v2877 = vsub.f32 %v2804, %v2875
      %v2878 = vmul.f32 %v2876, %v2876
      %v2879 = vmul.f32 %v2877, %v2877
      %v2882 = vrot.slane %v2878, 4
      %v2883 = vrot.slane %v2879, 4
      %v2886 = vsel %vm974, %v2882, 0.0
      %v2887 = vsel %vm974, %v2883, 0.0
      %v2888 = vadd.f32 %v2886, %v2887
      %2889 = vadd.xlane.f32.xlu0 %v2888
      %v2890 = vpop.xlane.xlu0 %2889
      %v2891 = vrot.slane %v2890, 4
      %v2892 = vadd.f32 %v2890, %v2891
      %v2893 = vrot.slane %v2892, 2
      %v2894 = vadd.f32 %v2892, %v2893
      %v2895 = vrot.slane %v2894, 1
      %v2896 = vadd.f32 %v2894, %v2895
      %s2897 = vtos %v2896
      %v2898 = vstv %s2897
      %v2899 = vmul.f32 %v2898, 0.0009765625
      %v2900 = vadd.f32 %v2899, 1e-05
      %v2901 = vrsqrt.pop %v2900
      %v2902 = vmul.f32 %v2901, %v2900
      %v2903 = vmul.f32 %v2902, %v2901
      %v2904 = vmul.f32 0.5, %v2903
      %v2905 = vsub.f32 1.5, %v2904
      %v2906 = vmul.f32 %v2901, %v2905
      %vm2907 = vweird.f32 %v2900
      %vm2908 = vweird.f32 %v2901
      %vm2909 = vmor %vm2907, %vm2908
      %v2910 = vsel %vm2909, %v2901, %v2906
      %v2911 = vmul.f32 %v2876, %v2910
      %v2912 = vmul.f32 %v2877, %v2910
      %v2913 = vsel %vm974, %v2805, 0.0
      %v2914 = vsel %vm974, %v2806, 0.0
      %v2915 = vadd.f32 %v2913, %v2914
      %2916 = vadd.xlane.f32.xlu0 %v2915
      %v2917 = vpop.xlane.xlu0 %2916
      %v2918 = vrot.slane %v2917, 4
      %v2919 = vadd.f32 %v2917, %v2918
      %v2920 = vrot.slane %v2919, 2
      %v2921 = vadd.f32 %v2919, %v2920
      %v2922 = vrot.slane %v2921, 1
      %v2923 = vadd.f32 %v2921, %v2922
      %s2924 = vtos %v2923
      %v2925 = vstv %s2924
      %v2926 = vmul.f32 %v2925, 0.0009765625
      %v2927 = vsub.f32 %v2805, %v2926
      %v2928 = vsub.f32 %v2806, %v2926
      %v2929 = vmul.f32 %v2927, %v2927
      %v2930 = vmul.f32 %v2928, %v2928
      %v2931 = vsel %vm974, %v2929, 0.0
      %v2932 = vsel %vm974, %v2930, 0.0
      %v2933 = vadd.f32 %v2931, %v2932
      %2934 = vadd.xlane.f32.xlu0 %v2933
      %v2935 = vpop.xlane.xlu0 %2934
      %v2936 = vrot.slane %v2935, 4
      %v2937 = vadd.f32 %v2935, %v2936
      %v2938 = vrot.slane %v2937, 2
      %v2939 = vadd.f32 %v2937, %v2938
      %v2940 = vrot.slane %v2939, 1
      %v2941 = vadd.f32 %v2939, %v2940
      %s2942 = vtos %v2941
      %v2943 = vstv %s2942
      %v2944 = vmul.f32 %v2943, 0.0009765625
      %v2945 = vadd.f32 %v2944, 1e-05
      %v2946 = vrsqrt.pop %v2945
      %v2947 = vmul.f32 %v2946, %v2945
      %v2948 = vmul.f32 %v2947, %v2946
      %v2949 = vmul.f32 0.5, %v2948
      %v2950 = vsub.f32 1.5, %v2949
      %v2951 = vmul.f32 %v2946, %v2950
      %vm2952 = vweird.f32 %v2945
      %vm2953 = vweird.f32 %v2946
      %vm2954 = vmor %vm2952, %vm2953
      %v2955 = vsel %vm2954, %v2946, %v2951
      %v2956 = vmul.f32 %v2927, %v2955
      %v2957 = vmul.f32 %v2928, %v2955
      %v2960 = vrot.slane %v2805, 4
      %v2961 = vrot.slane %v2806, 4
      %v2964 = vsel %vm974, %v2960, 0.0
      %v2965 = vsel %vm974, %v2961, 0.0
      %v2966 = vadd.f32 %v2964, %v2965
      %2967 = vadd.xlane.f32.xlu0 %v2966
      %v2968 = vpop.xlane.xlu0 %2967
      %v2969 = vrot.slane %v2968, 4
      %v2970 = vadd.f32 %v2968, %v2969
      %v2971 = vrot.slane %v2970, 2
      %v2972 = vadd.f32 %v2970, %v2971
      %v2973 = vrot.slane %v2972, 1
      %v2974 = vadd.f32 %v2972, %v2973
      %s2975 = vtos %v2974
      %v2976 = vstv %s2975
      %v2977 = vmul.f32 %v2976, 0.0009765625
      %v2978 = vsub.f32 %v2805, %v2977
      %v2979 = vsub.f32 %v2806, %v2977
      %v2980 = vmul.f32 %v2978, %v2978
      %v2981 = vmul.f32 %v2979, %v2979
      %v2984 = vrot.slane %v2980, 4
      %v2985 = vrot.slane %v2981, 4
      %v2988 = vsel %vm974, %v2984, 0.0
      %v2989 = vsel %vm974, %v2985, 0.0
      %v2990 = vadd.f32 %v2988, %v2989
      %2991 = vadd.xlane.f32.xlu0 %v2990
      %v2992 = vpop.xlane.xlu0 %2991
      %v2993 = vrot.slane %v2992, 4
      %v2994 = vadd.f32 %v2992, %v2993
      %v2995 = vrot.slane %v2994, 2
      %v2996 = vadd.f32 %v2994, %v2995
      %v2997 = vrot.slane %v2996, 1
      %v2998 = vadd.f32 %v2996, %v2997
      %s2999 = vtos %v2998
      %v3000 = vstv %s2999
      %v3001 = vmul.f32 %v3000, 0.0009765625
      %v3002 = vadd.f32 %v3001, 1e-05
      %v3003 = vrsqrt.pop %v3002
      %v3004 = vmul.f32 %v3003, %v3002
      %v3005 = vmul.f32 %v3004, %v3003
      %v3006 = vmul.f32 0.5, %v3005
      %v3007 = vsub.f32 1.5, %v3006
      %v3008 = vmul.f32 %v3003, %v3007
      %vm3009 = vweird.f32 %v3002
      %vm3010 = vweird.f32 %v3003
      %vm3011 = vmor %vm3009, %vm3010
      %v3012 = vsel %vm3011, %v3003, %v3008
      %v3013 = vmul.f32 %v2978, %v3012
      %v3014 = vmul.f32 %v2979, %v3012
      %v3015 = vsel %vm974, %v2854, %v2911
      %v3016 = vsel %vm974, %v2855, %v2912
      %v3017 = vsel %vm974, %v2956, %v3013
      %v3018 = vsel %vm974, %v2957, %v3014
      %3020 = vset.pattern.permute.xlu0 0
      %3021 = vperm.xlu0 %3020, %v2807
      %v3022 = vpop.permute.xlu0 %3021
      %3025 = vset.pattern.permute.xlu0 0
      %3026 = vperm.xlu0 %3025, %v2808
      %v3027 = vpop.permute.xlu0 %3026
      %v3029 = vmul.f32 %v3015, %v3022
      %v3030 = vmul.f32 %v3016, %v3022
      %v3031 = vmul.f32 %v3017, %v3027
      %v3032 = vmul.f32 %v3018, %v3027
      %3034 = vset.pattern.permute.xlu0 0
      %3035 = vperm.xlu0 %3034, %v2809
      %v3036 = vpop.permute.xlu0 %3035
      %3039 = vset.pattern.permute.xlu0 0
      %3040 = vperm.xlu0 %3039, %v2810
      %v3041 = vpop.permute.xlu0 %3040
      %v3043 = vadd.f32 %v3029, %v3036
      %v3044 = vadd.f32 %v3030, %v3036
      %v3045 = vadd.f32 %v3031, %v3041
      %v3046 = vadd.f32 %v3032, %v3041
      %v3047 = vadd.f32 %v961, 1.0
      %v3048 = vadd.f32 %v964, 1.0
      %3050 = vset.pattern.permute.xlu0 0
      %3051 = vperm.xlu0 %3050, %v3047
      %v3052 = vpop.permute.xlu0 %3051
      %3055 = vset.pattern.permute.xlu0 0
      %3056 = vperm.xlu0 %3055, %v3048
      %v3057 = vpop.permute.xlu0 %3056
      %v3059 = vmul.f32 %v3043, %v3052
      %v3060 = vmul.f32 %v3044, %v3052
      %v3061 = vmul.f32 %v3045, %v3057
      %v3062 = vmul.f32 %v3046, %v3057
      %3064 = vset.pattern.permute.xlu0 0
      %3065 = vperm.xlu0 %3064, %v967
      %v3066 = vpop.permute.xlu0 %3065
      %3069 = vset.pattern.permute.xlu0 0
      %3070 = vperm.xlu0 %3069, %v970
      %v3071 = vpop.permute.xlu0 %3070
      %v3073 = vadd.f32 %v3059, %v3066
      %v3074 = vadd.f32 %v3060, %v3066
      %v3075 = vadd.f32 %v3061, %v3071
      %v3076 = vadd.f32 %v3062, %v3071
      %v3077 = vxor.u32 %v3073, 2147483648
      %v3078 = vxor.u32 %v3074, 2147483648
      %v3079 = vxor.u32 %v3075, 2147483648
      %v3080 = vxor.u32 %v3076, 2147483648
      %v3081 = vmul.f32 %v3077, 1.442695
      %v3082 = vpow.pop %v3081
      %v3083 = vmul.f32 %v3078, 1.442695
      %v3084 = vpow.pop %v3083
      %v3085 = vmul.f32 %v3079, 1.442695
      %v3086 = vpow.pop %v3085
      %v3087 = vmul.f32 %v3080, 1.442695
      %v3088 = vpow.pop %v3087
      %v3089 = vadd.f32 %v3082, 1.0
      %v3090 = vadd.f32 %v3084, 1.0
      %v3091 = vadd.f32 %v3086, 1.0
      %v3092 = vadd.f32 %v3088, 1.0
      %v3093 = vrcp.pop %v3089
      %v3094 = vmul.f32 %v3089, %v3093
      %v3095 = vsub.f32 1.0, %v3094
      %v3096 = vmul.f32 %v3093, %v3095
      %v3097 = vadd.f32 %v3093, %v3096
      %vm3098 = vweird.f32 %v3089
      %vm3099 = vweird.f32 %v3093
      %vm3100 = vmor %vm3098, %vm3099
      %v3101 = vsel %vm3100, %v3093, %v3097
      %v3102 = vand.u32 2147483647, %v3089
      %vm3103 = vcmp.eq.f32.partialorder %v3102, 8.507059e+37
      %v3104 = vand.u32 %v3089, 2147483648
      %v3105 = vor.u32 1.1754944e-38, %v3104
      %v3106 = vsel %vm3103, %v3105, %v3101
      %v3107 = vmul.f32 1.0, %v3106
      %v3108 = vrcp.pop %v3090
      %v3109 = vmul.f32 %v3090, %v3108
      %v3110 = vsub.f32 1.0, %v3109
      %v3111 = vmul.f32 %v3108, %v3110
      %v3112 = vadd.f32 %v3108, %v3111
      %vm3113 = vweird.f32 %v3090
      %vm3114 = vweird.f32 %v3108
      %vm3115 = vmor %vm3113, %vm3114
      %v3116 = vsel %vm3115, %v3108, %v3112
      %v3117 = vand.u32 2147483647, %v3090
      %vm3118 = vcmp.eq.f32.partialorder %v3117, 8.507059e+37
      %v3119 = vand.u32 %v3090, 2147483648
      %v3120 = vor.u32 1.1754944e-38, %v3119
      %v3121 = vsel %vm3118, %v3120, %v3116
      %v3122 = vmul.f32 1.0, %v3121
      %v3123 = vrcp.pop %v3091
      %v3124 = vmul.f32 %v3091, %v3123
      %v3125 = vsub.f32 1.0, %v3124
      %v3126 = vmul.f32 %v3123, %v3125
      %v3127 = vadd.f32 %v3123, %v3126
      %vm3128 = vweird.f32 %v3091
      %vm3129 = vweird.f32 %v3123
      %vm3130 = vmor %vm3128, %vm3129
      %v3131 = vsel %vm3130, %v3123, %v3127
      %v3132 = vand.u32 2147483647, %v3091
      %vm3133 = vcmp.eq.f32.partialorder %v3132, 8.507059e+37
      %v3134 = vand.u32 %v3091, 2147483648
      %v3135 = vor.u32 1.1754944e-38, %v3134
      %v3136 = vsel %vm3133, %v3135, %v3131
      %v3137 = vmul.f32 1.0, %v3136
      %v3138 = vrcp.pop %v3092
      %v3139 = vmul.f32 %v3092, %v3138
      %v3140 = vsub.f32 1.0, %v3139
      %v3141 = vmul.f32 %v3138, %v3140
      %v3142 = vadd.f32 %v3138, %v3141
      %vm3143 = vweird.f32 %v3092
      %vm3144 = vweird.f32 %v3138
      %vm3145 = vmor %vm3143, %vm3144
      %v3146 = vsel %vm3145, %v3138, %v3142
      %v3147 = vand.u32 2147483647, %v3092
      %vm3148 = vcmp.eq.f32.partialorder %v3147, 8.507059e+37
      %v3149 = vand.u32 %v3092, 2147483648
      %v3150 = vor.u32 1.1754944e-38, %v3149
      %v3151 = vsel %vm3148, %v3150, %v3146
      %v3152 = vmul.f32 1.0, %v3151
      %v3153 = vmul.f32 %v3073, %v3107
      %v3154 = vmul.f32 %v3074, %v3122
      %v3155 = vmul.f32 %v3075, %v3137
      %v3156 = vmul.f32 %v3076, %v3152
      %3159 = vrot.lane.b32.xlu0 %v3154, 17
      %v3160 = vpop.permute.xlu0 %3159
      %3161 = vrot.lane.b32.xlu0 %v3156, 17
      %v3162 = vpop.permute.xlu0 %3161
      %3167 = vrot.lane.b32.xlu0 %v3153, 17
      %v3168 = vpop.permute.xlu0 %3167
      %3169 = vrot.lane.b32.xlu0 %v3155, 17
      %v3170 = vpop.permute.xlu0 %3169
      %v3171 = vsel %vm1140, %v3168, %v3160
      %v3172 = vsel %vm1140, %v3170, %v3162
      %v3177 = vsel %vm1140, %v3160, %v3168
      %v3178 = vsel %vm1140, %v3162, %v3170
      %v3179 = vld [vmem:[%s26] ss:$8 sm:$0x3]
      %v3181 = vperm.slane %v3179, 0
      %v3182 = vperm.slane %v3179, 1
      %v3185 = vmul.f32 %v3177, %v3181
      %v3186 = vmul.f32 %v3171, %v3182
      %v3187 = vmul.f32 %v3178, %v3181
      %v3188 = vmul.f32 %v3172, %v3182
      %3189 = vst [vmem:[#allocation2] sm:$0xff] %v3185
      %3190 = vst [vmem:[#allocation2 + $0x8] sm:$0xff] %v3186
      %3191 = vst [vmem:[#allocation2 + $0x10] sm:$0xff] %v3187
      %3192 = vst [vmem:[#allocation2 + $0x18] sm:$0xff] %v3188
      %3193 = vrot.lane.b32.xlu0 %v3154, 16
      %v3194 = vpop.permute.xlu0 %3193
      %3195 = vrot.lane.b32.xlu0 %v3156, 16
      %v3196 = vpop.permute.xlu0 %3195
      %3199 = vrot.lane.b32.xlu0 %v3153, 16
      %v3200 = vpop.permute.xlu0 %3199
      %3201 = vrot.lane.b32.xlu0 %v3155, 16
      %v3202 = vpop.permute.xlu0 %3201
      %v3203 = vsel %vm930, %v3200, %v3194
      %v3204 = vsel %vm930, %v3202, %v3196
      %v3209 = vsel %vm930, %v3194, %v3200
      %v3210 = vsel %vm930, %v3196, %v3202
      %v3211 = vld [vmem:[%s1164] ss:$8 sm:$0x3]
      %v3213 = vperm.slane %v3211, 0
      %v3214 = vperm.slane %v3211, 1
      %v3217 = vmul.f32 %v3209, %v3213
      %v3218 = vmul.f32 %v3203, %v3214
      %v3219 = vmul.f32 %v3210, %v3213
      %v3220 = vmul.f32 %v3204, %v3214
      %3221 = vst [vmem:[#allocation2 + $0x20] sm:$0xff] %v3217
      %3222 = vst [vmem:[#allocation2 + $0x28] sm:$0xff] %v3218
      %3223 = vst [vmem:[#allocation2 + $0x30] sm:$0xff] %v3219
      %3224 = vst [vmem:[#allocation2 + $0x38] sm:$0xff] %v3220
      %3225 = vrot.lane.b32.xlu0 %v3154, 15
      %v3226 = vpop.permute.xlu0 %3225
      %3227 = vrot.lane.b32.xlu0 %v3156, 15
      %v3228 = vpop.permute.xlu0 %3227
      %3231 = vrot.lane.b32.xlu0 %v3153, 15
      %v3232 = vpop.permute.xlu0 %3231
      %3233 = vrot.lane.b32.xlu0 %v3155, 15
      %v3234 = vpop.permute.xlu0 %3233
      %v3235 = vsel %vm1180, %v3232, %v3226
      %v3236 = vsel %vm1180, %v3234, %v3228
      %v3241 = vsel %vm1180, %v3226, %v3232
      %v3242 = vsel %vm1180, %v3228, %v3234
      %v3243 = vld [vmem:[%s1185] ss:$8 sm:$0x3]
      %v3245 = vperm.slane %v3243, 0
      %v3246 = vperm.slane %v3243, 1
      %v3249 = vmul.f32 %v3241, %v3245
      %v3250 = vmul.f32 %v3235, %v3246
      %v3251 = vmul.f32 %v3242, %v3245
      %v3252 = vmul.f32 %v3236, %v3246
      %3253 = vst [vmem:[#allocation2 + $0x40] sm:$0xff] %v3249
      %3254 = vst [vmem:[#allocation2 + $0x48] sm:$0xff] %v3250
      %3255 = vst [vmem:[#allocation2 + $0x50] sm:$0xff] %v3251
      %3256 = vst [vmem:[#allocation2 + $0x58] sm:$0xff] %v3252
      %3257 = vrot.lane.b32.xlu0 %v3154, 1
      %v3258 = vpop.permute.xlu0 %3257
      %3259 = vrot.lane.b32.xlu0 %v3156, 1
      %v3260 = vpop.permute.xlu0 %3259
      %3263 = vrot.lane.b32.xlu0 %v3153, 1
      %v3264 = vpop.permute.xlu0 %3263
      %3265 = vrot.lane.b32.xlu0 %v3155, 1
      %v3266 = vpop.permute.xlu0 %3265
      %v3267 = vsel %vm1201, %v3264, %v3258
      %v3268 = vsel %vm1201, %v3266, %v3260
      %v3273 = vsel %vm1201, %v3258, %v3264
      %v3274 = vsel %vm1201, %v3260, %v3266
      %v3275 = vld [vmem:[%s1206] ss:$8 sm:$0x3]
      %v3277 = vperm.slane %v3275, 0
      %v3278 = vperm.slane %v3275, 1
      %v3281 = vmul.f32 %v3273, %v3277
      %v3282 = vmul.f32 %v3267, %v3278
      %v3283 = vmul.f32 %v3274, %v3277
      %v3284 = vmul.f32 %v3268, %v3278
      %3285 = vst [vmem:[#allocation2 + $0x60] sm:$0xff] %v3281
      %3286 = vst [vmem:[#allocation2 + $0x68] sm:$0xff] %v3282
      %3287 = vst [vmem:[#allocation2 + $0x70] sm:$0xff] %v3283
      %3288 = vst [vmem:[#allocation2 + $0x78] sm:$0xff] %v3284
      %3289 = vst [vmem:[#allocation2 + $0x80] sm:$0xff] %v3153
      %3290 = vst [vmem:[#allocation2 + $0x88] sm:$0xff] %v3154
      %3291 = vst [vmem:[#allocation2 + $0x90] sm:$0xff] %v3155
      %3292 = vst [vmem:[#allocation2 + $0x98] sm:$0xff] %v3156
      %3293 = vrot.lane.b32.xlu0 %v3153, 127
      %v3294 = vpop.permute.xlu0 %3293
      %3295 = vrot.lane.b32.xlu0 %v3154, 127
      %v3296 = vpop.permute.xlu0 %3295
      %3297 = vrot.lane.b32.xlu0 %v3155, 127
      %v3298 = vpop.permute.xlu0 %3297
      %3299 = vrot.lane.b32.xlu0 %v3156, 127
      %v3300 = vpop.permute.xlu0 %3299
      %v3301 = vsel %vm1223, %v3294, %v3296
      %v3302 = vsel %vm1223, %v3298, %v3300
      %v3309 = vsel %vm1223, %v3296, %v3294
      %v3310 = vsel %vm1223, %v3300, %v3298
      %v3311 = vld [vmem:[%s1229] ss:$8 sm:$0x3]
      %v3313 = vperm.slane %v3311, 0
      %v3314 = vperm.slane %v3311, 1
      %v3317 = vmul.f32 %v3301, %v3313
      %v3318 = vmul.f32 %v3309, %v3314
      %v3319 = vmul.f32 %v3302, %v3313
      %v3320 = vmul.f32 %v3310, %v3314
      %3321 = vst [vmem:[#allocation2 + $0xa0] sm:$0xff] %v3317
      %3322 = vst [vmem:[#allocation2 + $0xa8] sm:$0xff] %v3318
      %3323 = vst [vmem:[#allocation2 + $0xb0] sm:$0xff] %v3319
      %3324 = vst [vmem:[#allocation2 + $0xb8] sm:$0xff] %v3320
      %3325 = vrot.lane.b32.xlu0 %v3153, 113
      %v3326 = vpop.permute.xlu0 %3325
      %3327 = vrot.lane.b32.xlu0 %v3154, 113
      %v3328 = vpop.permute.xlu0 %3327
      %3329 = vrot.lane.b32.xlu0 %v3155, 113
      %v3330 = vpop.permute.xlu0 %3329
      %3331 = vrot.lane.b32.xlu0 %v3156, 113
      %v3332 = vpop.permute.xlu0 %3331
      %v3333 = vsel %vm1244, %v3326, %v3328
      %v3334 = vsel %vm1244, %v3330, %v3332
      %v3341 = vsel %vm1244, %v3328, %v3326
      %v3342 = vsel %vm1244, %v3332, %v3330
      %v3343 = vld [vmem:[%s1250] ss:$8 sm:$0x3]
      %v3345 = vperm.slane %v3343, 0
      %v3346 = vperm.slane %v3343, 1
      %v3349 = vmul.f32 %v3333, %v3345
      %v3350 = vmul.f32 %v3341, %v3346
      %v3351 = vmul.f32 %v3334, %v3345
      %v3352 = vmul.f32 %v3342, %v3346
      %3353 = vst [vmem:[#allocation2 + $0xc0] sm:$0xff] %v3349
      %3354 = vst [vmem:[#allocation2 + $0xc8] sm:$0xff] %v3350
      %3355 = vst [vmem:[#allocation2 + $0xd0] sm:$0xff] %v3351
      %3356 = vst [vmem:[#allocation2 + $0xd8] sm:$0xff] %v3352
      %3357 = vrot.lane.b32.xlu0 %v3153, 112
      %v3358 = vpop.permute.xlu0 %3357
      %3359 = vrot.lane.b32.xlu0 %v3154, 112
      %v3360 = vpop.permute.xlu0 %3359
      %3361 = vrot.lane.b32.xlu0 %v3155, 112
      %v3362 = vpop.permute.xlu0 %3361
      %3363 = vrot.lane.b32.xlu0 %v3156, 112
      %v3364 = vpop.permute.xlu0 %3363
      %v3365 = vsel %vm1265, %v3358, %v3360
      %v3366 = vsel %vm1265, %v3362, %v3364
      %v3373 = vsel %vm1265, %v3360, %v3358
      %v3374 = vsel %vm1265, %v3364, %v3362
      %v3375 = vld [vmem:[%s1271] ss:$8 sm:$0x3]
      %v3377 = vperm.slane %v3375, 0
      %v3378 = vperm.slane %v3375, 1
      %v3381 = vmul.f32 %v3365, %v3377
      %v3382 = vmul.f32 %v3373, %v3378
      %v3383 = vmul.f32 %v3366, %v3377
      %v3384 = vmul.f32 %v3374, %v3378
      %3385 = vst [vmem:[#allocation2 + $0xe0] sm:$0xff] %v3381
      %3386 = vst [vmem:[#allocation2 + $0xe8] sm:$0xff] %v3382
      %3387 = vst [vmem:[#allocation2 + $0xf0] sm:$0xff] %v3383
      %3388 = vst [vmem:[#allocation2 + $0xf8] sm:$0xff] %v3384
      %3389 = vrot.lane.b32.xlu0 %v3153, 111
      %v3390 = vpop.permute.xlu0 %3389
      %3391 = vrot.lane.b32.xlu0 %v3154, 111
      %v3392 = vpop.permute.xlu0 %3391
      %3393 = vrot.lane.b32.xlu0 %v3155, 111
      %v3394 = vpop.permute.xlu0 %3393
      %3395 = vrot.lane.b32.xlu0 %v3156, 111
      %v3396 = vpop.permute.xlu0 %3395
      %v3397 = vsel %vm1286, %v3390, %v3392
      %v3398 = vsel %vm1286, %v3394, %v3396
      %v3405 = vsel %vm1286, %v3392, %v3390
      %v3406 = vsel %vm1286, %v3396, %v3394
      %v3407 = vld [vmem:[%s1292] ss:$8 sm:$0x3]
      %v3409 = vperm.slane %v3407, 0
      %v3410 = vperm.slane %v3407, 1
      %v3413 = vmul.f32 %v3397, %v3409
      %v3414 = vmul.f32 %v3405, %v3410
      %v3415 = vmul.f32 %v3398, %v3409
      %v3416 = vmul.f32 %v3406, %v3410
      %3417 = vst [vmem:[#allocation2 + $0x100] sm:$0xff] %v3413
      %3418 = vst [vmem:[#allocation2 + $0x108] sm:$0xff] %v3414
      %3419 = vst [vmem:[#allocation2 + $0x110] sm:$0xff] %v3415
      %3420 = vst [vmem:[#allocation2 + $0x118] sm:$0xff] %v3416
      %v3421 = vld [vmem:[%s25] sm:$0xff]
      %v3422 = vld [vmem:[%s25 + $0x8] sm:$0xff]
      %v3423 = vld [vmem:[%s24] sm:$0xff]
      %v3424 = vld [vmem:[%s24 + $0x8] sm:$0xff]
      %v3425 = vld [vmem:[%s24 + $0x10] sm:$0xff]
      %v3426 = vld [vmem:[%s24 + $0x18] sm:$0xff]
      %v3427 = vld [vmem:[#allocation2] sm:$0xff]
      %v3428 = vld [vmem:[#allocation2 + $0x8] sm:$0xff]
      %v3429 = vld [vmem:[#allocation2 + $0x10] sm:$0xff]
      %v3430 = vld [vmem:[#allocation2 + $0x18] sm:$0xff]
      %v3431 = vld [vmem:[#allocation2 + $0x20] sm:$0xff]
      %v3432 = vld [vmem:[#allocation2 + $0x28] sm:$0xff]
      %v3433 = vld [vmem:[#allocation2 + $0x30] sm:$0xff]
      %v3434 = vld [vmem:[#allocation2 + $0x38] sm:$0xff]
      %v3435 = vld [vmem:[#allocation2 + $0x40] sm:$0xff]
      %v3436 = vld [vmem:[#allocation2 + $0x48] sm:$0xff]
      %v3437 = vld [vmem:[#allocation2 + $0x50] sm:$0xff]
      %v3438 = vld [vmem:[#allocation2 + $0x58] sm:$0xff]
      %v3439 = vld [vmem:[#allocation2 + $0x60] sm:$0xff]
      %v3440 = vld [vmem:[#allocation2 + $0x68] sm:$0xff]
      %v3441 = vld [vmem:[#allocation2 + $0x70] sm:$0xff]
      %v3442 = vld [vmem:[#allocation2 + $0x78] sm:$0xff]
      %v3443 = vld [vmem:[#allocation2 + $0x80] sm:$0xff]
      %v3444 = vld [vmem:[#allocation2 + $0x88] sm:$0xff]
      %v3445 = vld [vmem:[#allocation2 + $0x90] sm:$0xff]
      %v3446 = vld [vmem:[#allocation2 + $0x98] sm:$0xff]
      %v3447 = vld [vmem:[#allocation2 + $0xa0] sm:$0xff]
      %v3448 = vld [vmem:[#allocation2 + $0xa8] sm:$0xff]
      %v3449 = vld [vmem:[#allocation2 + $0xb0] sm:$0xff]
      %v3450 = vld [vmem:[#allocation2 + $0xb8] sm:$0xff]
      %v3451 = vld [vmem:[#allocation2 + $0xc0] sm:$0xff]
      %v3452 = vld [vmem:[#allocation2 + $0xc8] sm:$0xff]
      %v3453 = vld [vmem:[#allocation2 + $0xd0] sm:$0xff]
      %v3454 = vld [vmem:[#allocation2 + $0xd8] sm:$0xff]
      %v3455 = vld [vmem:[#allocation2 + $0xe0] sm:$0xff]
      %v3456 = vld [vmem:[#allocation2 + $0xe8] sm:$0xff]
      %v3457 = vld [vmem:[#allocation2 + $0xf0] sm:$0xff]
      %v3458 = vld [vmem:[#allocation2 + $0xf8] sm:$0xff]
      %v3459 = vld [vmem:[#allocation2 + $0x100] sm:$0xff]
      %v3460 = vld [vmem:[#allocation2 + $0x108] sm:$0xff]
      %v3461 = vld [vmem:[#allocation2 + $0x110] sm:$0xff]
      %v3462 = vld [vmem:[#allocation2 + $0x118] sm:$0xff]
      %v3463 = vld [vmem:[#allocation2 + $0x120] sm:$0xff]
      %v3464 = vld [vmem:[#allocation2 + $0x128] sm:$0xff]
      %3466 = vset.pattern.permute.xlu0 0
      %3467 = vperm.xlu0 %3466, %v3421
      %v3468 = vpop.permute.xlu0 %3467
      %3471 = vset.pattern.permute.xlu0 0
      %3472 = vperm.xlu0 %3471, %v3422
      %v3473 = vpop.permute.xlu0 %3472
      %vm3475 = vcmask 195584
      %v3477 = vsel %vm3475, %v3424, 0
      %v3480 = vsel %vm3475, %v3426, 0
      %3482 = vmatpush.msra.mxu0 %v3457
      %3483 = vmatpush.msra.mxu0 %v3455
      %3484 = vmatpush.msra.mxu0 %v3453
      %3485 = vmatpush.msra.mxu0 %v3451
      %3486 = vmatpush.msra.mxu0 %v3449
      %3487 = vmatpush.msra.mxu0 %v3447
      %3488 = vmatpush.msra.mxu0 %v3445
      %3489 = vmatpush.msra.mxu0 %v3443
      %3490 = vmatpush.msra.mxu0 %v3441
      %3491 = vmatpush.msra.mxu0 %v3439
      %3492 = vmatpush.msra.mxu0 %v3437
      %3493 = vmatpush.msra.mxu0 %v3435
      %3494 = vmatpush.msra.mxu0 %v3433
      %3495 = vmatpush.msra.mxu0 %v3431
      %3496 = vmatpush.msra.mxu0 %v3429
      %3497 = vmatpush.msra.mxu0 %v3427
      %3498 = vmatmul.f32.gmra.mxu0 %v3423
      %v3499 = vpop.f32.mrf.mxu0
      %v3500 = vadd.f32 %v3468, %v3499
      %3501 = vmatmul.f32.gmra.mxu0 %v3425
      %v3502 = vpop.f32.mrf.mxu0
      %v3503 = vadd.f32 %v3473, %v3502
      %3504 = vdwg.mxu0
      %3505 = vmatpush.msra.mxu0 0.0
      %3506 = vmatpush.msra.mxu0 0.0
      %3507 = vmatpush.msra.mxu0 0.0
      %3508 = vmatpush.msra.mxu0 0.0
      %3509 = vmatpush.msra.mxu0 0.0
      %3510 = vmatpush.msra.mxu0 0.0
      %3511 = vmatpush.msra.mxu0 0.0
      %3512 = vmatpush.msra.mxu0 0.0
      %3513 = vmatpush.msra.mxu0 0.0
      %3514 = vmatpush.msra.mxu0 0.0
      %3515 = vmatpush.msra.mxu0 0.0
      %3516 = vmatpush.msra.mxu0 0.0
      %3517 = vmatpush.msra.mxu0 0.0
      %3518 = vmatpush.msra.mxu0 %v3463
      %3519 = vmatpush.msra.mxu0 %v3461
      %3520 = vmatpush.msra.mxu0 %v3459
      %3521 = vmatmul.f32.gmra.mxu0 %v3477
      %v3522 = vpop.f32.mrf.mxu0
      %v3523 = vadd.f32 %v3500, %v3522
      %3524 = vmatmul.f32.gmra.mxu0 %v3480
      %v3525 = vpop.f32.mrf.mxu0
      %v3526 = vadd.f32 %v3503, %v3525
      %3527 = vdwg.mxu0
      %3528 = vmatpush.msra.mxu0 %v3458
      %3529 = vmatpush.msra.mxu0 %v3456
      %3530 = vmatpush.msra.mxu0 %v3454
      %3531 = vmatpush.msra.mxu0 %v3452
      %3532 = vmatpush.msra.mxu0 %v3450
      %3533 = vmatpush.msra.mxu0 %v3448
      %3534 = vmatpush.msra.mxu0 %v3446
      %3535 = vmatpush.msra.mxu0 %v3444
      %3536 = vmatpush.msra.mxu0 %v3442
      %3537 = vmatpush.msra.mxu0 %v3440
      %3538 = vmatpush.msra.mxu0 %v3438
      %3539 = vmatpush.msra.mxu0 %v3436
      %3540 = vmatpush.msra.mxu0 %v3434
      %3541 = vmatpush.msra.mxu0 %v3432
      %3542 = vmatpush.msra.mxu0 %v3430
      %3543 = vmatpush.msra.mxu0 %v3428
      %3544 = vmatmul.f32.gmra.mxu0 %v3423
      %v3545 = vpop.f32.mrf.mxu0
      %v3546 = vadd.f32 %v3468, %v3545
      %3547 = vmatmul.f32.gmra.mxu0 %v3425
      %v3548 = vpop.f32.mrf.mxu0
      %v3549 = vadd.f32 %v3473, %v3548
      %3550 = vdwg.mxu0
      %3551 = vmatpush.msra.mxu0 0.0
      %3552 = vmatpush.msra.mxu0 0.0
      %3553 = vmatpush.msra.mxu0 0.0
      %3554 = vmatpush.msra.mxu0 0.0
      %3555 = vmatpush.msra.mxu0 0.0
      %3556 = vmatpush.msra.mxu0 0.0
      %3557 = vmatpush.msra.mxu0 0.0
      %3558 = vmatpush.msra.mxu0 0.0
      %3559 = vmatpush.msra.mxu0 0.0
      %3560 = vmatpush.msra.mxu0 0.0
      %3561 = vmatpush.msra.mxu0 0.0
      %3562 = vmatpush.msra.mxu0 0.0
      %3563 = vmatpush.msra.mxu0 0.0
      %3564 = vmatpush.msra.mxu0 %v3464
      %3565 = vmatpush.msra.mxu0 %v3462
      %3566 = vmatpush.msra.mxu0 %v3460
      %3567 = vmatmul.f32.gmra.mxu0 %v3477
      %v3568 = vpop.f32.mrf.mxu0
      %v3569 = vadd.f32 %v3546, %v3568
      %3570 = vmatmul.f32.gmra.mxu0 %v3480
      %v3571 = vpop.f32.mrf.mxu0
      %v3572 = vadd.f32 %v3549, %v3571
      %3573 = vdwg.mxu0
      %3574 = vst [vmem:[%s875] sm:$0xff] %v3523
      %3575 = vst [vmem:[%s875 + $0x8] sm:$0xff] %v3569
      %3576 = vst [vmem:[%s875 + $0x10] sm:$0xff] %v3526
      %3577 = vst [vmem:[%s875 + $0x18] sm:$0xff] %v3572
      %p3578 = scmp.lt.s32.totalorder %s38, 1
      %s3579 = scalar_select %p3578, %s38, 1
      %s3580 = smul.addr %s3579, 4
      %s3581 = smul.addr %s3580, 8
      %s3582 = scalar_lea.vmem %s27, %s3581
      // Predicated region
      $region129: #{resnet_block_forward.1} parent=127 // pred_check
        %p3583 = pneg %p643
      $region130: #{resnet_block_forward.1} parent=127 // pred_check_branch
        %3585 = sbr.rel (%p3583) target = $region132
      $region131: #{resnet_block_forward.1} parent=127 // pred_region
        _
      $region132: #{resnet_block_forward.1} parent=127 // pred_fallthru
        _
    $region128: #{resnet_block_forward.1} parent=5 // pred_fallthru
      _
    %p3586 = scmp.le.s32.totalorder 2, %s33
    // Predicated region
    $region133: #{resnet_block_forward.1} parent=5 // pred_check
      %p3587 = pneg %p3586
    $region134: #{resnet_block_forward.1} parent=5 // pred_check_branch
      %3589 = sbr.rel (%p3587) target = $region136
    $region135: #{resnet_block_forward.1} parent=5 // pred_region
      %s3590 = ssub.s32 %s33, 2
      // Predicated region
      $region137: #{resnet_block_forward.1} parent=135 // pred_check
        %p3591 = pneg %p649
      $region138: #{resnet_block_forward.1} parent=135 // pred_check_branch
        %3593 = sbr.rel (%p3591) target = $region140
      $region139: #{resnet_block_forward.1} parent=135 // pred_region
        %p3594 = scmp.lt.s32.totalorder %s39, 1
        %s3595 = scalar_select %p3594, %s39, 1
        %s3596 = smul.addr %s3595, 4
        %s3597 = smul.addr %s3596, 8
        %s3598 = scalar_lea.vmem %s27, %s3597
      $region140: #{resnet_block_forward.1} parent=135 // pred_fallthru
        _
    $region136: #{resnet_block_forward.1} parent=5 // pred_fallthru
      _
  $region6: #{resnet_block_forward.1} parent=0 // loop_footer
    %s37 = sadd.s32 1, %s33
  $region7: #{resnet_block_forward.1} parent=0 // loop_footer_branch
    %32 = sbr.rel target = $region3
  $region8: #{resnet_block_forward.1} parent=0 // loop_exit
    _

</llo_original>
